<compile_context>
chip_gen: v6e
topology: v6e:2x2x1
jax: 0.10.0
libtpu: 0.0.40
codegen_flags: <defaults>
</compile_context>

<pallas_src>
import jax
import jax.numpy as jnp
from jax.experimental import pallas as pl
from jax.experimental.pallas import tpu as pltpu

# ---- model dims (small, consistent with the module's constructor) -------------
SEQ = 8          # time steps
BATCH = 4        # batch size (padded to 8 inside the wrapper)
EMB = 128        # embedding_dim
HID = 128        # rnn_size
LAYERS = 2       # num LSTM layers (fixed = 2, matches default)
VOCAB = 256      # output_dim (= num_embeddings)


def lstm_lm_kernel(x_ref,                         # (S*Bp, EMB) bf16 embedded tokens (flattened)
                   wih0_ref, whh0_ref, b0_ref,    # (EMB,4H) bf16, (H,4H) bf16, (1,4H) f32
                   wih1_ref, whh1_ref, b1_ref,    # (H,4H) bf16,  (H,4H) bf16, (1,4H) f32
                   wout_ref, bout_ref,            # (H,V) bf16,   (1,V) f32
                   h0_ref, c0_ref,                # (L,Bp,H) f32 initial states
                   out_ref, hn_ref, cn_ref,       # (1,Bp,V) (L,Bp,H) (L,Bp,H) f32
                   gin0_ref):                     # scratch (S,Bp,4H) f32: layer-0 input gates
    SB, E = x_ref.shape
    H = whh0_ref.shape[0]
    Bp = h0_ref.shape[1]
    S = SB // Bp

    # ---- hoisted layer-0 input projection: one big bf16 MXU call + bias --------
    g0_all = (jnp.dot(x_ref[...], wih0_ref[...],
                      preferred_element_type=jnp.float32)
              + b0_ref[...])                                    # (S*Bp, 4H) f32
    gin0_ref[...] = g0_all.reshape(S, Bp, 4 * H)

    # Hoisted layer-1 bias broadcast (avoid re-emitting broadcast_in_dim per step).
    b1b = jnp.broadcast_to(b1_ref[...], (Bp, 4 * H))

    def gate_math(g, c):
        # gate column order is (i, f, o, g): one sigmoid over 3H, one tanh over H
        sig = jax.nn.sigmoid(g[:, :3 * H])
        i_g = sig[:, 0 * H:1 * H]
        f_g = sig[:, 1 * H:2 * H]
        o_g = sig[:, 2 * H:3 * H]
        g_g = jnp.tanh(g[:, 3 * H:])
        c_new = f_g * c + i_g * g_g
        h_new = o_g * jnp.tanh(c_new)
        return h_new, c_new

    h0 = h0_ref[0]
    c0 = c0_ref[0]
    h1 = h0_ref[1]
    c1 = c0_ref[1]

    # ---- skewed, fully-unrolled two-layer recurrence ---------------------------
    # Combined step t runs layer-0 step t and layer-1 step t-1; both consume the
    # carried h0 (= layer-0 output at time t-1), so their MXU/VPU/EUP work is
    # independent within the step and can co-issue.
    for t in range(S + 1):
        nh0 = nc0 = None
        if t < S:
            g0 = gin0_ref[t] + jnp.dot(h0.astype(jnp.bfloat16), whh0_ref[...],
                                       preferred_element_type=jnp.float32)
            nh0, nc0 = gate_math(g0, c0)
        if t >= 1:
            g1 = (jnp.dot(h0.astype(jnp.bfloat16), wih1_ref[...],
                          preferred_element_type=jnp.float32)
                  + jnp.dot(h1.astype(jnp.bfloat16), whh1_ref[...],
                            preferred_element_type=jnp.float32)
                  + b1b)
            h1, c1 = gate_math(g1, c1)
        if t < S:
            h0, c0 = nh0, nc0

    hn_ref[0] = h0
    hn_ref[1] = h1
    cn_ref[0] = c0
    cn_ref[1] = c1

    # ---- output projection on the last time step + log_softmax -----------------
    logits = (jnp.dot(h1.astype(jnp.bfloat16), wout_ref[...],
                      preferred_element_type=jnp.float32)
              + bout_ref[...])                                  # (Bp, V) f32
    m = jnp.max(logits, axis=-1, keepdims=True)
    z = logits - m
    lse = jnp.log(jnp.sum(jnp.exp(z), axis=-1, keepdims=True))
    out_ref[0] = z - lse


def _permute_gates(w, h):
    # PyTorch LSTM gate-row order (i, f, g, o) -> kernel order (i, f, o, g)
    return jnp.concatenate([w[0:h], w[h:2 * h], w[3 * h:4 * h], w[2 * h:3 * h]], axis=0)


def inference_model_forward(tokens, params, hx=None):
    """tokens: int32 (S, B). Returns (log_probs (1,B,V), (h_n, c_n) each (L,B,H))."""
    S, B = tokens.shape
    Bp = ((max(B, 8) + 7) // 8) * 8            # pad batch to full 8-sublane tiles

    # Embedding lookup (gather) stays as plain-JAX glue; activations go to bf16.
    x_emb = params["emb"][tokens].astype(jnp.bfloat16)           # (S, B, EMB)
    x_emb = jnp.pad(x_emb, ((0, 0), (0, Bp - B), (0, 0)))        # (S, Bp, EMB)
    x_flat = x_emb.reshape(S * Bp, EMB)                          # pre-flattened

    if hx is None:
        h0 = jnp.zeros((LAYERS, Bp, HID), jnp.float32)
        c0 = jnp.zeros((LAYERS, Bp, HID), jnp.float32)
    else:
        h0, c0 = hx
        h0 = jnp.pad(h0.astype(jnp.float32), ((0, 0), (0, Bp - B), (0, 0)))
        c0 = jnp.pad(c0.astype(jnp.float32), ((0, 0), (0, Bp - B), (0, 0)))

    # Gate-reorder + transpose PyTorch-shaped weights (glue); matmul operands in bf16,
    # biases stay f32 (elementwise math is f32 inside the kernel).
    wih0_t = _permute_gates(params["wih0"], HID).T.astype(jnp.bfloat16)   # (EMB, 4H)
    whh0_t = _permute_gates(params["whh0"], HID).T.astype(jnp.bfloat16)   # (H, 4H)
    b0 = _permute_gates(params["bih0"] + params["bhh0"], HID).reshape(1, 4 * HID)
    wih1_t = _permute_gates(params["wih1"], HID).T.astype(jnp.bfloat16)   # (H, 4H)
    whh1_t = _permute_gates(params["whh1"], HID).T.astype(jnp.bfloat16)   # (H, 4H)
    b1 = _permute_gates(params["bih1"] + params["bhh1"], HID).reshape(1, 4 * HID)
    wout_t = params["wout"].T.astype(jnp.bfloat16)                        # (H, V)
    bout = params["bout"].reshape(1, VOCAB)

    vmem = pl.BlockSpec(memory_space=pltpu.MemorySpace.VMEM)
    log_probs, h_n, c_n = pl.pallas_call(
        lstm_lm_kernel,
        out_shape=(jax.ShapeDtypeStruct((1, Bp, VOCAB), jnp.float32),
                   jax.ShapeDtypeStruct((LAYERS, Bp, HID), jnp.float32),
                   jax.ShapeDtypeStruct((LAYERS, Bp, HID), jnp.float32)),
        in_specs=[vmem] * 11,
        out_specs=(vmem, vmem, vmem),
        scratch_shapes=[pltpu.VMEM((S, Bp, 4 * HID), jnp.float32)],
    )(x_flat, wih0_t, whh0_t, b0, wih1_t, whh1_t, b1, wout_t, bout, h0, c0)

    # Slice the real batch rows back out.
    return log_probs[:, :B, :], (h_n[:, :B, :], c_n[:, :B, :])


def make_params(key):
    ks = jax.random.split(key, 11)
    k = 1.0 / jnp.sqrt(jnp.float32(HID))
    u = lambda kk, shape: jax.random.uniform(kk, shape, jnp.float32, -k, k)
    return {
        "emb":  jax.random.normal(ks[0], (VOCAB, EMB), jnp.float32) * 0.1,
        "wih0": u(ks[1], (4 * HID, EMB)), "whh0": u(ks[2], (4 * HID, HID)),
        "bih0": u(ks[3], (4 * HID,)),     "bhh0": u(ks[4], (4 * HID,)),
        "wih1": u(ks[5], (4 * HID, HID)), "whh1": u(ks[6], (4 * HID, HID)),
        "bih1": u(ks[7], (4 * HID,)),     "bhh1": u(ks[8], (4 * HID,)),
        "wout": u(ks[9], (VOCAB, HID)),   "bout": u(ks[10], (VOCAB,)),
    }


def reference_forward(tokens, p):
    """Pure-JAX f32 reference (mirrors torch.nn.LSTM equations) for correctness check."""
    x = p["emb"][tokens]
    S, B, _ = x.shape
    H = HID

    def cell(x_t, h, c, wih, whh, b):
        gates = x_t @ wih.T + h @ whh.T + b
        i = jax.nn.sigmoid(gates[:, :H])
        f = jax.nn.sigmoid(gates[:, H:2 * H])
        g = jnp.tanh(gates[:, 2 * H:3 * H])
        o = jax.nn.sigmoid(gates[:, 3 * H:])
        c = f * c + i * g
        return o * jnp.tanh(c), c

    h = [jnp.zeros((B, H)), jnp.zeros((B, H))]
    c = [jnp.zeros((B, H)), jnp.zeros((B, H))]
    for t in range(S):
        h[0], c[0] = cell(x[t], h[0], c[0], p["wih0"], p["whh0"], p["bih0"] + p["bhh0"])
        h[1], c[1] = cell(h[0], h[1], c[1], p["wih1"], p["whh1"], p["bih1"] + p["bhh1"])
    logits = h[1] @ p["wout"].T + p["bout"]
    return jax.nn.log_softmax(logits, axis=-1)[None], (jnp.stack(h), jnp.stack(c))


if __name__ == "__main__":
    key = jax.random.PRNGKey(0)
    pkey, tkey = jax.random.split(key)
    params = make_params(pkey)
    tokens = jax.random.randint(tkey, (SEQ, BATCH), 0, VOCAB, dtype=jnp.int32)

    fwd = jax.jit(inference_model_forward)
    log_probs, (h_n, c_n) = fwd(tokens, params)
    jax.block_until_ready((log_probs, h_n, c_n))

    ref_lp, (ref_h, ref_c) = reference_forward(tokens, params)
    assert log_probs.shape == (1, BATCH, VOCAB)
    assert h_n.shape == (LAYERS, BATCH, HID) and c_n.shape == (LAYERS, BATCH, HID)
    # bf16 matmul inputs -> slightly looser tolerance than pure-f32.
    assert jnp.allclose(log_probs, ref_lp, atol=2e-2, rtol=2e-2), "log_probs mismatch"
    assert jnp.allclose(h_n, ref_h, atol=2e-2, rtol=2e-2), "h_n mismatch"
    assert jnp.allclose(c_n, ref_c, atol=2e-2, rtol=2e-2), "c_n mismatch"

    print("KERNEL_OK")
</pallas_src>

<mosaic_0001>
module attributes {stable_mosaic.version = 11 : i64} {
  func.func @lstm_lm_kernel(%arg0: memref<64x128xbf16, #tpu.memory_space<vmem>>, %arg1: memref<128x512xbf16, #tpu.memory_space<vmem>>, %arg2: memref<128x512xbf16, #tpu.memory_space<vmem>>, %arg3: memref<1x512xf32, #tpu.memory_space<vmem>>, %arg4: memref<128x512xbf16, #tpu.memory_space<vmem>>, %arg5: memref<128x512xbf16, #tpu.memory_space<vmem>>, %arg6: memref<1x512xf32, #tpu.memory_space<vmem>>, %arg7: memref<128x256xbf16, #tpu.memory_space<vmem>>, %arg8: memref<1x256xf32, #tpu.memory_space<vmem>>, %arg9: memref<2x8x128xf32, #tpu.memory_space<vmem>>, %arg10: memref<2x8x128xf32, #tpu.memory_space<vmem>>, %arg11: memref<1x8x256xf32, #tpu.memory_space<vmem>>, %arg12: memref<2x8x128xf32, #tpu.memory_space<vmem>>, %arg13: memref<2x8x128xf32, #tpu.memory_space<vmem>>, %arg14: memref<8x8x512xf32, #tpu.memory_space<vmem>>) attributes {dimension_semantics = [], scalar_prefetch = 0 : i64, scratch_operands = 1 : i64, tpu.core_type = #tpu.core_type<tc>} {
    %c0 = arith.constant 0 : index
    %c0_0 = arith.constant 0 : index
    %0 = vector.load %arg0[%c0, %c0_0] : memref<64x128xbf16, #tpu.memory_space<vmem>>, vector<64x128xbf16>
    %c0_1 = arith.constant 0 : index
    %c0_2 = arith.constant 0 : index
    %1 = vector.load %arg1[%c0_1, %c0_2] : memref<128x512xbf16, #tpu.memory_space<vmem>>, vector<128x512xbf16>
    %cst = arith.constant dense<0.000000e+00> : vector<64x512xf32>
    %2 = tpu.matmul %0, %1, %cst {dimension_numbers = #tpu.dot_dimension_numbers<[1], [0], [0], [1], [0, 0, 1, 1], [], []>} : vector<64x128xbf16>, vector<128x512xbf16>, vector<64x512xf32> -> vector<64x512xf32>
    %c0_3 = arith.constant 0 : index
    %c0_4 = arith.constant 0 : index
    %3 = vector.load %arg3[%c0_3, %c0_4] : memref<1x512xf32, #tpu.memory_space<vmem>>, vector<1x512xf32>
    %4 = vector.broadcast %3 : vector<1x512xf32> to vector<64x512xf32>
    %5 = arith.addf %2, %4 : vector<64x512xf32>
    %6 = vector.shape_cast %5 : vector<64x512xf32> to vector<8x8x512xf32>
    %c0_5 = arith.constant 0 : index
    %c0_6 = arith.constant 0 : index
    %c0_7 = arith.constant 0 : index
    %7 = vector.load %arg14[%c0_5, %c0_6, %c0_7] : memref<8x8x512xf32, #tpu.memory_space<vmem>>, vector<8x8x512xf32>
    tpu.vector_store %arg14[%c0_5, %c0_6, %c0_7], %6 {strides = array<i32>} : memref<8x8x512xf32, #tpu.memory_space<vmem>>, vector<8x8x512xf32>,
    %c0_8 = arith.constant 0 : index
    %c0_9 = arith.constant 0 : index
    %8 = vector.load %arg6[%c0_8, %c0_9] : memref<1x512xf32, #tpu.memory_space<vmem>>, vector<1x512xf32>
    %9 = vector.shape_cast %8 : vector<1x512xf32> to vector<1x512xf32>
    %10 = vector.broadcast %9 : vector<1x512xf32> to vector<8x512xf32>
    %c0_10 = arith.constant 0 : index
    %c0_11 = arith.constant 0 : index
    %c0_12 = arith.constant 0 : index
    %11 = vector.load %arg9[%c0_10, %c0_11, %c0_12] : memref<2x8x128xf32, #tpu.memory_space<vmem>>, vector<1x8x128xf32>
    %12 = vector.shape_cast %11 : vector<1x8x128xf32> to vector<8x128xf32>
    %c0_13 = arith.constant 0 : index
    %c0_14 = arith.constant 0 : index
    %c0_15 = arith.constant 0 : index
    %13 = vector.load %arg10[%c0_13, %c0_14, %c0_15] : memref<2x8x128xf32, #tpu.memory_space<vmem>>, vector<1x8x128xf32>
    %14 = vector.shape_cast %13 : vector<1x8x128xf32> to vector<8x128xf32>
    %c1 = arith.constant 1 : index
    %c0_16 = arith.constant 0 : index
    %c0_17 = arith.constant 0 : index
    %15 = vector.load %arg9[%c1, %c0_16, %c0_17] : memref<2x8x128xf32, #tpu.memory_space<vmem>>, vector<1x8x128xf32>
    %16 = vector.shape_cast %15 : vector<1x8x128xf32> to vector<8x128xf32>
    %c1_18 = arith.constant 1 : index
    %c0_19 = arith.constant 0 : index
    %c0_20 = arith.constant 0 : index
    %17 = vector.load %arg10[%c1_18, %c0_19, %c0_20] : memref<2x8x128xf32, #tpu.memory_space<vmem>>, vector<1x8x128xf32>
    %18 = vector.shape_cast %17 : vector<1x8x128xf32> to vector<8x128xf32>
    %c0_21 = arith.constant 0 : index
    %c0_22 = arith.constant 0 : index
    %c0_23 = arith.constant 0 : index
    %19 = vector.load %arg14[%c0_21, %c0_22, %c0_23] : memref<8x8x512xf32, #tpu.memory_space<vmem>>, vector<1x8x512xf32>
    %20 = vector.shape_cast %19 : vector<1x8x512xf32> to vector<8x512xf32>
    %21 = arith.truncf %12 : vector<8x128xf32> to vector<8x128xbf16>
    %c0_24 = arith.constant 0 : index
    %c0_25 = arith.constant 0 : index
    %22 = vector.load %arg2[%c0_24, %c0_25] : memref<128x512xbf16, #tpu.memory_space<vmem>>, vector<128x512xbf16>
    %cst_26 = arith.constant dense<0.000000e+00> : vector<8x512xf32>
    %23 = tpu.matmul %21, %22, %cst_26 {dimension_numbers = #tpu.dot_dimension_numbers<[1], [0], [0], [1], [0, 0, 1, 1], [], []>} : vector<8x128xbf16>, vector<128x512xbf16>, vector<8x512xf32> -> vector<8x512xf32>
    %24 = arith.addf %20, %23 : vector<8x512xf32>
    %25 = vector.extract_strided_slice %24 {offsets = [0, 0], sizes = [8, 384], strides = [1, 1]} : vector<8x512xf32> to vector<8x384xf32>
    %26 = arith.negf %25 : vector<8x384xf32>
    %27 = math.exp %26 : vector<8x384xf32>
    %cst_27 = arith.constant 1.000000e+00 : f32
    %28 = vector.broadcast %cst_27 : f32 to vector<8x384xf32>
    %29 = arith.addf %28, %27 : vector<8x384xf32>
    %30 = arith.divf %28, %29 : vector<8x384xf32>
    %31 = vector.extract_strided_slice %30 {offsets = [0, 0], sizes = [8, 128], strides = [1, 1]} : vector<8x384xf32> to vector<8x128xf32>
    %32 = vector.extract_strided_slice %30 {offsets = [0, 128], sizes = [8, 128], strides = [1, 1]} : vector<8x384xf32> to vector<8x128xf32>
    %33 = vector.extract_strided_slice %30 {offsets = [0, 256], sizes = [8, 128], strides = [1, 1]} : vector<8x384xf32> to vector<8x128xf32>
    %34 = vector.extract_strided_slice %24 {offsets = [0, 384], sizes = [8, 128], strides = [1, 1]} : vector<8x512xf32> to vector<8x128xf32>
    %35 = math.tanh %34 : vector<8x128xf32>
    %36 = arith.mulf %32, %14 : vector<8x128xf32>
    %37 = arith.mulf %31, %35 : vector<8x128xf32>
    %38 = arith.addf %36, %37 : vector<8x128xf32>
    %39 = math.tanh %38 : vector<8x128xf32>
    %40 = arith.mulf %33, %39 : vector<8x128xf32>
    %c1_28 = arith.constant 1 : index
    %c0_29 = arith.constant 0 : index
    %c0_30 = arith.constant 0 : index
    %41 = vector.load %arg14[%c1_28, %c0_29, %c0_30] : memref<8x8x512xf32, #tpu.memory_space<vmem>>, vector<1x8x512xf32>
    %42 = vector.shape_cast %41 : vector<1x8x512xf32> to vector<8x512xf32>
    %43 = arith.truncf %40 : vector<8x128xf32> to vector<8x128xbf16>
    %c0_31 = arith.constant 0 : index
    %c0_32 = arith.constant 0 : index
    %44 = vector.load %arg2[%c0_31, %c0_32] : memref<128x512xbf16, #tpu.memory_space<vmem>>, vector<128x512xbf16>
    %cst_33 = arith.constant dense<0.000000e+00> : vector<8x512xf32>
    %45 = tpu.matmul %43, %44, %cst_33 {dimension_numbers = #tpu.dot_dimension_numbers<[1], [0], [0], [1], [0, 0, 1, 1], [], []>} : vector<8x128xbf16>, vector<128x512xbf16>, vector<8x512xf32> -> vector<8x512xf32>
    %46 = arith.addf %42, %45 : vector<8x512xf32>
    %47 = vector.extract_strided_slice %46 {offsets = [0, 0], sizes = [8, 384], strides = [1, 1]} : vector<8x512xf32> to vector<8x384xf32>
    %48 = arith.negf %47 : vector<8x384xf32>
    %49 = math.exp %48 : vector<8x384xf32>
    %cst_34 = arith.constant 1.000000e+00 : f32
    %50 = vector.broadcast %cst_34 : f32 to vector<8x384xf32>
    %51 = arith.addf %50, %49 : vector<8x384xf32>
    %52 = arith.divf %50, %51 : vector<8x384xf32>
    %53 = vector.extract_strided_slice %52 {offsets = [0, 0], sizes = [8, 128], strides = [1, 1]} : vector<8x384xf32> to vector<8x128xf32>
    %54 = vector.extract_strided_slice %52 {offsets = [0, 128], sizes = [8, 128], strides = [1, 1]} : vector<8x384xf32> to vector<8x128xf32>
    %55 = vector.extract_strided_slice %52 {offsets = [0, 256], sizes = [8, 128], strides = [1, 1]} : vector<8x384xf32> to vector<8x128xf32>
    %56 = vector.extract_strided_slice %46 {offsets = [0, 384], sizes = [8, 128], strides = [1, 1]} : vector<8x512xf32> to vector<8x128xf32>
    %57 = math.tanh %56 : vector<8x128xf32>
    %58 = arith.mulf %54, %38 : vector<8x128xf32>
    %59 = arith.mulf %53, %57 : vector<8x128xf32>
    %60 = arith.addf %58, %59 : vector<8x128xf32>
    %61 = math.tanh %60 : vector<8x128xf32>
    %62 = arith.mulf %55, %61 : vector<8x128xf32>
    %63 = arith.truncf %40 : vector<8x128xf32> to vector<8x128xbf16>
    %c0_35 = arith.constant 0 : index
    %c0_36 = arith.constant 0 : index
    %64 = vector.load %arg4[%c0_35, %c0_36] : memref<128x512xbf16, #tpu.memory_space<vmem>>, vector<128x512xbf16>
    %cst_37 = arith.constant dense<0.000000e+00> : vector<8x512xf32>
    %65 = tpu.matmul %63, %64, %cst_37 {dimension_numbers = #tpu.dot_dimension_numbers<[1], [0], [0], [1], [0, 0, 1, 1], [], []>} : vector<8x128xbf16>, vector<128x512xbf16>, vector<8x512xf32> -> vector<8x512xf32>
    %66 = arith.truncf %16 : vector<8x128xf32> to vector<8x128xbf16>
    %c0_38 = arith.constant 0 : index
    %c0_39 = arith.constant 0 : index
    %67 = vector.load %arg5[%c0_38, %c0_39] : memref<128x512xbf16, #tpu.memory_space<vmem>>, vector<128x512xbf16>
    %cst_40 = arith.constant dense<0.000000e+00> : vector<8x512xf32>
    %68 = tpu.matmul %66, %67, %cst_40 {dimension_numbers = #tpu.dot_dimension_numbers<[1], [0], [0], [1], [0, 0, 1, 1], [], []>} : vector<8x128xbf16>, vector<128x512xbf16>, vector<8x512xf32> -> vector<8x512xf32>
    %69 = arith.addf %65, %68 : vector<8x512xf32>
    %70 = arith.addf %69, %10 : vector<8x512xf32>
    %71 = vector.extract_strided_slice %70 {offsets = [0, 0], sizes = [8, 384], strides = [1, 1]} : vector<8x512xf32> to vector<8x384xf32>
    %72 = arith.negf %71 : vector<8x384xf32>
    %73 = math.exp %72 : vector<8x384xf32>
    %cst_41 = arith.constant 1.000000e+00 : f32
    %74 = vector.broadcast %cst_41 : f32 to vector<8x384xf32>
    %75 = arith.addf %74, %73 : vector<8x384xf32>
    %76 = arith.divf %74, %75 : vector<8x384xf32>
    %77 = vector.extract_strided_slice %76 {offsets = [0, 0], sizes = [8, 128], strides = [1, 1]} : vector<8x384xf32> to vector<8x128xf32>
    %78 = vector.extract_strided_slice %76 {offsets = [0, 128], sizes = [8, 128], strides = [1, 1]} : vector<8x384xf32> to vector<8x128xf32>
    %79 = vector.extract_strided_slice %76 {offsets = [0, 256], sizes = [8, 128], strides = [1, 1]} : vector<8x384xf32> to vector<8x128xf32>
    %80 = vector.extract_strided_slice %70 {offsets = [0, 384], sizes = [8, 128], strides = [1, 1]} : vector<8x512xf32> to vector<8x128xf32>
    %81 = math.tanh %80 : vector<8x128xf32>
    %82 = arith.mulf %78, %18 : vector<8x128xf32>
    %83 = arith.mulf %77, %81 : vector<8x128xf32>
    %84 = arith.addf %82, %83 : vector<8x128xf32>
    %85 = math.tanh %84 : vector<8x128xf32>
    %86 = arith.mulf %79, %85 : vector<8x128xf32>
    %c2 = arith.constant 2 : index
    %c0_42 = arith.constant 0 : index
    %c0_43 = arith.constant 0 : index
    %87 = vector.load %arg14[%c2, %c0_42, %c0_43] : memref<8x8x512xf32, #tpu.memory_space<vmem>>, vector<1x8x512xf32>
    %88 = vector.shape_cast %87 : vector<1x8x512xf32> to vector<8x512xf32>
    %89 = arith.truncf %62 : vector<8x128xf32> to vector<8x128xbf16>
    %c0_44 = arith.constant 0 : index
    %c0_45 = arith.constant 0 : index
    %90 = vector.load %arg2[%c0_44, %c0_45] : memref<128x512xbf16, #tpu.memory_space<vmem>>, vector<128x512xbf16>
    %cst_46 = arith.constant dense<0.000000e+00> : vector<8x512xf32>
    %91 = tpu.matmul %89, %90, %cst_46 {dimension_numbers = #tpu.dot_dimension_numbers<[1], [0], [0], [1], [0, 0, 1, 1], [], []>} : vector<8x128xbf16>, vector<128x512xbf16>, vector<8x512xf32> -> vector<8x512xf32>
    %92 = arith.addf %88, %91 : vector<8x512xf32>
    %93 = vector.extract_strided_slice %92 {offsets = [0, 0], sizes = [8, 384], strides = [1, 1]} : vector<8x512xf32> to vector<8x384xf32>
    %94 = arith.negf %93 : vector<8x384xf32>
    %95 = math.exp %94 : vector<8x384xf32>
    %cst_47 = arith.constant 1.000000e+00 : f32
    %96 = vector.broadcast %cst_47 : f32 to vector<8x384xf32>
    %97 = arith.addf %96, %95 : vector<8x384xf32>
    %98 = arith.divf %96, %97 : vector<8x384xf32>
    %99 = vector.extract_strided_slice %98 {offsets = [0, 0], sizes = [8, 128], strides = [1, 1]} : vector<8x384xf32> to vector<8x128xf32>
    %100 = vector.extract_strided_slice %98 {offsets = [0, 128], sizes = [8, 128], strides = [1, 1]} : vector<8x384xf32> to vector<8x128xf32>
    %101 = vector.extract_strided_slice %98 {offsets = [0, 256], sizes = [8, 128], strides = [1, 1]} : vector<8x384xf32> to vector<8x128xf32>
    %102 = vector.extract_strided_slice %92 {offsets = [0, 384], sizes = [8, 128], strides = [1, 1]} : vector<8x512xf32> to vector<8x128xf32>
    %103 = math.tanh %102 : vector<8x128xf32>
    %104 = arith.mulf %100, %60 : vector<8x128xf32>
    %105 = arith.mulf %99, %103 : vector<8x128xf32>
    %106 = arith.addf %104, %105 : vector<8x128xf32>
    %107 = math.tanh %106 : vector<8x128xf32>
    %108 = arith.mulf %101, %107 : vector<8x128xf32>
    %109 = arith.truncf %62 : vector<8x128xf32> to vector<8x128xbf16>
    %c0_48 = arith.constant 0 : index
    %c0_49 = arith.constant 0 : index
    %110 = vector.load %arg4[%c0_48, %c0_49] : memref<128x512xbf16, #tpu.memory_space<vmem>>, vector<128x512xbf16>
    %cst_50 = arith.constant dense<0.000000e+00> : vector<8x512xf32>
    %111 = tpu.matmul %109, %110, %cst_50 {dimension_numbers = #tpu.dot_dimension_numbers<[1], [0], [0], [1], [0, 0, 1, 1], [], []>} : vector<8x128xbf16>, vector<128x512xbf16>, vector<8x512xf32> -> vector<8x512xf32>
    %112 = arith.truncf %86 : vector<8x128xf32> to vector<8x128xbf16>
    %c0_51 = arith.constant 0 : index
    %c0_52 = arith.constant 0 : index
    %113 = vector.load %arg5[%c0_51, %c0_52] : memref<128x512xbf16, #tpu.memory_space<vmem>>, vector<128x512xbf16>
    %cst_53 = arith.constant dense<0.000000e+00> : vector<8x512xf32>
    %114 = tpu.matmul %112, %113, %cst_53 {dimension_numbers = #tpu.dot_dimension_numbers<[1], [0], [0], [1], [0, 0, 1, 1], [], []>} : vector<8x128xbf16>, vector<128x512xbf16>, vector<8x512xf32> -> vector<8x512xf32>
    %115 = arith.addf %111, %114 : vector<8x512xf32>
    %116 = arith.addf %115, %10 : vector<8x512xf32>
    %117 = vector.extract_strided_slice %116 {offsets = [0, 0], sizes = [8, 384], strides = [1, 1]} : vector<8x512xf32> to vector<8x384xf32>
    %118 = arith.negf %117 : vector<8x384xf32>
    %119 = math.exp %118 : vector<8x384xf32>
    %cst_54 = arith.constant 1.000000e+00 : f32
    %120 = vector.broadcast %cst_54 : f32 to vector<8x384xf32>
    %121 = arith.addf %120, %119 : vector<8x384xf32>
    %122 = arith.divf %120, %121 : vector<8x384xf32>
    %123 = vector.extract_strided_slice %122 {offsets = [0, 0], sizes = [8, 128], strides = [1, 1]} : vector<8x384xf32> to vector<8x128xf32>
    %124 = vector.extract_strided_slice %122 {offsets = [0, 128], sizes = [8, 128], strides = [1, 1]} : vector<8x384xf32> to vector<8x128xf32>
    %125 = vector.extract_strided_slice %122 {offsets = [0, 256], sizes = [8, 128], strides = [1, 1]} : vector<8x384xf32> to vector<8x128xf32>
    %126 = vector.extract_strided_slice %116 {offsets = [0, 384], sizes = [8, 128], strides = [1, 1]} : vector<8x512xf32> to vector<8x128xf32>
    %127 = math.tanh %126 : vector<8x128xf32>
    %128 = arith.mulf %124, %84 : vector<8x128xf32>
    %129 = arith.mulf %123, %127 : vector<8x128xf32>
    %130 = arith.addf %128, %129 : vector<8x128xf32>
    %131 = math.tanh %130 : vector<8x128xf32>
    %132 = arith.mulf %125, %131 : vector<8x128xf32>
    %c3 = arith.constant 3 : index
    %c0_55 = arith.constant 0 : index
    %c0_56 = arith.constant 0 : index
    %133 = vector.load %arg14[%c3, %c0_55, %c0_56] : memref<8x8x512xf32, #tpu.memory_space<vmem>>, vector<1x8x512xf32>
    %134 = vector.shape_cast %133 : vector<1x8x512xf32> to vector<8x512xf32>
    %135 = arith.truncf %108 : vector<8x128xf32> to vector<8x128xbf16>
    %c0_57 = arith.constant 0 : index
    %c0_58 = arith.constant 0 : index
    %136 = vector.load %arg2[%c0_57, %c0_58] : memref<128x512xbf16, #tpu.memory_space<vmem>>, vector<128x512xbf16>
    %cst_59 = arith.constant dense<0.000000e+00> : vector<8x512xf32>
    %137 = tpu.matmul %135, %136, %cst_59 {dimension_numbers = #tpu.dot_dimension_numbers<[1], [0], [0], [1], [0, 0, 1, 1], [], []>} : vector<8x128xbf16>, vector<128x512xbf16>, vector<8x512xf32> -> vector<8x512xf32>
    %138 = arith.addf %134, %137 : vector<8x512xf32>
    %139 = vector.extract_strided_slice %138 {offsets = [0, 0], sizes = [8, 384], strides = [1, 1]} : vector<8x512xf32> to vector<8x384xf32>
    %140 = arith.negf %139 : vector<8x384xf32>
    %141 = math.exp %140 : vector<8x384xf32>
    %cst_60 = arith.constant 1.000000e+00 : f32
    %142 = vector.broadcast %cst_60 : f32 to vector<8x384xf32>
    %143 = arith.addf %142, %141 : vector<8x384xf32>
    %144 = arith.divf %142, %143 : vector<8x384xf32>
    %145 = vector.extract_strided_slice %144 {offsets = [0, 0], sizes = [8, 128], strides = [1, 1]} : vector<8x384xf32> to vector<8x128xf32>
    %146 = vector.extract_strided_slice %144 {offsets = [0, 128], sizes = [8, 128], strides = [1, 1]} : vector<8x384xf32> to vector<8x128xf32>
    %147 = vector.extract_strided_slice %144 {offsets = [0, 256], sizes = [8, 128], strides = [1, 1]} : vector<8x384xf32> to vector<8x128xf32>
    %148 = vector.extract_strided_slice %138 {offsets = [0, 384], sizes = [8, 128], strides = [1, 1]} : vector<8x512xf32> to vector<8x128xf32>
    %149 = math.tanh %148 : vector<8x128xf32>
    %150 = arith.mulf %146, %106 : vector<8x128xf32>
    %151 = arith.mulf %145, %149 : vector<8x128xf32>
    %152 = arith.addf %150, %151 : vector<8x128xf32>
    %153 = math.tanh %152 : vector<8x128xf32>
    %154 = arith.mulf %147, %153 : vector<8x128xf32>
    %155 = arith.truncf %108 : vector<8x128xf32> to vector<8x128xbf16>
    %c0_61 = arith.constant 0 : index
    %c0_62 = arith.constant 0 : index
    %156 = vector.load %arg4[%c0_61, %c0_62] : memref<128x512xbf16, #tpu.memory_space<vmem>>, vector<128x512xbf16>
    %cst_63 = arith.constant dense<0.000000e+00> : vector<8x512xf32>
    %157 = tpu.matmul %155, %156, %cst_63 {dimension_numbers = #tpu.dot_dimension_numbers<[1], [0], [0], [1], [0, 0, 1, 1], [], []>} : vector<8x128xbf16>, vector<128x512xbf16>, vector<8x512xf32> -> vector<8x512xf32>
    %158 = arith.truncf %132 : vector<8x128xf32> to vector<8x128xbf16>
    %c0_64 = arith.constant 0 : index
    %c0_65 = arith.constant 0 : index
    %159 = vector.load %arg5[%c0_64, %c0_65] : memref<128x512xbf16, #tpu.memory_space<vmem>>, vector<128x512xbf16>
    %cst_66 = arith.constant dense<0.000000e+00> : vector<8x512xf32>
    %160 = tpu.matmul %158, %159, %cst_66 {dimension_numbers = #tpu.dot_dimension_numbers<[1], [0], [0], [1], [0, 0, 1, 1], [], []>} : vector<8x128xbf16>, vector<128x512xbf16>, vector<8x512xf32> -> vector<8x512xf32>
    %161 = arith.addf %157, %160 : vector<8x512xf32>
    %162 = arith.addf %161, %10 : vector<8x512xf32>
    %163 = vector.extract_strided_slice %162 {offsets = [0, 0], sizes = [8, 384], strides = [1, 1]} : vector<8x512xf32> to vector<8x384xf32>
    %164 = arith.negf %163 : vector<8x384xf32>
    %165 = math.exp %164 : vector<8x384xf32>
    %cst_67 = arith.constant 1.000000e+00 : f32
    %166 = vector.broadcast %cst_67 : f32 to vector<8x384xf32>
    %167 = arith.addf %166, %165 : vector<8x384xf32>
    %168 = arith.divf %166, %167 : vector<8x384xf32>
    %169 = vector.extract_strided_slice %168 {offsets = [0, 0], sizes = [8, 128], strides = [1, 1]} : vector<8x384xf32> to vector<8x128xf32>
    %170 = vector.extract_strided_slice %168 {offsets = [0, 128], sizes = [8, 128], strides = [1, 1]} : vector<8x384xf32> to vector<8x128xf32>
    %171 = vector.extract_strided_slice %168 {offsets = [0, 256], sizes = [8, 128], strides = [1, 1]} : vector<8x384xf32> to vector<8x128xf32>
    %172 = vector.extract_strided_slice %162 {offsets = [0, 384], sizes = [8, 128], strides = [1, 1]} : vector<8x512xf32> to vector<8x128xf32>
    %173 = math.tanh %172 : vector<8x128xf32>
    %174 = arith.mulf %170, %130 : vector<8x128xf32>
    %175 = arith.mulf %169, %173 : vector<8x128xf32>
    %176 = arith.addf %174, %175 : vector<8x128xf32>
    %177 = math.tanh %176 : vector<8x128xf32>
    %178 = arith.mulf %171, %177 : vector<8x128xf32>
    %c4 = arith.constant 4 : index
    %c0_68 = arith.constant 0 : index
    %c0_69 = arith.constant 0 : index
    %179 = vector.load %arg14[%c4, %c0_68, %c0_69] : memref<8x8x512xf32, #tpu.memory_space<vmem>>, vector<1x8x512xf32>
    %180 = vector.shape_cast %179 : vector<1x8x512xf32> to vector<8x512xf32>
    %181 = arith.truncf %154 : vector<8x128xf32> to vector<8x128xbf16>
    %c0_70 = arith.constant 0 : index
    %c0_71 = arith.constant 0 : index
    %182 = vector.load %arg2[%c0_70, %c0_71] : memref<128x512xbf16, #tpu.memory_space<vmem>>, vector<128x512xbf16>
    %cst_72 = arith.constant dense<0.000000e+00> : vector<8x512xf32>
    %183 = tpu.matmul %181, %182, %cst_72 {dimension_numbers = #tpu.dot_dimension_numbers<[1], [0], [0], [1], [0, 0, 1, 1], [], []>} : vector<8x128xbf16>, vector<128x512xbf16>, vector<8x512xf32> -> vector<8x512xf32>
    %184 = arith.addf %180, %183 : vector<8x512xf32>
    %185 = vector.extract_strided_slice %184 {offsets = [0, 0], sizes = [8, 384], strides = [1, 1]} : vector<8x512xf32> to vector<8x384xf32>
    %186 = arith.negf %185 : vector<8x384xf32>
    %187 = math.exp %186 : vector<8x384xf32>
    %cst_73 = arith.constant 1.000000e+00 : f32
    %188 = vector.broadcast %cst_73 : f32 to vector<8x384xf32>
    %189 = arith.addf %188, %187 : vector<8x384xf32>
    %190 = arith.divf %188, %189 : vector<8x384xf32>
    %191 = vector.extract_strided_slice %190 {offsets = [0, 0], sizes = [8, 128], strides = [1, 1]} : vector<8x384xf32> to vector<8x128xf32>
    %192 = vector.extract_strided_slice %190 {offsets = [0, 128], sizes = [8, 128], strides = [1, 1]} : vector<8x384xf32> to vector<8x128xf32>
    %193 = vector.extract_strided_slice %190 {offsets = [0, 256], sizes = [8, 128], strides = [1, 1]} : vector<8x384xf32> to vector<8x128xf32>
    %194 = vector.extract_strided_slice %184 {offsets = [0, 384], sizes = [8, 128], strides = [1, 1]} : vector<8x512xf32> to vector<8x128xf32>
    %195 = math.tanh %194 : vector<8x128xf32>
    %196 = arith.mulf %192, %152 : vector<8x128xf32>
    %197 = arith.mulf %191, %195 : vector<8x128xf32>
    %198 = arith.addf %196, %197 : vector<8x128xf32>
    %199 = math.tanh %198 : vector<8x128xf32>
    %200 = arith.mulf %193, %199 : vector<8x128xf32>
    %201 = arith.truncf %154 : vector<8x128xf32> to vector<8x128xbf16>
    %c0_74 = arith.constant 0 : index
    %c0_75 = arith.constant 0 : index
    %202 = vector.load %arg4[%c0_74, %c0_75] : memref<128x512xbf16, #tpu.memory_space<vmem>>, vector<128x512xbf16>
    %cst_76 = arith.constant dense<0.000000e+00> : vector<8x512xf32>
    %203 = tpu.matmul %201, %202, %cst_76 {dimension_numbers = #tpu.dot_dimension_numbers<[1], [0], [0], [1], [0, 0, 1, 1], [], []>} : vector<8x128xbf16>, vector<128x512xbf16>, vector<8x512xf32> -> vector<8x512xf32>
    %204 = arith.truncf %178 : vector<8x128xf32> to vector<8x128xbf16>
    %c0_77 = arith.constant 0 : index
    %c0_78 = arith.constant 0 : index
    %205 = vector.load %arg5[%c0_77, %c0_78] : memref<128x512xbf16, #tpu.memory_space<vmem>>, vector<128x512xbf16>
    %cst_79 = arith.constant dense<0.000000e+00> : vector<8x512xf32>
    %206 = tpu.matmul %204, %205, %cst_79 {dimension_numbers = #tpu.dot_dimension_numbers<[1], [0], [0], [1], [0, 0, 1, 1], [], []>} : vector<8x128xbf16>, vector<128x512xbf16>, vector<8x512xf32> -> vector<8x512xf32>
    %207 = arith.addf %203, %206 : vector<8x512xf32>
    %208 = arith.addf %207, %10 : vector<8x512xf32>
    %209 = vector.extract_strided_slice %208 {offsets = [0, 0], sizes = [8, 384], strides = [1, 1]} : vector<8x512xf32> to vector<8x384xf32>
    %210 = arith.negf %209 : vector<8x384xf32>
    %211 = math.exp %210 : vector<8x384xf32>
    %cst_80 = arith.constant 1.000000e+00 : f32
    %212 = vector.broadcast %cst_80 : f32 to vector<8x384xf32>
    %213 = arith.addf %212, %211 : vector<8x384xf32>
    %214 = arith.divf %212, %213 : vector<8x384xf32>
    %215 = vector.extract_strided_slice %214 {offsets = [0, 0], sizes = [8, 128], strides = [1, 1]} : vector<8x384xf32> to vector<8x128xf32>
    %216 = vector.extract_strided_slice %214 {offsets = [0, 128], sizes = [8, 128], strides = [1, 1]} : vector<8x384xf32> to vector<8x128xf32>
    %217 = vector.extract_strided_slice %214 {offsets = [0, 256], sizes = [8, 128], strides = [1, 1]} : vector<8x384xf32> to vector<8x128xf32>
    %218 = vector.extract_strided_slice %208 {offsets = [0, 384], sizes = [8, 128], strides = [1, 1]} : vector<8x512xf32> to vector<8x128xf32>
    %219 = math.tanh %218 : vector<8x128xf32>
    %220 = arith.mulf %216, %176 : vector<8x128xf32>
    %221 = arith.mulf %215, %219 : vector<8x128xf32>
    %222 = arith.addf %220, %221 : vector<8x128xf32>
    %223 = math.tanh %222 : vector<8x128xf32>
    %224 = arith.mulf %217, %223 : vector<8x128xf32>
    %c5 = arith.constant 5 : index
    %c0_81 = arith.constant 0 : index
    %c0_82 = arith.constant 0 : index
    %225 = vector.load %arg14[%c5, %c0_81, %c0_82] : memref<8x8x512xf32, #tpu.memory_space<vmem>>, vector<1x8x512xf32>
    %226 = vector.shape_cast %225 : vector<1x8x512xf32> to vector<8x512xf32>
    %227 = arith.truncf %200 : vector<8x128xf32> to vector<8x128xbf16>
    %c0_83 = arith.constant 0 : index
    %c0_84 = arith.constant 0 : index
    %228 = vector.load %arg2[%c0_83, %c0_84] : memref<128x512xbf16, #tpu.memory_space<vmem>>, vector<128x512xbf16>
    %cst_85 = arith.constant dense<0.000000e+00> : vector<8x512xf32>
    %229 = tpu.matmul %227, %228, %cst_85 {dimension_numbers = #tpu.dot_dimension_numbers<[1], [0], [0], [1], [0, 0, 1, 1], [], []>} : vector<8x128xbf16>, vector<128x512xbf16>, vector<8x512xf32> -> vector<8x512xf32>
    %230 = arith.addf %226, %229 : vector<8x512xf32>
    %231 = vector.extract_strided_slice %230 {offsets = [0, 0], sizes = [8, 384], strides = [1, 1]} : vector<8x512xf32> to vector<8x384xf32>
    %232 = arith.negf %231 : vector<8x384xf32>
    %233 = math.exp %232 : vector<8x384xf32>
    %cst_86 = arith.constant 1.000000e+00 : f32
    %234 = vector.broadcast %cst_86 : f32 to vector<8x384xf32>
    %235 = arith.addf %234, %233 : vector<8x384xf32>
    %236 = arith.divf %234, %235 : vector<8x384xf32>
    %237 = vector.extract_strided_slice %236 {offsets = [0, 0], sizes = [8, 128], strides = [1, 1]} : vector<8x384xf32> to vector<8x128xf32>
    %238 = vector.extract_strided_slice %236 {offsets = [0, 128], sizes = [8, 128], strides = [1, 1]} : vector<8x384xf32> to vector<8x128xf32>
    %239 = vector.extract_strided_slice %236 {offsets = [0, 256], sizes = [8, 128], strides = [1, 1]} : vector<8x384xf32> to vector<8x128xf32>
    %240 = vector.extract_strided_slice %230 {offsets = [0, 384], sizes = [8, 128], strides = [1, 1]} : vector<8x512xf32> to vector<8x128xf32>
    %241 = math.tanh %240 : vector<8x128xf32>
    %242 = arith.mulf %238, %198 : vector<8x128xf32>
    %243 = arith.mulf %237, %241 : vector<8x128xf32>
    %244 = arith.addf %242, %243 : vector<8x128xf32>
    %245 = math.tanh %244 : vector<8x128xf32>
    %246 = arith.mulf %239, %245 : vector<8x128xf32>
    %247 = arith.truncf %200 : vector<8x128xf32> to vector<8x128xbf16>
    %c0_87 = arith.constant 0 : index
    %c0_88 = arith.constant 0 : index
    %248 = vector.load %arg4[%c0_87, %c0_88] : memref<128x512xbf16, #tpu.memory_space<vmem>>, vector<128x512xbf16>
    %cst_89 = arith.constant dense<0.000000e+00> : vector<8x512xf32>
    %249 = tpu.matmul %247, %248, %cst_89 {dimension_numbers = #tpu.dot_dimension_numbers<[1], [0], [0], [1], [0, 0, 1, 1], [], []>} : vector<8x128xbf16>, vector<128x512xbf16>, vector<8x512xf32> -> vector<8x512xf32>
    %250 = arith.truncf %224 : vector<8x128xf32> to vector<8x128xbf16>
    %c0_90 = arith.constant 0 : index
    %c0_91 = arith.constant 0 : index
    %251 = vector.load %arg5[%c0_90, %c0_91] : memref<128x512xbf16, #tpu.memory_space<vmem>>, vector<128x512xbf16>
    %cst_92 = arith.constant dense<0.000000e+00> : vector<8x512xf32>
    %252 = tpu.matmul %250, %251, %cst_92 {dimension_numbers = #tpu.dot_dimension_numbers<[1], [0], [0], [1], [0, 0, 1, 1], [], []>} : vector<8x128xbf16>, vector<128x512xbf16>, vector<8x512xf32> -> vector<8x512xf32>
    %253 = arith.addf %249, %252 : vector<8x512xf32>
    %254 = arith.addf %253, %10 : vector<8x512xf32>
    %255 = vector.extract_strided_slice %254 {offsets = [0, 0], sizes = [8, 384], strides = [1, 1]} : vector<8x512xf32> to vector<8x384xf32>
    %256 = arith.negf %255 : vector<8x384xf32>
    %257 = math.exp %256 : vector<8x384xf32>
    %cst_93 = arith.constant 1.000000e+00 : f32
    %258 = vector.broadcast %cst_93 : f32 to vector<8x384xf32>
    %259 = arith.addf %258, %257 : vector<8x384xf32>
    %260 = arith.divf %258, %259 : vector<8x384xf32>
    %261 = vector.extract_strided_slice %260 {offsets = [0, 0], sizes = [8, 128], strides = [1, 1]} : vector<8x384xf32> to vector<8x128xf32>
    %262 = vector.extract_strided_slice %260 {offsets = [0, 128], sizes = [8, 128], strides = [1, 1]} : vector<8x384xf32> to vector<8x128xf32>
    %263 = vector.extract_strided_slice %260 {offsets = [0, 256], sizes = [8, 128], strides = [1, 1]} : vector<8x384xf32> to vector<8x128xf32>
    %264 = vector.extract_strided_slice %254 {offsets = [0, 384], sizes = [8, 128], strides = [1, 1]} : vector<8x512xf32> to vector<8x128xf32>
    %265 = math.tanh %264 : vector<8x128xf32>
    %266 = arith.mulf %262, %222 : vector<8x128xf32>
    %267 = arith.mulf %261, %265 : vector<8x128xf32>
    %268 = arith.addf %266, %267 : vector<8x128xf32>
    %269 = math.tanh %268 : vector<8x128xf32>
    %270 = arith.mulf %263, %269 : vector<8x128xf32>
    %c6 = arith.constant 6 : index
    %c0_94 = arith.constant 0 : index
    %c0_95 = arith.constant 0 : index
    %271 = vector.load %arg14[%c6, %c0_94, %c0_95] : memref<8x8x512xf32, #tpu.memory_space<vmem>>, vector<1x8x512xf32>
    %272 = vector.shape_cast %271 : vector<1x8x512xf32> to vector<8x512xf32>
    %273 = arith.truncf %246 : vector<8x128xf32> to vector<8x128xbf16>
    %c0_96 = arith.constant 0 : index
    %c0_97 = arith.constant 0 : index
    %274 = vector.load %arg2[%c0_96, %c0_97] : memref<128x512xbf16, #tpu.memory_space<vmem>>, vector<128x512xbf16>
    %cst_98 = arith.constant dense<0.000000e+00> : vector<8x512xf32>
    %275 = tpu.matmul %273, %274, %cst_98 {dimension_numbers = #tpu.dot_dimension_numbers<[1], [0], [0], [1], [0, 0, 1, 1], [], []>} : vector<8x128xbf16>, vector<128x512xbf16>, vector<8x512xf32> -> vector<8x512xf32>
    %276 = arith.addf %272, %275 : vector<8x512xf32>
    %277 = vector.extract_strided_slice %276 {offsets = [0, 0], sizes = [8, 384], strides = [1, 1]} : vector<8x512xf32> to vector<8x384xf32>
    %278 = arith.negf %277 : vector<8x384xf32>
    %279 = math.exp %278 : vector<8x384xf32>
    %cst_99 = arith.constant 1.000000e+00 : f32
    %280 = vector.broadcast %cst_99 : f32 to vector<8x384xf32>
    %281 = arith.addf %280, %279 : vector<8x384xf32>
    %282 = arith.divf %280, %281 : vector<8x384xf32>
    %283 = vector.extract_strided_slice %282 {offsets = [0, 0], sizes = [8, 128], strides = [1, 1]} : vector<8x384xf32> to vector<8x128xf32>
    %284 = vector.extract_strided_slice %282 {offsets = [0, 128], sizes = [8, 128], strides = [1, 1]} : vector<8x384xf32> to vector<8x128xf32>
    %285 = vector.extract_strided_slice %282 {offsets = [0, 256], sizes = [8, 128], strides = [1, 1]} : vector<8x384xf32> to vector<8x128xf32>
    %286 = vector.extract_strided_slice %276 {offsets = [0, 384], sizes = [8, 128], strides = [1, 1]} : vector<8x512xf32> to vector<8x128xf32>
    %287 = math.tanh %286 : vector<8x128xf32>
    %288 = arith.mulf %284, %244 : vector<8x128xf32>
    %289 = arith.mulf %283, %287 : vector<8x128xf32>
    %290 = arith.addf %288, %289 : vector<8x128xf32>
    %291 = math.tanh %290 : vector<8x128xf32>
    %292 = arith.mulf %285, %291 : vector<8x128xf32>
    %293 = arith.truncf %246 : vector<8x128xf32> to vector<8x128xbf16>
    %c0_100 = arith.constant 0 : index
    %c0_101 = arith.constant 0 : index
    %294 = vector.load %arg4[%c0_100, %c0_101] : memref<128x512xbf16, #tpu.memory_space<vmem>>, vector<128x512xbf16>
    %cst_102 = arith.constant dense<0.000000e+00> : vector<8x512xf32>
    %295 = tpu.matmul %293, %294, %cst_102 {dimension_numbers = #tpu.dot_dimension_numbers<[1], [0], [0], [1], [0, 0, 1, 1], [], []>} : vector<8x128xbf16>, vector<128x512xbf16>, vector<8x512xf32> -> vector<8x512xf32>
    %296 = arith.truncf %270 : vector<8x128xf32> to vector<8x128xbf16>
    %c0_103 = arith.constant 0 : index
    %c0_104 = arith.constant 0 : index
    %297 = vector.load %arg5[%c0_103, %c0_104] : memref<128x512xbf16, #tpu.memory_space<vmem>>, vector<128x512xbf16>
    %cst_105 = arith.constant dense<0.000000e+00> : vector<8x512xf32>
    %298 = tpu.matmul %296, %297, %cst_105 {dimension_numbers = #tpu.dot_dimension_numbers<[1], [0], [0], [1], [0, 0, 1, 1], [], []>} : vector<8x128xbf16>, vector<128x512xbf16>, vector<8x512xf32> -> vector<8x512xf32>
    %299 = arith.addf %295, %298 : vector<8x512xf32>
    %300 = arith.addf %299, %10 : vector<8x512xf32>
    %301 = vector.extract_strided_slice %300 {offsets = [0, 0], sizes = [8, 384], strides = [1, 1]} : vector<8x512xf32> to vector<8x384xf32>
    %302 = arith.negf %301 : vector<8x384xf32>
    %303 = math.exp %302 : vector<8x384xf32>
    %cst_106 = arith.constant 1.000000e+00 : f32
    %304 = vector.broadcast %cst_106 : f32 to vector<8x384xf32>
    %305 = arith.addf %304, %303 : vector<8x384xf32>
    %306 = arith.divf %304, %305 : vector<8x384xf32>
    %307 = vector.extract_strided_slice %306 {offsets = [0, 0], sizes = [8, 128], strides = [1, 1]} : vector<8x384xf32> to vector<8x128xf32>
    %308 = vector.extract_strided_slice %306 {offsets = [0, 128], sizes = [8, 128], strides = [1, 1]} : vector<8x384xf32> to vector<8x128xf32>
    %309 = vector.extract_strided_slice %306 {offsets = [0, 256], sizes = [8, 128], strides = [1, 1]} : vector<8x384xf32> to vector<8x128xf32>
    %310 = vector.extract_strided_slice %300 {offsets = [0, 384], sizes = [8, 128], strides = [1, 1]} : vector<8x512xf32> to vector<8x128xf32>
    %311 = math.tanh %310 : vector<8x128xf32>
    %312 = arith.mulf %308, %268 : vector<8x128xf32>
    %313 = arith.mulf %307, %311 : vector<8x128xf32>
    %314 = arith.addf %312, %313 : vector<8x128xf32>
    %315 = math.tanh %314 : vector<8x128xf32>
    %316 = arith.mulf %309, %315 : vector<8x128xf32>
    %c7 = arith.constant 7 : index
    %c0_107 = arith.constant 0 : index
    %c0_108 = arith.constant 0 : index
    %317 = vector.load %arg14[%c7, %c0_107, %c0_108] : memref<8x8x512xf32, #tpu.memory_space<vmem>>, vector<1x8x512xf32>
    %318 = vector.shape_cast %317 : vector<1x8x512xf32> to vector<8x512xf32>
    %319 = arith.truncf %292 : vector<8x128xf32> to vector<8x128xbf16>
    %c0_109 = arith.constant 0 : index
    %c0_110 = arith.constant 0 : index
    %320 = vector.load %arg2[%c0_109, %c0_110] : memref<128x512xbf16, #tpu.memory_space<vmem>>, vector<128x512xbf16>
    %cst_111 = arith.constant dense<0.000000e+00> : vector<8x512xf32>
    %321 = tpu.matmul %319, %320, %cst_111 {dimension_numbers = #tpu.dot_dimension_numbers<[1], [0], [0], [1], [0, 0, 1, 1], [], []>} : vector<8x128xbf16>, vector<128x512xbf16>, vector<8x512xf32> -> vector<8x512xf32>
    %322 = arith.addf %318, %321 : vector<8x512xf32>
    %323 = vector.extract_strided_slice %322 {offsets = [0, 0], sizes = [8, 384], strides = [1, 1]} : vector<8x512xf32> to vector<8x384xf32>
    %324 = arith.negf %323 : vector<8x384xf32>
    %325 = math.exp %324 : vector<8x384xf32>
    %cst_112 = arith.constant 1.000000e+00 : f32
    %326 = vector.broadcast %cst_112 : f32 to vector<8x384xf32>
    %327 = arith.addf %326, %325 : vector<8x384xf32>
    %328 = arith.divf %326, %327 : vector<8x384xf32>
    %329 = vector.extract_strided_slice %328 {offsets = [0, 0], sizes = [8, 128], strides = [1, 1]} : vector<8x384xf32> to vector<8x128xf32>
    %330 = vector.extract_strided_slice %328 {offsets = [0, 128], sizes = [8, 128], strides = [1, 1]} : vector<8x384xf32> to vector<8x128xf32>
    %331 = vector.extract_strided_slice %328 {offsets = [0, 256], sizes = [8, 128], strides = [1, 1]} : vector<8x384xf32> to vector<8x128xf32>
    %332 = vector.extract_strided_slice %322 {offsets = [0, 384], sizes = [8, 128], strides = [1, 1]} : vector<8x512xf32> to vector<8x128xf32>
    %333 = math.tanh %332 : vector<8x128xf32>
    %334 = arith.mulf %330, %290 : vector<8x128xf32>
    %335 = arith.mulf %329, %333 : vector<8x128xf32>
    %336 = arith.addf %334, %335 : vector<8x128xf32>
    %337 = math.tanh %336 : vector<8x128xf32>
    %338 = arith.mulf %331, %337 : vector<8x128xf32>
    %339 = arith.truncf %292 : vector<8x128xf32> to vector<8x128xbf16>
    %c0_113 = arith.constant 0 : index
    %c0_114 = arith.constant 0 : index
    %340 = vector.load %arg4[%c0_113, %c0_114] : memref<128x512xbf16, #tpu.memory_space<vmem>>, vector<128x512xbf16>
    %cst_115 = arith.constant dense<0.000000e+00> : vector<8x512xf32>
    %341 = tpu.matmul %339, %340, %cst_115 {dimension_numbers = #tpu.dot_dimension_numbers<[1], [0], [0], [1], [0, 0, 1, 1], [], []>} : vector<8x128xbf16>, vector<128x512xbf16>, vector<8x512xf32> -> vector<8x512xf32>
    %342 = arith.truncf %316 : vector<8x128xf32> to vector<8x128xbf16>
    %c0_116 = arith.constant 0 : index
    %c0_117 = arith.constant 0 : index
    %343 = vector.load %arg5[%c0_116, %c0_117] : memref<128x512xbf16, #tpu.memory_space<vmem>>, vector<128x512xbf16>
    %cst_118 = arith.constant dense<0.000000e+00> : vector<8x512xf32>
    %344 = tpu.matmul %342, %343, %cst_118 {dimension_numbers = #tpu.dot_dimension_numbers<[1], [0], [0], [1], [0, 0, 1, 1], [], []>} : vector<8x128xbf16>, vector<128x512xbf16>, vector<8x512xf32> -> vector<8x512xf32>
    %345 = arith.addf %341, %344 : vector<8x512xf32>
    %346 = arith.addf %345, %10 : vector<8x512xf32>
    %347 = vector.extract_strided_slice %346 {offsets = [0, 0], sizes = [8, 384], strides = [1, 1]} : vector<8x512xf32> to vector<8x384xf32>
    %348 = arith.negf %347 : vector<8x384xf32>
    %349 = math.exp %348 : vector<8x384xf32>
    %cst_119 = arith.constant 1.000000e+00 : f32
    %350 = vector.broadcast %cst_119 : f32 to vector<8x384xf32>
    %351 = arith.addf %350, %349 : vector<8x384xf32>
    %352 = arith.divf %350, %351 : vector<8x384xf32>
    %353 = vector.extract_strided_slice %352 {offsets = [0, 0], sizes = [8, 128], strides = [1, 1]} : vector<8x384xf32> to vector<8x128xf32>
    %354 = vector.extract_strided_slice %352 {offsets = [0, 128], sizes = [8, 128], strides = [1, 1]} : vector<8x384xf32> to vector<8x128xf32>
    %355 = vector.extract_strided_slice %352 {offsets = [0, 256], sizes = [8, 128], strides = [1, 1]} : vector<8x384xf32> to vector<8x128xf32>
    %356 = vector.extract_strided_slice %346 {offsets = [0, 384], sizes = [8, 128], strides = [1, 1]} : vector<8x512xf32> to vector<8x128xf32>
    %357 = math.tanh %356 : vector<8x128xf32>
    %358 = arith.mulf %354, %314 : vector<8x128xf32>
    %359 = arith.mulf %353, %357 : vector<8x128xf32>
    %360 = arith.addf %358, %359 : vector<8x128xf32>
    %361 = math.tanh %360 : vector<8x128xf32>
    %362 = arith.mulf %355, %361 : vector<8x128xf32>
    %363 = arith.truncf %338 : vector<8x128xf32> to vector<8x128xbf16>
    %c0_120 = arith.constant 0 : index
    %c0_121 = arith.constant 0 : index
    %364 = vector.load %arg4[%c0_120, %c0_121] : memref<128x512xbf16, #tpu.memory_space<vmem>>, vector<128x512xbf16>
    %cst_122 = arith.constant dense<0.000000e+00> : vector<8x512xf32>
    %365 = tpu.matmul %363, %364, %cst_122 {dimension_numbers = #tpu.dot_dimension_numbers<[1], [0], [0], [1], [0, 0, 1, 1], [], []>} : vector<8x128xbf16>, vector<128x512xbf16>, vector<8x512xf32> -> vector<8x512xf32>
    %366 = arith.truncf %362 : vector<8x128xf32> to vector<8x128xbf16>
    %c0_123 = arith.constant 0 : index
    %c0_124 = arith.constant 0 : index
    %367 = vector.load %arg5[%c0_123, %c0_124] : memref<128x512xbf16, #tpu.memory_space<vmem>>, vector<128x512xbf16>
    %cst_125 = arith.constant dense<0.000000e+00> : vector<8x512xf32>
    %368 = tpu.matmul %366, %367, %cst_125 {dimension_numbers = #tpu.dot_dimension_numbers<[1], [0], [0], [1], [0, 0, 1, 1], [], []>} : vector<8x128xbf16>, vector<128x512xbf16>, vector<8x512xf32> -> vector<8x512xf32>
    %369 = arith.addf %365, %368 : vector<8x512xf32>
    %370 = arith.addf %369, %10 : vector<8x512xf32>
    %371 = vector.extract_strided_slice %370 {offsets = [0, 0], sizes = [8, 384], strides = [1, 1]} : vector<8x512xf32> to vector<8x384xf32>
    %372 = arith.negf %371 : vector<8x384xf32>
    %373 = math.exp %372 : vector<8x384xf32>
    %cst_126 = arith.constant 1.000000e+00 : f32
    %374 = vector.broadcast %cst_126 : f32 to vector<8x384xf32>
    %375 = arith.addf %374, %373 : vector<8x384xf32>
    %376 = arith.divf %374, %375 : vector<8x384xf32>
    %377 = vector.extract_strided_slice %376 {offsets = [0, 0], sizes = [8, 128], strides = [1, 1]} : vector<8x384xf32> to vector<8x128xf32>
    %378 = vector.extract_strided_slice %376 {offsets = [0, 128], sizes = [8, 128], strides = [1, 1]} : vector<8x384xf32> to vector<8x128xf32>
    %379 = vector.extract_strided_slice %376 {offsets = [0, 256], sizes = [8, 128], strides = [1, 1]} : vector<8x384xf32> to vector<8x128xf32>
    %380 = vector.extract_strided_slice %370 {offsets = [0, 384], sizes = [8, 128], strides = [1, 1]} : vector<8x512xf32> to vector<8x128xf32>
    %381 = math.tanh %380 : vector<8x128xf32>
    %382 = arith.mulf %378, %360 : vector<8x128xf32>
    %383 = arith.mulf %377, %381 : vector<8x128xf32>
    %384 = arith.addf %382, %383 : vector<8x128xf32>
    %385 = math.tanh %384 : vector<8x128xf32>
    %386 = arith.mulf %379, %385 : vector<8x128xf32>
    %c0_127 = arith.constant 0 : index
    %c0_128 = arith.constant 0 : index
    %c0_129 = arith.constant 0 : index
    %387 = vector.load %arg12[%c0_127, %c0_128, %c0_129] : memref<2x8x128xf32, #tpu.memory_space<vmem>>, vector<1x8x128xf32>
    %388 = vector.shape_cast %387 : vector<1x8x128xf32> to vector<8x128xf32>
    %389 = vector.shape_cast %338 : vector<8x128xf32> to vector<1x8x128xf32>
    tpu.vector_store %arg12[%c0_127, %c0_128, %c0_129], %389 {strides = array<i32>} : memref<2x8x128xf32, #tpu.memory_space<vmem>>, vector<1x8x128xf32>,
    %c1_130 = arith.constant 1 : index
    %c0_131 = arith.constant 0 : index
    %c0_132 = arith.constant 0 : index
    %390 = vector.load %arg12[%c1_130, %c0_131, %c0_132] : memref<2x8x128xf32, #tpu.memory_space<vmem>>, vector<1x8x128xf32>
    %391 = vector.shape_cast %390 : vector<1x8x128xf32> to vector<8x128xf32>
    %392 = vector.shape_cast %386 : vector<8x128xf32> to vector<1x8x128xf32>
    tpu.vector_store %arg12[%c1_130, %c0_131, %c0_132], %392 {strides = array<i32>} : memref<2x8x128xf32, #tpu.memory_space<vmem>>, vector<1x8x128xf32>,
    %c0_133 = arith.constant 0 : index
    %c0_134 = arith.constant 0 : index
    %c0_135 = arith.constant 0 : index
    %393 = vector.load %arg13[%c0_133, %c0_134, %c0_135] : memref<2x8x128xf32, #tpu.memory_space<vmem>>, vector<1x8x128xf32>
    %394 = vector.shape_cast %393 : vector<1x8x128xf32> to vector<8x128xf32>
    %395 = vector.shape_cast %336 : vector<8x128xf32> to vector<1x8x128xf32>
    tpu.vector_store %arg13[%c0_133, %c0_134, %c0_135], %395 {strides = array<i32>} : memref<2x8x128xf32, #tpu.memory_space<vmem>>, vector<1x8x128xf32>,
    %c1_136 = arith.constant 1 : index
    %c0_137 = arith.constant 0 : index
    %c0_138 = arith.constant 0 : index
    %396 = vector.load %arg13[%c1_136, %c0_137, %c0_138] : memref<2x8x128xf32, #tpu.memory_space<vmem>>, vector<1x8x128xf32>
    %397 = vector.shape_cast %396 : vector<1x8x128xf32> to vector<8x128xf32>
    %398 = vector.shape_cast %384 : vector<8x128xf32> to vector<1x8x128xf32>
    tpu.vector_store %arg13[%c1_136, %c0_137, %c0_138], %398 {strides = array<i32>} : memref<2x8x128xf32, #tpu.memory_space<vmem>>, vector<1x8x128xf32>,
    %399 = arith.truncf %386 : vector<8x128xf32> to vector<8x128xbf16>
    %c0_139 = arith.constant 0 : index
    %c0_140 = arith.constant 0 : index
    %400 = vector.load %arg7[%c0_139, %c0_140] : memref<128x256xbf16, #tpu.memory_space<vmem>>, vector<128x256xbf16>
    %cst_141 = arith.constant dense<0.000000e+00> : vector<8x256xf32>
    %401 = tpu.matmul %399, %400, %cst_141 {dimension_numbers = #tpu.dot_dimension_numbers<[1], [0], [0], [1], [0, 0, 1, 1], [], []>} : vector<8x128xbf16>, vector<128x256xbf16>, vector<8x256xf32> -> vector<8x256xf32>
    %c0_142 = arith.constant 0 : index
    %c0_143 = arith.constant 0 : index
    %402 = vector.load %arg8[%c0_142, %c0_143] : memref<1x256xf32, #tpu.memory_space<vmem>>, vector<1x256xf32>
    %403 = vector.broadcast %402 : vector<1x256xf32> to vector<8x256xf32>
    %404 = arith.addf %401, %403 : vector<8x256xf32>
    %cst_144 = arith.constant dense<0xFF800000> : vector<8xf32>
    %405 = vector.multi_reduction <maximumf>, %404, %cst_144 [1] : vector<8x256xf32> to vector<8xf32>
    %406 = vector.shape_cast %405 : vector<8xf32> to vector<8x1xf32>
    %407 = vector.broadcast %406 : vector<8x1xf32> to vector<8x256xf32>
    %408 = arith.subf %404, %407 : vector<8x256xf32>
    %409 = math.exp %408 : vector<8x256xf32>
    %cst_145 = arith.constant dense<0.000000e+00> : vector<8xf32>
    %410 = vector.multi_reduction <add>, %409, %cst_145 [1] : vector<8x256xf32> to vector<8xf32>
    %411 = vector.shape_cast %410 : vector<8xf32> to vector<8x1xf32>
    %412 = math.log %411 : vector<8x1xf32>
    %413 = vector.broadcast %412 : vector<8x1xf32> to vector<8x256xf32>
    %414 = arith.subf %408, %413 : vector<8x256xf32>
    %c0_146 = arith.constant 0 : index
    %c0_147 = arith.constant 0 : index
    %c0_148 = arith.constant 0 : index
    %415 = vector.load %arg11[%c0_146, %c0_147, %c0_148] : memref<1x8x256xf32, #tpu.memory_space<vmem>>, vector<1x8x256xf32>
    %416 = vector.shape_cast %415 : vector<1x8x256xf32> to vector<8x256xf32>
    %417 = vector.shape_cast %414 : vector<8x256xf32> to vector<1x8x256xf32>
    tpu.vector_store %arg11[%c0_146, %c0_147, %c0_148], %417 {strides = array<i32>} : memref<1x8x256xf32, #tpu.memory_space<vmem>>, vector<1x8x256xf32>,
    return
  }
}

</mosaic_0001>

<llo_original>
// kernel: inference_model_forward.1
$region0: #{inference_model_forward.1}
  #allocation0 [shape = 'u32[]', space=smem, size = 0x4, offset = 0x4, fixed_abs, tag = 'smem constant byte address 0x4 - core index']
  #allocation1 [shape = 'u32[144,128]{1,0:T(1,128)}', space=vmem, size = 0x12000, scoped, tag = 'internal scratch']
  #allocation2 [shape = 'f32[8,8,512]{2,1,0:T(8,128)}', space=vmem, size = 0x20000, scoped, tag = 'scratch operand']
  %s0 = inlined_call_operand.vmem [shape: bf16[64,128], index: 0, kind: input, shape index: {}]
  %s1 = inlined_call_operand.vmem [shape: bf16[128,512], index: 1, kind: input, shape index: {}]
  %s2 = inlined_call_operand.vmem [shape: bf16[128,512], index: 2, kind: input, shape index: {}]
  %s3 = inlined_call_operand.vmem [shape: f32[1,512], index: 3, kind: input, shape index: {}]
  %s4 = inlined_call_operand.vmem [shape: bf16[128,512], index: 4, kind: input, shape index: {}]
  %s5 = inlined_call_operand.vmem [shape: bf16[128,512], index: 5, kind: input, shape index: {}]
  %s6 = inlined_call_operand.vmem [shape: f32[1,512], index: 6, kind: input, shape index: {}]
  %s7 = inlined_call_operand.vmem [shape: bf16[128,256], index: 7, kind: input, shape index: {}]
  %s8 = inlined_call_operand.vmem [shape: f32[1,256], index: 8, kind: input, shape index: {}]
  %s9 = inlined_call_operand.vmem [shape: f32[2,8,128], index: 9, kind: input, shape index: {}, may-alias: {9,10}]
  %s10 = inlined_call_operand.vmem [shape: f32[2,8,128], index: 10, kind: input, shape index: {}, may-alias: {9,10}]
  %s11 = inlined_call_operand.vmem [shape: f32[1,8,256], index: 11, kind: output, shape index: {0}]
  %s12 = inlined_call_operand.vmem [shape: f32[2,8,128], index: 12, kind: output, shape index: {1}]
  %s13 = inlined_call_operand.vmem [shape: f32[2,8,128], index: 13, kind: output, shape index: {2}]
  %14 = xla_tuple %s11, %s12, %s13
  %s15 = sld [smem:[#allocation0]]
  $region70: #{inference_model_forward.1} parent=0
    _
  %s17 = ssub.s32 1, %s15
  %s18 = scalar_select 0, %s17, %s15
  // Predicated region
  $region2: #{inference_model_forward.1} parent=0 // pred_check
    _
  $region3: #{inference_model_forward.1} parent=0 // pred_check_branch
    %20 = sbr.rel (0) target = $region5
  $region4: #{inference_model_forward.1} parent=0 // pred_region
    _
  $region5: #{inference_model_forward.1} parent=0 // pred_fallthru
    _
  // Predicated region
  $region6: #{inference_model_forward.1} parent=0 // pred_check
    _
  $region7: #{inference_model_forward.1} parent=0 // pred_check_branch
    %22 = sbr.rel (0) target = $region9
  $region8: #{inference_model_forward.1} parent=0 // pred_region
    _
  $region9: #{inference_model_forward.1} parent=0 // pred_fallthru
    _
  // Predicated region
  $region10: #{inference_model_forward.1} parent=0 // pred_check
    _
  $region11: #{inference_model_forward.1} parent=0 // pred_check_branch
    %24 = sbr.rel (0) target = $region13
  $region12: #{inference_model_forward.1} parent=0 // pred_region
    _
  $region13: #{inference_model_forward.1} parent=0 // pred_fallthru
    _
  // Predicated region
  $region14: #{inference_model_forward.1} parent=0 // pred_check
    _
  $region15: #{inference_model_forward.1} parent=0 // pred_check_branch
    %26 = sbr.rel (0) target = $region17
  $region16: #{inference_model_forward.1} parent=0 // pred_region
    _
  $region17: #{inference_model_forward.1} parent=0 // pred_fallthru
    _
  // Predicated region
  $region18: #{inference_model_forward.1} parent=0 // pred_check
    _
  $region19: #{inference_model_forward.1} parent=0 // pred_check_branch
    %28 = sbr.rel (0) target = $region21
  $region20: #{inference_model_forward.1} parent=0 // pred_region
    _
  $region21: #{inference_model_forward.1} parent=0 // pred_fallthru
    _
  // Predicated region
  $region22: #{inference_model_forward.1} parent=0 // pred_check
    _
  $region23: #{inference_model_forward.1} parent=0 // pred_check_branch
    %30 = sbr.rel (0) target = $region25
  $region24: #{inference_model_forward.1} parent=0 // pred_region
    _
  $region25: #{inference_model_forward.1} parent=0 // pred_fallthru
    _
  // Predicated region
  $region26: #{inference_model_forward.1} parent=0 // pred_check
    _
  $region27: #{inference_model_forward.1} parent=0 // pred_check_branch
    %32 = sbr.rel (0) target = $region29
  $region28: #{inference_model_forward.1} parent=0 // pred_region
    _
  $region29: #{inference_model_forward.1} parent=0 // pred_fallthru
    _
  // Predicated region
  $region30: #{inference_model_forward.1} parent=0 // pred_check
    _
  $region31: #{inference_model_forward.1} parent=0 // pred_check_branch
    %34 = sbr.rel (0) target = $region33
  $region32: #{inference_model_forward.1} parent=0 // pred_region
    _
  $region33: #{inference_model_forward.1} parent=0 // pred_fallthru
    _
  // Predicated region
  $region34: #{inference_model_forward.1} parent=0 // pred_check
    _
  $region35: #{inference_model_forward.1} parent=0 // pred_check_branch
    %36 = sbr.rel (0) target = $region37
  $region36: #{inference_model_forward.1} parent=0 // pred_region
    _
  $region37: #{inference_model_forward.1} parent=0 // pred_fallthru
    _
  // Predicated region
  $region38: #{inference_model_forward.1} parent=0 // pred_check
    _
  $region39: #{inference_model_forward.1} parent=0 // pred_check_branch
    %38 = sbr.rel (0) target = $region41
  $region40: #{inference_model_forward.1} parent=0 // pred_region
    _
  $region41: #{inference_model_forward.1} parent=0 // pred_fallthru
    _
  // Predicated region
  $region42: #{inference_model_forward.1} parent=0 // pred_check
    _
  $region43: #{inference_model_forward.1} parent=0 // pred_check_branch
    %40 = sbr.rel (0) target = $region45
  $region44: #{inference_model_forward.1} parent=0 // pred_region
    _
  $region45: #{inference_model_forward.1} parent=0 // pred_fallthru
    _
  %v42 = vld [vmem:[%s0] sm:$0xf]
  %v43 = vld [vmem:[%s0 + $0x4] sm:$0xf]
  %v44 = vld [vmem:[%s0 + $0x8] sm:$0xf]
  %v45 = vld [vmem:[%s0 + $0xc] sm:$0xf]
  %v46 = vld [vmem:[%s0 + $0x10] sm:$0xf]
  %v47 = vld [vmem:[%s0 + $0x14] sm:$0xf]
  %v48 = vld [vmem:[%s0 + $0x18] sm:$0xf]
  %v49 = vld [vmem:[%s0 + $0x1c] sm:$0xf]
  %v50 = vld [vmem:[%s1] sm:$0xff]
  %v51 = vld [vmem:[%s1 + $0x8] sm:$0xff]
  %v52 = vld [vmem:[%s1 + $0x10] sm:$0xff]
  %v53 = vld [vmem:[%s1 + $0x18] sm:$0xff]
  %v54 = vld [vmem:[%s1 + $0x20] sm:$0xff]
  %v55 = vld [vmem:[%s1 + $0x28] sm:$0xff]
  %v56 = vld [vmem:[%s1 + $0x30] sm:$0xff]
  %v57 = vld [vmem:[%s1 + $0x38] sm:$0xff]
  %v58 = vld [vmem:[%s1 + $0x40] sm:$0xff]
  %v59 = vld [vmem:[%s1 + $0x48] sm:$0xff]
  %v60 = vld [vmem:[%s1 + $0x50] sm:$0xff]
  %v61 = vld [vmem:[%s1 + $0x58] sm:$0xff]
  %v62 = vld [vmem:[%s1 + $0x60] sm:$0xff]
  %v63 = vld [vmem:[%s1 + $0x68] sm:$0xff]
  %v64 = vld [vmem:[%s1 + $0x70] sm:$0xff]
  %v65 = vld [vmem:[%s1 + $0x78] sm:$0xff]
  %v66 = vld [vmem:[%s1 + $0x80] sm:$0xff]
  %v67 = vld [vmem:[%s1 + $0x88] sm:$0xff]
  %v68 = vld [vmem:[%s1 + $0x90] sm:$0xff]
  %v69 = vld [vmem:[%s1 + $0x98] sm:$0xff]
  %v70 = vld [vmem:[%s1 + $0xa0] sm:$0xff]
  %v71 = vld [vmem:[%s1 + $0xa8] sm:$0xff]
  %v72 = vld [vmem:[%s1 + $0xb0] sm:$0xff]
  %v73 = vld [vmem:[%s1 + $0xb8] sm:$0xff]
  %v74 = vld [vmem:[%s1 + $0xc0] sm:$0xff]
  %v75 = vld [vmem:[%s1 + $0xc8] sm:$0xff]
  %v76 = vld [vmem:[%s1 + $0xd0] sm:$0xff]
  %v77 = vld [vmem:[%s1 + $0xd8] sm:$0xff]
  %v78 = vld [vmem:[%s1 + $0xe0] sm:$0xff]
  %v79 = vld [vmem:[%s1 + $0xe8] sm:$0xff]
  %v80 = vld [vmem:[%s1 + $0xf0] sm:$0xff]
  %v81 = vld [vmem:[%s1 + $0xf8] sm:$0xff]
  %v82 = vld [vmem:[%s3] sm:$0xf]
  %v84 = vlaneseq
  %v85 = vshrl.u32 %v84, 7
  %v86 = vsub.s32 0, %v85
  %v87 = vrot.slane %v82, %v86
  %v88 = vlaneseq
  %v89 = vshrl.u32 %v88, 7
  %v90 = vsub.s32 1, %v89
  %v91 = vrot.slane %v82, %v90
  %v92 = vlaneseq
  %v93 = vshrl.u32 %v92, 7
  %v94 = vsub.s32 2, %v93
  %v95 = vrot.slane %v82, %v94
  %v96 = vlaneseq
  %v97 = vshrl.u32 %v96, 7
  %v98 = vsub.s32 3, %v97
  %v99 = vrot.slane %v82, %v98
  %v112 = vunpack.c.l.b16 %v42
  %v113 = vunpack.c.l.b16 %v43
  %v114 = vunpack.c.l.b16 %v44
  %v115 = vunpack.c.l.b16 %v45
  %v116 = vunpack.c.l.b16 %v46
  %v117 = vunpack.c.l.b16 %v47
  %v118 = vunpack.c.l.b16 %v48
  %v119 = vunpack.c.l.b16 %v49
  %v120 = vpack.c.b16 %v113, %v112
  %v121 = vpack.c.b16 %v115, %v114
  %v122 = vpack.c.b16 %v117, %v116
  %v123 = vpack.c.b16 %v119, %v118
  %v160 = vunpack.c.l.b16 %v50
  %v161 = vunpack.c.h.b16 %v50
  %v162 = vunpack.c.l.b16 %v51
  %v163 = vunpack.c.h.b16 %v51
  %v164 = vunpack.c.l.b16 %v52
  %v165 = vunpack.c.h.b16 %v52
  %v166 = vunpack.c.l.b16 %v53
  %v167 = vunpack.c.h.b16 %v53
  %v168 = vunpack.c.l.b16 %v54
  %v169 = vunpack.c.h.b16 %v54
  %v170 = vunpack.c.l.b16 %v55
  %v171 = vunpack.c.h.b16 %v55
  %v172 = vunpack.c.l.b16 %v56
  %v173 = vunpack.c.h.b16 %v56
  %v174 = vunpack.c.l.b16 %v57
  %v175 = vunpack.c.h.b16 %v57
  %v176 = vunpack.c.l.b16 %v58
  %v177 = vunpack.c.h.b16 %v58
  %v178 = vunpack.c.l.b16 %v59
  %v179 = vunpack.c.h.b16 %v59
  %v180 = vunpack.c.l.b16 %v60
  %v181 = vunpack.c.h.b16 %v60
  %v182 = vunpack.c.l.b16 %v61
  %v183 = vunpack.c.h.b16 %v61
  %v184 = vunpack.c.l.b16 %v62
  %v185 = vunpack.c.h.b16 %v62
  %v186 = vunpack.c.l.b16 %v63
  %v187 = vunpack.c.h.b16 %v63
  %v188 = vunpack.c.l.b16 %v64
  %v189 = vunpack.c.h.b16 %v64
  %v190 = vunpack.c.l.b16 %v65
  %v191 = vunpack.c.h.b16 %v65
  %v192 = vunpack.c.l.b16 %v66
  %v193 = vunpack.c.h.b16 %v66
  %v194 = vunpack.c.l.b16 %v67
  %v195 = vunpack.c.h.b16 %v67
  %v196 = vunpack.c.l.b16 %v68
  %v197 = vunpack.c.h.b16 %v68
  %v198 = vunpack.c.l.b16 %v69
  %v199 = vunpack.c.h.b16 %v69
  %v200 = vunpack.c.l.b16 %v70
  %v201 = vunpack.c.h.b16 %v70
  %v202 = vunpack.c.l.b16 %v71
  %v203 = vunpack.c.h.b16 %v71
  %v204 = vunpack.c.l.b16 %v72
  %v205 = vunpack.c.h.b16 %v72
  %v206 = vunpack.c.l.b16 %v73
  %v207 = vunpack.c.h.b16 %v73
  %v208 = vunpack.c.l.b16 %v74
  %v209 = vunpack.c.h.b16 %v74
  %v210 = vunpack.c.l.b16 %v75
  %v211 = vunpack.c.h.b16 %v75
  %v212 = vunpack.c.l.b16 %v76
  %v213 = vunpack.c.h.b16 %v76
  %v214 = vunpack.c.l.b16 %v77
  %v215 = vunpack.c.h.b16 %v77
  %v216 = vunpack.c.l.b16 %v78
  %v217 = vunpack.c.h.b16 %v78
  %v218 = vunpack.c.l.b16 %v79
  %v219 = vunpack.c.h.b16 %v79
  %v220 = vunpack.c.l.b16 %v80
  %v221 = vunpack.c.h.b16 %v80
  %v222 = vunpack.c.l.b16 %v81
  %v223 = vunpack.c.h.b16 %v81
  %v224 = vpack.c.b16 %v164, %v160
  %v225 = vpack.c.b16 %v165, %v161
  %v226 = vpack.c.b16 %v166, %v162
  %v227 = vpack.c.b16 %v167, %v163
  %v228 = vpack.c.b16 %v172, %v168
  %v229 = vpack.c.b16 %v173, %v169
  %v230 = vpack.c.b16 %v174, %v170
  %v231 = vpack.c.b16 %v175, %v171
  %v232 = vpack.c.b16 %v180, %v176
  %v233 = vpack.c.b16 %v181, %v177
  %v234 = vpack.c.b16 %v182, %v178
  %v235 = vpack.c.b16 %v183, %v179
  %v236 = vpack.c.b16 %v188, %v184
  %v237 = vpack.c.b16 %v189, %v185
  %v238 = vpack.c.b16 %v190, %v186
  %v239 = vpack.c.b16 %v191, %v187
  %v240 = vpack.c.b16 %v196, %v192
  %v241 = vpack.c.b16 %v197, %v193
  %v242 = vpack.c.b16 %v198, %v194
  %v243 = vpack.c.b16 %v199, %v195
  %v244 = vpack.c.b16 %v204, %v200
  %v245 = vpack.c.b16 %v205, %v201
  %v246 = vpack.c.b16 %v206, %v202
  %v247 = vpack.c.b16 %v207, %v203
  %v248 = vpack.c.b16 %v212, %v208
  %v249 = vpack.c.b16 %v213, %v209
  %v250 = vpack.c.b16 %v214, %v210
  %v251 = vpack.c.b16 %v215, %v211
  %v252 = vpack.c.b16 %v220, %v216
  %v253 = vpack.c.b16 %v221, %v217
  %v254 = vpack.c.b16 %v222, %v218
  %v255 = vpack.c.b16 %v223, %v219
  %288 = vmatprep.subr.bf16.mxu0 %v253
  %289 = vmatpush1.bf16.msra.mxu0 %v252
  %290 = vmatprep.subr.bf16.mxu0 %v249
  %291 = vmatpush1.bf16.msra.mxu0 %v248
  %292 = vmatprep.subr.bf16.mxu0 %v245
  %293 = vmatpush1.bf16.msra.mxu0 %v244
  %294 = vmatprep.subr.bf16.mxu0 %v241
  %295 = vmatpush1.bf16.msra.mxu0 %v240
  %296 = vmatprep.subr.bf16.mxu0 %v237
  %297 = vmatpush1.bf16.msra.mxu0 %v236
  %298 = vmatprep.subr.bf16.mxu0 %v233
  %299 = vmatpush1.bf16.msra.mxu0 %v232
  %300 = vmatprep.subr.bf16.mxu0 %v229
  %301 = vmatpush1.bf16.msra.mxu0 %v228
  %302 = vmatprep.subr.bf16.mxu0 %v225
  %303 = vmatpush1.bf16.msra.mxu0 %v224
  %304 = vmatprep.subr.bf16.mxu0 0
  %305 = vmatpush2.bf16.msra.mxu0 0
  %306 = vmatprep.subr.bf16.mxu0 0
  %307 = vmatpush2.bf16.msra.mxu0 0
  %308 = vmatprep.subr.bf16.mxu0 0
  %309 = vmatpush2.bf16.msra.mxu0 0
  %310 = vmatprep.subr.bf16.mxu0 0
  %311 = vmatpush2.bf16.msra.mxu0 0
  %312 = vmatprep.subr.bf16.mxu0 0
  %313 = vmatpush2.bf16.msra.mxu0 0
  %314 = vmatprep.subr.bf16.mxu0 0
  %315 = vmatpush2.bf16.msra.mxu0 0
  %316 = vmatprep.subr.bf16.mxu0 0
  %317 = vmatpush2.bf16.msra.mxu0 0
  %318 = vmatprep.subr.bf16.mxu0 0
  %319 = vmatpush2.bf16.msra.mxu0 0
  %320 = vmatprep.mubr.bf16.mxu0 0
  %321 = vmatmul.mubr.bf16.gmra.mxu0 %v120
  %v322 = vpop.f32.mrf.mxu0
  %v323 = vadd.f32 %v87, %v322
  %v324 = vpop.f32.mrf.mxu0
  %v325 = vadd.f32 %v91, %v324
  %v326 = vpop.f32.mrf.mxu0
  %v327 = vadd.f32 %v87, %v326
  %v328 = vpop.f32.mrf.mxu0
  %v329 = vadd.f32 %v91, %v328
  %330 = vmatprep.mubr.bf16.mxu0 0
  %331 = vmatmul.mubr.bf16.gmra.mxu0 %v121
  %v332 = vpop.f32.mrf.mxu0
  %v333 = vadd.f32 %v87, %v332
  %v334 = vpop.f32.mrf.mxu0
  %v335 = vadd.f32 %v91, %v334
  %v336 = vpop.f32.mrf.mxu0
  %v337 = vadd.f32 %v87, %v336
  %v338 = vpop.f32.mrf.mxu0
  %v339 = vadd.f32 %v91, %v338
  %340 = vmatprep.mubr.bf16.mxu0 0
  %341 = vmatmul.mubr.bf16.gmra.mxu0 %v122
  %v342 = vpop.f32.mrf.mxu0
  %v343 = vadd.f32 %v87, %v342
  %v344 = vpop.f32.mrf.mxu0
  %v345 = vadd.f32 %v91, %v344
  %v346 = vpop.f32.mrf.mxu0
  %v347 = vadd.f32 %v87, %v346
  %v348 = vpop.f32.mrf.mxu0
  %v349 = vadd.f32 %v91, %v348
  %350 = vmatprep.mubr.bf16.mxu0 0
  %351 = vmatmul.mubr.bf16.gmra.mxu0 %v123
  %v352 = vpop.f32.mrf.mxu0
  %v353 = vadd.f32 %v87, %v352
  %v354 = vpop.f32.mrf.mxu0
  %v355 = vadd.f32 %v91, %v354
  %v356 = vpop.f32.mrf.mxu0
  %v357 = vadd.f32 %v87, %v356
  %v358 = vpop.f32.mrf.mxu0
  %v359 = vadd.f32 %v91, %v358
  %360 = vdwg.mxu0
  %361 = vmatprep.subr.bf16.mxu0 %v255
  %362 = vmatpush1.bf16.msra.mxu0 %v254
  %363 = vmatprep.subr.bf16.mxu0 %v251
  %364 = vmatpush1.bf16.msra.mxu0 %v250
  %365 = vmatprep.subr.bf16.mxu0 %v247
  %366 = vmatpush1.bf16.msra.mxu0 %v246
  %367 = vmatprep.subr.bf16.mxu0 %v243
  %368 = vmatpush1.bf16.msra.mxu0 %v242
  %369 = vmatprep.subr.bf16.mxu0 %v239
  %370 = vmatpush1.bf16.msra.mxu0 %v238
  %371 = vmatprep.subr.bf16.mxu0 %v235
  %372 = vmatpush1.bf16.msra.mxu0 %v234
  %373 = vmatprep.subr.bf16.mxu0 %v231
  %374 = vmatpush1.bf16.msra.mxu0 %v230
  %375 = vmatprep.subr.bf16.mxu0 %v227
  %376 = vmatpush1.bf16.msra.mxu0 %v226
  %377 = vmatprep.subr.bf16.mxu0 0
  %378 = vmatpush2.bf16.msra.mxu0 0
  %379 = vmatprep.subr.bf16.mxu0 0
  %380 = vmatpush2.bf16.msra.mxu0 0
  %381 = vmatprep.subr.bf16.mxu0 0
  %382 = vmatpush2.bf16.msra.mxu0 0
  %383 = vmatprep.subr.bf16.mxu0 0
  %384 = vmatpush2.bf16.msra.mxu0 0
  %385 = vmatprep.subr.bf16.mxu0 0
  %386 = vmatpush2.bf16.msra.mxu0 0
  %387 = vmatprep.subr.bf16.mxu0 0
  %388 = vmatpush2.bf16.msra.mxu0 0
  %389 = vmatprep.subr.bf16.mxu0 0
  %390 = vmatpush2.bf16.msra.mxu0 0
  %391 = vmatprep.subr.bf16.mxu0 0
  %392 = vmatpush2.bf16.msra.mxu0 0
  %393 = vmatprep.mubr.bf16.mxu0 0
  %394 = vmatmul.mubr.bf16.gmra.mxu0 %v120
  %v395 = vpop.f32.mrf.mxu0
  %v396 = vadd.f32 %v95, %v395
  %v397 = vpop.f32.mrf.mxu0
  %v398 = vadd.f32 %v99, %v397
  %v399 = vpop.f32.mrf.mxu0
  %v400 = vadd.f32 %v95, %v399
  %v401 = vpop.f32.mrf.mxu0
  %v402 = vadd.f32 %v99, %v401
  %403 = vmatprep.mubr.bf16.mxu0 0
  %404 = vmatmul.mubr.bf16.gmra.mxu0 %v121
  %v405 = vpop.f32.mrf.mxu0
  %v406 = vadd.f32 %v95, %v405
  %v407 = vpop.f32.mrf.mxu0
  %v408 = vadd.f32 %v99, %v407
  %v409 = vpop.f32.mrf.mxu0
  %v410 = vadd.f32 %v95, %v409
  %v411 = vpop.f32.mrf.mxu0
  %v412 = vadd.f32 %v99, %v411
  %413 = vmatprep.mubr.bf16.mxu0 0
  %414 = vmatmul.mubr.bf16.gmra.mxu0 %v122
  %v415 = vpop.f32.mrf.mxu0
  %v416 = vadd.f32 %v95, %v415
  %v417 = vpop.f32.mrf.mxu0
  %v418 = vadd.f32 %v99, %v417
  %v419 = vpop.f32.mrf.mxu0
  %v420 = vadd.f32 %v95, %v419
  %v421 = vpop.f32.mrf.mxu0
  %v422 = vadd.f32 %v99, %v421
  %423 = vmatprep.mubr.bf16.mxu0 0
  %424 = vmatmul.mubr.bf16.gmra.mxu0 %v123
  %v425 = vpop.f32.mrf.mxu0
  %v426 = vadd.f32 %v95, %v425
  %v427 = vpop.f32.mrf.mxu0
  %v428 = vadd.f32 %v99, %v427
  %v429 = vpop.f32.mrf.mxu0
  %v430 = vadd.f32 %v95, %v429
  %v431 = vpop.f32.mrf.mxu0
  %v432 = vadd.f32 %v99, %v431
  %433 = vdwg.mxu0
  %434 = vst [vmem:[#allocation2] sm:$0xff] %v323
  %435 = vst [vmem:[#allocation2 + $0x8] sm:$0xff] %v325
  %436 = vst [vmem:[#allocation2 + $0x10] sm:$0xff] %v396
  %437 = vst [vmem:[#allocation2 + $0x18] sm:$0xff] %v398
  %438 = vst [vmem:[#allocation2 + $0x20] sm:$0xff] %v327
  %439 = vst [vmem:[#allocation2 + $0x28] sm:$0xff] %v329
  %440 = vst [vmem:[#allocation2 + $0x30] sm:$0xff] %v400
  %441 = vst [vmem:[#allocation2 + $0x38] sm:$0xff] %v402
  %442 = vst [vmem:[#allocation2 + $0x40] sm:$0xff] %v333
  %443 = vst [vmem:[#allocation2 + $0x48] sm:$0xff] %v335
  %444 = vst [vmem:[#allocation2 + $0x50] sm:$0xff] %v406
  %445 = vst [vmem:[#allocation2 + $0x58] sm:$0xff] %v408
  %446 = vst [vmem:[#allocation2 + $0x60] sm:$0xff] %v337
  %447 = vst [vmem:[#allocation2 + $0x68] sm:$0xff] %v339
  %448 = vst [vmem:[#allocation2 + $0x70] sm:$0xff] %v410
  %449 = vst [vmem:[#allocation2 + $0x78] sm:$0xff] %v412
  %450 = vst [vmem:[#allocation2 + $0x80] sm:$0xff] %v343
  %451 = vst [vmem:[#allocation2 + $0x88] sm:$0xff] %v345
  %452 = vst [vmem:[#allocation2 + $0x90] sm:$0xff] %v416
  %453 = vst [vmem:[#allocation2 + $0x98] sm:$0xff] %v418
  %454 = vst [vmem:[#allocation2 + $0xa0] sm:$0xff] %v347
  %455 = vst [vmem:[#allocation2 + $0xa8] sm:$0xff] %v349
  %456 = vst [vmem:[#allocation2 + $0xb0] sm:$0xff] %v420
  %457 = vst [vmem:[#allocation2 + $0xb8] sm:$0xff] %v422
  %458 = vst [vmem:[#allocation2 + $0xc0] sm:$0xff] %v353
  %459 = vst [vmem:[#allocation2 + $0xc8] sm:$0xff] %v355
  %460 = vst [vmem:[#allocation2 + $0xd0] sm:$0xff] %v426
  %461 = vst [vmem:[#allocation2 + $0xd8] sm:$0xff] %v428
  %462 = vst [vmem:[#allocation2 + $0xe0] sm:$0xff] %v357
  %463 = vst [vmem:[#allocation2 + $0xe8] sm:$0xff] %v359
  %464 = vst [vmem:[#allocation2 + $0xf0] sm:$0xff] %v430
  %465 = vst [vmem:[#allocation2 + $0xf8] sm:$0xff] %v432
  %v466 = vld [vmem:[%s6] sm:$0xf]
  %v468 = vlaneseq
  %v469 = vshrl.u32 %v468, 7
  %v470 = vsub.s32 0, %v469
  %v471 = vrot.slane %v466, %v470
  %v472 = vlaneseq
  %v473 = vshrl.u32 %v472, 7
  %v474 = vsub.s32 1, %v473
  %v475 = vrot.slane %v466, %v474
  %v476 = vlaneseq
  %v477 = vshrl.u32 %v476, 7
  %v478 = vsub.s32 2, %v477
  %v479 = vrot.slane %v466, %v478
  %v480 = vlaneseq
  %v481 = vshrl.u32 %v480, 7
  %v482 = vsub.s32 3, %v481
  %v483 = vrot.slane %v466, %v482
  %v488 = vld [vmem:[%s9] sm:$0xff]
  %v489 = vld [vmem:[%s10] sm:$0xff]
  %s490 = scalar_lea.vmem %s9, 8
  %v491 = vld [vmem:[%s490] sm:$0xff]
  %s492 = scalar_lea.vmem %s10, 8
  %v493 = vld [vmem:[%s492] sm:$0xff]
  %v494 = vld [vmem:[#allocation2] sm:$0xff]
  %v495 = vld [vmem:[#allocation2 + $0x8] sm:$0xff]
  %v496 = vld [vmem:[#allocation2 + $0x10] sm:$0xff]
  %v497 = vld [vmem:[#allocation2 + $0x18] sm:$0xff]
  %v498 = vpack.c.bf16 %v488, %v488
  %v499 = vld [vmem:[%s2] sm:$0xff]
  %v500 = vld [vmem:[%s2 + $0x8] sm:$0xff]
  %v501 = vld [vmem:[%s2 + $0x10] sm:$0xff]
  %v502 = vld [vmem:[%s2 + $0x18] sm:$0xff]
  %v503 = vld [vmem:[%s2 + $0x20] sm:$0xff]
  %v504 = vld [vmem:[%s2 + $0x28] sm:$0xff]
  %v505 = vld [vmem:[%s2 + $0x30] sm:$0xff]
  %v506 = vld [vmem:[%s2 + $0x38] sm:$0xff]
  %v507 = vld [vmem:[%s2 + $0x40] sm:$0xff]
  %v508 = vld [vmem:[%s2 + $0x48] sm:$0xff]
  %v509 = vld [vmem:[%s2 + $0x50] sm:$0xff]
  %v510 = vld [vmem:[%s2 + $0x58] sm:$0xff]
  %v511 = vld [vmem:[%s2 + $0x60] sm:$0xff]
  %v512 = vld [vmem:[%s2 + $0x68] sm:$0xff]
  %v513 = vld [vmem:[%s2 + $0x70] sm:$0xff]
  %v514 = vld [vmem:[%s2 + $0x78] sm:$0xff]
  %v515 = vld [vmem:[%s2 + $0x80] sm:$0xff]
  %v516 = vld [vmem:[%s2 + $0x88] sm:$0xff]
  %v517 = vld [vmem:[%s2 + $0x90] sm:$0xff]
  %v518 = vld [vmem:[%s2 + $0x98] sm:$0xff]
  %v519 = vld [vmem:[%s2 + $0xa0] sm:$0xff]
  %v520 = vld [vmem:[%s2 + $0xa8] sm:$0xff]
  %v521 = vld [vmem:[%s2 + $0xb0] sm:$0xff]
  %v522 = vld [vmem:[%s2 + $0xb8] sm:$0xff]
  %v523 = vld [vmem:[%s2 + $0xc0] sm:$0xff]
  %v524 = vld [vmem:[%s2 + $0xc8] sm:$0xff]
  %v525 = vld [vmem:[%s2 + $0xd0] sm:$0xff]
  %v526 = vld [vmem:[%s2 + $0xd8] sm:$0xff]
  %v527 = vld [vmem:[%s2 + $0xe0] sm:$0xff]
  %v528 = vld [vmem:[%s2 + $0xe8] sm:$0xff]
  %v529 = vld [vmem:[%s2 + $0xf0] sm:$0xff]
  %v530 = vld [vmem:[%s2 + $0xf8] sm:$0xff]
  %v563 = vunpack.c.l.b16 %v499
  %v564 = vunpack.c.h.b16 %v499
  %v565 = vunpack.c.l.b16 %v500
  %v566 = vunpack.c.h.b16 %v500
  %v567 = vunpack.c.l.b16 %v501
  %v568 = vunpack.c.h.b16 %v501
  %v569 = vunpack.c.l.b16 %v502
  %v570 = vunpack.c.h.b16 %v502
  %v571 = vunpack.c.l.b16 %v503
  %v572 = vunpack.c.h.b16 %v503
  %v573 = vunpack.c.l.b16 %v504
  %v574 = vunpack.c.h.b16 %v504
  %v575 = vunpack.c.l.b16 %v505
  %v576 = vunpack.c.h.b16 %v505
  %v577 = vunpack.c.l.b16 %v506
  %v578 = vunpack.c.h.b16 %v506
  %v579 = vunpack.c.l.b16 %v507
  %v580 = vunpack.c.h.b16 %v507
  %v581 = vunpack.c.l.b16 %v508
  %v582 = vunpack.c.h.b16 %v508
  %v583 = vunpack.c.l.b16 %v509
  %v584 = vunpack.c.h.b16 %v509
  %v585 = vunpack.c.l.b16 %v510
  %v586 = vunpack.c.h.b16 %v510
  %v587 = vunpack.c.l.b16 %v511
  %v588 = vunpack.c.h.b16 %v511
  %v589 = vunpack.c.l.b16 %v512
  %v590 = vunpack.c.h.b16 %v512
  %v591 = vunpack.c.l.b16 %v513
  %v592 = vunpack.c.h.b16 %v513
  %v593 = vunpack.c.l.b16 %v514
  %v594 = vunpack.c.h.b16 %v514
  %v595 = vunpack.c.l.b16 %v515
  %v596 = vunpack.c.h.b16 %v515
  %v597 = vunpack.c.l.b16 %v516
  %v598 = vunpack.c.h.b16 %v516
  %v599 = vunpack.c.l.b16 %v517
  %v600 = vunpack.c.h.b16 %v517
  %v601 = vunpack.c.l.b16 %v518
  %v602 = vunpack.c.h.b16 %v518
  %v603 = vunpack.c.l.b16 %v519
  %v604 = vunpack.c.h.b16 %v519
  %v605 = vunpack.c.l.b16 %v520
  %v606 = vunpack.c.h.b16 %v520
  %v607 = vunpack.c.l.b16 %v521
  %v608 = vunpack.c.h.b16 %v521
  %v609 = vunpack.c.l.b16 %v522
  %v610 = vunpack.c.h.b16 %v522
  %v611 = vunpack.c.l.b16 %v523
  %v612 = vunpack.c.h.b16 %v523
  %v613 = vunpack.c.l.b16 %v524
  %v614 = vunpack.c.h.b16 %v524
  %v615 = vunpack.c.l.b16 %v525
  %v616 = vunpack.c.h.b16 %v525
  %v617 = vunpack.c.l.b16 %v526
  %v618 = vunpack.c.h.b16 %v526
  %v619 = vunpack.c.l.b16 %v527
  %v620 = vunpack.c.h.b16 %v527
  %v621 = vunpack.c.l.b16 %v528
  %v622 = vunpack.c.h.b16 %v528
  %v623 = vunpack.c.l.b16 %v529
  %v624 = vunpack.c.h.b16 %v529
  %v625 = vunpack.c.l.b16 %v530
  %v626 = vunpack.c.h.b16 %v530
  %v627 = vpack.c.b16 %v567, %v563
  %v628 = vpack.c.b16 %v568, %v564
  %v629 = vpack.c.b16 %v569, %v565
  %v630 = vpack.c.b16 %v570, %v566
  %v631 = vpack.c.b16 %v575, %v571
  %v632 = vpack.c.b16 %v576, %v572
  %v633 = vpack.c.b16 %v577, %v573
  %v634 = vpack.c.b16 %v578, %v574
  %v635 = vpack.c.b16 %v583, %v579
  %v636 = vpack.c.b16 %v584, %v580
  %v637 = vpack.c.b16 %v585, %v581
  %v638 = vpack.c.b16 %v586, %v582
  %v639 = vpack.c.b16 %v591, %v587
  %v640 = vpack.c.b16 %v592, %v588
  %v641 = vpack.c.b16 %v593, %v589
  %v642 = vpack.c.b16 %v594, %v590
  %v643 = vpack.c.b16 %v599, %v595
  %v644 = vpack.c.b16 %v600, %v596
  %v645 = vpack.c.b16 %v601, %v597
  %v646 = vpack.c.b16 %v602, %v598
  %v647 = vpack.c.b16 %v607, %v603
  %v648 = vpack.c.b16 %v608, %v604
  %v649 = vpack.c.b16 %v609, %v605
  %v650 = vpack.c.b16 %v610, %v606
  %v651 = vpack.c.b16 %v615, %v611
  %v652 = vpack.c.b16 %v616, %v612
  %v653 = vpack.c.b16 %v617, %v613
  %v654 = vpack.c.b16 %v618, %v614
  %v655 = vpack.c.b16 %v623, %v619
  %v656 = vpack.c.b16 %v624, %v620
  %v657 = vpack.c.b16 %v625, %v621
  %v658 = vpack.c.b16 %v626, %v622
  %691 = vmatprep.subr.bf16.mxu0 %v656
  %692 = vmatpush1.bf16.msra.mxu0 %v655
  %693 = vmatprep.subr.bf16.mxu0 %v652
  %694 = vmatpush1.bf16.msra.mxu0 %v651
  %695 = vmatprep.subr.bf16.mxu0 %v648
  %696 = vmatpush1.bf16.msra.mxu0 %v647
  %697 = vmatprep.subr.bf16.mxu0 %v644
  %698 = vmatpush1.bf16.msra.mxu0 %v643
  %699 = vmatprep.subr.bf16.mxu0 %v640
  %700 = vmatpush1.bf16.msra.mxu0 %v639
  %701 = vmatprep.subr.bf16.mxu0 %v636
  %702 = vmatpush1.bf16.msra.mxu0 %v635
  %703 = vmatprep.subr.bf16.mxu0 %v632
  %704 = vmatpush1.bf16.msra.mxu0 %v631
  %705 = vmatprep.subr.bf16.mxu0 %v628
  %706 = vmatpush1.bf16.msra.mxu0 %v627
  %707 = vmatprep.subr.bf16.mxu0 0
  %708 = vmatpush2.bf16.msra.mxu0 0
  %709 = vmatprep.subr.bf16.mxu0 0
  %710 = vmatpush2.bf16.msra.mxu0 0
  %711 = vmatprep.subr.bf16.mxu0 0
  %712 = vmatpush2.bf16.msra.mxu0 0
  %713 = vmatprep.subr.bf16.mxu0 0
  %714 = vmatpush2.bf16.msra.mxu0 0
  %715 = vmatprep.subr.bf16.mxu0 0
  %716 = vmatpush2.bf16.msra.mxu0 0
  %717 = vmatprep.subr.bf16.mxu0 0
  %718 = vmatpush2.bf16.msra.mxu0 0
  %719 = vmatprep.subr.bf16.mxu0 0
  %720 = vmatpush2.bf16.msra.mxu0 0
  %721 = vmatprep.subr.bf16.mxu0 0
  %722 = vmatpush2.bf16.msra.mxu0 0
  %723 = vmatprep.mubr.bf16.mxu0 0
  %724 = vmatmul.mubr.bf16.gmra.mxu0 %v498
  %v725 = vpop.f32.mrf.mxu0
  %v726 = vadd.f32 0.0, %v725
  %v727 = vpop.f32.mrf.mxu0
  %v728 = vadd.f32 0.0, %v727
  %v729 = vpop.f32.mrf.mxu0
  %v730 = vpop.f32.mrf.mxu0
  %731 = vdwg.mxu0
  %732 = vmatprep.subr.bf16.mxu0 %v658
  %733 = vmatpush1.bf16.msra.mxu0 %v657
  %734 = vmatprep.subr.bf16.mxu0 %v654
  %735 = vmatpush1.bf16.msra.mxu0 %v653
  %736 = vmatprep.subr.bf16.mxu0 %v650
  %737 = vmatpush1.bf16.msra.mxu0 %v649
  %738 = vmatprep.subr.bf16.mxu0 %v646
  %739 = vmatpush1.bf16.msra.mxu0 %v645
  %740 = vmatprep.subr.bf16.mxu0 %v642
  %741 = vmatpush1.bf16.msra.mxu0 %v641
  %742 = vmatprep.subr.bf16.mxu0 %v638
  %743 = vmatpush1.bf16.msra.mxu0 %v637
  %744 = vmatprep.subr.bf16.mxu0 %v634
  %745 = vmatpush1.bf16.msra.mxu0 %v633
  %746 = vmatprep.subr.bf16.mxu0 %v630
  %747 = vmatpush1.bf16.msra.mxu0 %v629
  %748 = vmatprep.subr.bf16.mxu0 0
  %749 = vmatpush2.bf16.msra.mxu0 0
  %750 = vmatprep.subr.bf16.mxu0 0
  %751 = vmatpush2.bf16.msra.mxu0 0
  %752 = vmatprep.subr.bf16.mxu0 0
  %753 = vmatpush2.bf16.msra.mxu0 0
  %754 = vmatprep.subr.bf16.mxu0 0
  %755 = vmatpush2.bf16.msra.mxu0 0
  %756 = vmatprep.subr.bf16.mxu0 0
  %757 = vmatpush2.bf16.msra.mxu0 0
  %758 = vmatprep.subr.bf16.mxu0 0
  %759 = vmatpush2.bf16.msra.mxu0 0
  %760 = vmatprep.subr.bf16.mxu0 0
  %761 = vmatpush2.bf16.msra.mxu0 0
  %762 = vmatprep.subr.bf16.mxu0 0
  %763 = vmatpush2.bf16.msra.mxu0 0
  %764 = vmatprep.mubr.bf16.mxu0 0
  %765 = vmatmul.mubr.bf16.gmra.mxu0 %v498
  %v766 = vpop.f32.mrf.mxu0
  %v767 = vadd.f32 0.0, %v766
  %v768 = vpop.f32.mrf.mxu0
  %v769 = vadd.f32 0.0, %v768
  %v770 = vpop.f32.mrf.mxu0
  %v771 = vpop.f32.mrf.mxu0
  %772 = vdwg.mxu0
  %v773 = vadd.f32 %v494, %v726
  %v774 = vadd.f32 %v495, %v728
  %v775 = vadd.f32 %v496, %v767
  %v776 = vadd.f32 %v497, %v769
  %v777 = vxor.u32 %v773, 2147483648
  %v778 = vxor.u32 %v774, 2147483648
  %v779 = vxor.u32 %v775, 2147483648
  %v780 = vmul.f32 %v777, 1.442695
  %v781 = vpow.pop %v780
  %v782 = vmul.f32 %v778, 1.442695
  %v783 = vpow.pop %v782
  %v784 = vmul.f32 %v779, 1.442695
  %v785 = vpow.pop %v784
  %v786 = vadd.f32 %v781, 1.0
  %v787 = vadd.f32 %v783, 1.0
  %v788 = vadd.f32 %v785, 1.0
  %v789 = vrcp.pop %v786
  %v790 = vmul.f32 1.0, %v789
  %v791 = vrcp.pop %v787
  %v792 = vmul.f32 1.0, %v791
  %v793 = vrcp.pop %v788
  %v794 = vmul.f32 1.0, %v793
  %v795 = vtanh.pop %v776
  %v796 = vmul.f32 %v792, %v489
  %v797 = vmul.f32 %v790, %v795
  %v798 = vadd.f32 %v796, %v797
  %v799 = vtanh.pop %v798
  %v800 = vmul.f32 %v794, %v799
  %s801 = scalar_lea.vmem [#allocation2], 32
  %v802 = vld [vmem:[%s801] sm:$0xff]
  %v803 = vld [vmem:[%s801 + $0x8] sm:$0xff]
  %v804 = vld [vmem:[%s801 + $0x10] sm:$0xff]
  %v805 = vld [vmem:[%s801 + $0x18] sm:$0xff]
  %v806 = vpack.c.bf16 %v800, %v800
  %807 = vmatprep.subr.bf16.mxu0 %v656
  %808 = vmatpush1.bf16.msra.mxu0 %v655
  %809 = vmatprep.subr.bf16.mxu0 %v652
  %810 = vmatpush1.bf16.msra.mxu0 %v651
  %811 = vmatprep.subr.bf16.mxu0 %v648
  %812 = vmatpush1.bf16.msra.mxu0 %v647
  %813 = vmatprep.subr.bf16.mxu0 %v644
  %814 = vmatpush1.bf16.msra.mxu0 %v643
  %815 = vmatprep.subr.bf16.mxu0 %v640
  %816 = vmatpush1.bf16.msra.mxu0 %v639
  %817 = vmatprep.subr.bf16.mxu0 %v636
  %818 = vmatpush1.bf16.msra.mxu0 %v635
  %819 = vmatprep.subr.bf16.mxu0 %v632
  %820 = vmatpush1.bf16.msra.mxu0 %v631
  %821 = vmatprep.subr.bf16.mxu0 %v628
  %822 = vmatpush1.bf16.msra.mxu0 %v627
  %823 = vmatprep.subr.bf16.mxu0 0
  %824 = vmatpush2.bf16.msra.mxu0 0
  %825 = vmatprep.subr.bf16.mxu0 0
  %826 = vmatpush2.bf16.msra.mxu0 0
  %827 = vmatprep.subr.bf16.mxu0 0
  %828 = vmatpush2.bf16.msra.mxu0 0
  %829 = vmatprep.subr.bf16.mxu0 0
  %830 = vmatpush2.bf16.msra.mxu0 0
  %831 = vmatprep.subr.bf16.mxu0 0
  %832 = vmatpush2.bf16.msra.mxu0 0
  %833 = vmatprep.subr.bf16.mxu0 0
  %834 = vmatpush2.bf16.msra.mxu0 0
  %835 = vmatprep.subr.bf16.mxu0 0
  %836 = vmatpush2.bf16.msra.mxu0 0
  %837 = vmatprep.subr.bf16.mxu0 0
  %838 = vmatpush2.bf16.msra.mxu0 0
  %839 = vmatprep.mubr.bf16.mxu0 0
  %840 = vmatmul.mubr.bf16.gmra.mxu0 %v806
  %v841 = vpop.f32.mrf.mxu0
  %v842 = vadd.f32 0.0, %v841
  %v843 = vpop.f32.mrf.mxu0
  %v844 = vadd.f32 0.0, %v843
  %v845 = vpop.f32.mrf.mxu0
  %v846 = vpop.f32.mrf.mxu0
  %847 = vdwg.mxu0
  %848 = vmatprep.subr.bf16.mxu0 %v658
  %849 = vmatpush1.bf16.msra.mxu0 %v657
  %850 = vmatprep.subr.bf16.mxu0 %v654
  %851 = vmatpush1.bf16.msra.mxu0 %v653
  %852 = vmatprep.subr.bf16.mxu0 %v650
  %853 = vmatpush1.bf16.msra.mxu0 %v649
  %854 = vmatprep.subr.bf16.mxu0 %v646
  %855 = vmatpush1.bf16.msra.mxu0 %v645
  %856 = vmatprep.subr.bf16.mxu0 %v642
  %857 = vmatpush1.bf16.msra.mxu0 %v641
  %858 = vmatprep.subr.bf16.mxu0 %v638
  %859 = vmatpush1.bf16.msra.mxu0 %v637
  %860 = vmatprep.subr.bf16.mxu0 %v634
  %861 = vmatpush1.bf16.msra.mxu0 %v633
  %862 = vmatprep.subr.bf16.mxu0 %v630
  %863 = vmatpush1.bf16.msra.mxu0 %v629
  %864 = vmatprep.subr.bf16.mxu0 0
  %865 = vmatpush2.bf16.msra.mxu0 0
  %866 = vmatprep.subr.bf16.mxu0 0
  %867 = vmatpush2.bf16.msra.mxu0 0
  %868 = vmatprep.subr.bf16.mxu0 0
  %869 = vmatpush2.bf16.msra.mxu0 0
  %870 = vmatprep.subr.bf16.mxu0 0
  %871 = vmatpush2.bf16.msra.mxu0 0
  %872 = vmatprep.subr.bf16.mxu0 0
  %873 = vmatpush2.bf16.msra.mxu0 0
  %874 = vmatprep.subr.bf16.mxu0 0
  %875 = vmatpush2.bf16.msra.mxu0 0
  %876 = vmatprep.subr.bf16.mxu0 0
  %877 = vmatpush2.bf16.msra.mxu0 0
  %878 = vmatprep.subr.bf16.mxu0 0
  %879 = vmatpush2.bf16.msra.mxu0 0
  %880 = vmatprep.mubr.bf16.mxu0 0
  %881 = vmatmul.mubr.bf16.gmra.mxu0 %v806
  %v882 = vpop.f32.mrf.mxu0
  %v883 = vadd.f32 0.0, %v882
  %v884 = vpop.f32.mrf.mxu0
  %v885 = vadd.f32 0.0, %v884
  %v886 = vpop.f32.mrf.mxu0
  %v887 = vpop.f32.mrf.mxu0
  %888 = vdwg.mxu0
  %v889 = vadd.f32 %v802, %v842
  %v890 = vadd.f32 %v803, %v844
  %v891 = vadd.f32 %v804, %v883
  %v892 = vadd.f32 %v805, %v885
  %v893 = vxor.u32 %v889, 2147483648
  %v894 = vxor.u32 %v890, 2147483648
  %v895 = vxor.u32 %v891, 2147483648
  %v896 = vmul.f32 %v893, 1.442695
  %v897 = vpow.pop %v896
  %v898 = vmul.f32 %v894, 1.442695
  %v899 = vpow.pop %v898
  %v900 = vmul.f32 %v895, 1.442695
  %v901 = vpow.pop %v900
  %v902 = vadd.f32 %v897, 1.0
  %v903 = vadd.f32 %v899, 1.0
  %v904 = vadd.f32 %v901, 1.0
  %v905 = vrcp.pop %v902
  %v906 = vmul.f32 1.0, %v905
  %v907 = vrcp.pop %v903
  %v908 = vmul.f32 1.0, %v907
  %v909 = vrcp.pop %v904
  %v910 = vmul.f32 1.0, %v909
  %v911 = vtanh.pop %v892
  %v912 = vmul.f32 %v908, %v798
  %v913 = vmul.f32 %v906, %v911
  %v914 = vadd.f32 %v912, %v913
  %v915 = vtanh.pop %v914
  %v916 = vmul.f32 %v910, %v915
  %v917 = vld [vmem:[%s4] sm:$0xff]
  %v918 = vld [vmem:[%s4 + $0x8] sm:$0xff]
  %v919 = vld [vmem:[%s4 + $0x10] sm:$0xff]
  %v920 = vld [vmem:[%s4 + $0x18] sm:$0xff]
  %v921 = vld [vmem:[%s4 + $0x20] sm:$0xff]
  %v922 = vld [vmem:[%s4 + $0x28] sm:$0xff]
  %v923 = vld [vmem:[%s4 + $0x30] sm:$0xff]
  %v924 = vld [vmem:[%s4 + $0x38] sm:$0xff]
  %v925 = vld [vmem:[%s4 + $0x40] sm:$0xff]
  %v926 = vld [vmem:[%s4 + $0x48] sm:$0xff]
  %v927 = vld [vmem:[%s4 + $0x50] sm:$0xff]
  %v928 = vld [vmem:[%s4 + $0x58] sm:$0xff]
  %v929 = vld [vmem:[%s4 + $0x60] sm:$0xff]
  %v930 = vld [vmem:[%s4 + $0x68] sm:$0xff]
  %v931 = vld [vmem:[%s4 + $0x70] sm:$0xff]
  %v932 = vld [vmem:[%s4 + $0x78] sm:$0xff]
  %v933 = vld [vmem:[%s4 + $0x80] sm:$0xff]
  %v934 = vld [vmem:[%s4 + $0x88] sm:$0xff]
  %v935 = vld [vmem:[%s4 + $0x90] sm:$0xff]
  %v936 = vld [vmem:[%s4 + $0x98] sm:$0xff]
  %v937 = vld [vmem:[%s4 + $0xa0] sm:$0xff]
  %v938 = vld [vmem:[%s4 + $0xa8] sm:$0xff]
  %v939 = vld [vmem:[%s4 + $0xb0] sm:$0xff]
  %v940 = vld [vmem:[%s4 + $0xb8] sm:$0xff]
  %v941 = vld [vmem:[%s4 + $0xc0] sm:$0xff]
  %v942 = vld [vmem:[%s4 + $0xc8] sm:$0xff]
  %v943 = vld [vmem:[%s4 + $0xd0] sm:$0xff]
  %v944 = vld [vmem:[%s4 + $0xd8] sm:$0xff]
  %v945 = vld [vmem:[%s4 + $0xe0] sm:$0xff]
  %v946 = vld [vmem:[%s4 + $0xe8] sm:$0xff]
  %v947 = vld [vmem:[%s4 + $0xf0] sm:$0xff]
  %v948 = vld [vmem:[%s4 + $0xf8] sm:$0xff]
  %v949 = vpack.c.bf16 %v491, %v491
  %v950 = vld [vmem:[%s5] sm:$0xff]
  %v951 = vld [vmem:[%s5 + $0x8] sm:$0xff]
  %v952 = vld [vmem:[%s5 + $0x10] sm:$0xff]
  %v953 = vld [vmem:[%s5 + $0x18] sm:$0xff]
  %v954 = vld [vmem:[%s5 + $0x20] sm:$0xff]
  %v955 = vld [vmem:[%s5 + $0x28] sm:$0xff]
  %v956 = vld [vmem:[%s5 + $0x30] sm:$0xff]
  %v957 = vld [vmem:[%s5 + $0x38] sm:$0xff]
  %v958 = vld [vmem:[%s5 + $0x40] sm:$0xff]
  %v959 = vld [vmem:[%s5 + $0x48] sm:$0xff]
  %v960 = vld [vmem:[%s5 + $0x50] sm:$0xff]
  %v961 = vld [vmem:[%s5 + $0x58] sm:$0xff]
  %v962 = vld [vmem:[%s5 + $0x60] sm:$0xff]
  %v963 = vld [vmem:[%s5 + $0x68] sm:$0xff]
  %v964 = vld [vmem:[%s5 + $0x70] sm:$0xff]
  %v965 = vld [vmem:[%s5 + $0x78] sm:$0xff]
  %v966 = vld [vmem:[%s5 + $0x80] sm:$0xff]
  %v967 = vld [vmem:[%s5 + $0x88] sm:$0xff]
  %v968 = vld [vmem:[%s5 + $0x90] sm:$0xff]
  %v969 = vld [vmem:[%s5 + $0x98] sm:$0xff]
  %v970 = vld [vmem:[%s5 + $0xa0] sm:$0xff]
  %v971 = vld [vmem:[%s5 + $0xa8] sm:$0xff]
  %v972 = vld [vmem:[%s5 + $0xb0] sm:$0xff]
  %v973 = vld [vmem:[%s5 + $0xb8] sm:$0xff]
  %v974 = vld [vmem:[%s5 + $0xc0] sm:$0xff]
  %v975 = vld [vmem:[%s5 + $0xc8] sm:$0xff]
  %v976 = vld [vmem:[%s5 + $0xd0] sm:$0xff]
  %v977 = vld [vmem:[%s5 + $0xd8] sm:$0xff]
  %v978 = vld [vmem:[%s5 + $0xe0] sm:$0xff]
  %v979 = vld [vmem:[%s5 + $0xe8] sm:$0xff]
  %v980 = vld [vmem:[%s5 + $0xf0] sm:$0xff]
  %v981 = vld [vmem:[%s5 + $0xf8] sm:$0xff]
  %v1014 = vunpack.c.l.b16 %v950
  %v1015 = vunpack.c.h.b16 %v950
  %v1016 = vunpack.c.l.b16 %v951
  %v1017 = vunpack.c.h.b16 %v951
  %v1018 = vunpack.c.l.b16 %v952
  %v1019 = vunpack.c.h.b16 %v952
  %v1020 = vunpack.c.l.b16 %v953
  %v1021 = vunpack.c.h.b16 %v953
  %v1022 = vunpack.c.l.b16 %v954
  %v1023 = vunpack.c.h.b16 %v954
  %v1024 = vunpack.c.l.b16 %v955
  %v1025 = vunpack.c.h.b16 %v955
  %v1026 = vunpack.c.l.b16 %v956
  %v1027 = vunpack.c.h.b16 %v956
  %v1028 = vunpack.c.l.b16 %v957
  %v1029 = vunpack.c.h.b16 %v957
  %v1030 = vunpack.c.l.b16 %v958
  %v1031 = vunpack.c.h.b16 %v958
  %v1032 = vunpack.c.l.b16 %v959
  %v1033 = vunpack.c.h.b16 %v959
  %v1034 = vunpack.c.l.b16 %v960
  %v1035 = vunpack.c.h.b16 %v960
  %v1036 = vunpack.c.l.b16 %v961
  %v1037 = vunpack.c.h.b16 %v961
  %v1038 = vunpack.c.l.b16 %v962
  %v1039 = vunpack.c.h.b16 %v962
  %v1040 = vunpack.c.l.b16 %v963
  %v1041 = vunpack.c.h.b16 %v963
  %v1042 = vunpack.c.l.b16 %v964
  %v1043 = vunpack.c.h.b16 %v964
  %v1044 = vunpack.c.l.b16 %v965
  %v1045 = vunpack.c.h.b16 %v965
  %v1046 = vunpack.c.l.b16 %v966
  %v1047 = vunpack.c.h.b16 %v966
  %v1048 = vunpack.c.l.b16 %v967
  %v1049 = vunpack.c.h.b16 %v967
  %v1050 = vunpack.c.l.b16 %v968
  %v1051 = vunpack.c.h.b16 %v968
  %v1052 = vunpack.c.l.b16 %v969
  %v1053 = vunpack.c.h.b16 %v969
  %v1054 = vunpack.c.l.b16 %v970
  %v1055 = vunpack.c.h.b16 %v970
  %v1056 = vunpack.c.l.b16 %v971
  %v1057 = vunpack.c.h.b16 %v971
  %v1058 = vunpack.c.l.b16 %v972
  %v1059 = vunpack.c.h.b16 %v972
  %v1060 = vunpack.c.l.b16 %v973
  %v1061 = vunpack.c.h.b16 %v973
  %v1062 = vunpack.c.l.b16 %v974
  %v1063 = vunpack.c.h.b16 %v974
  %v1064 = vunpack.c.l.b16 %v975
  %v1065 = vunpack.c.h.b16 %v975
  %v1066 = vunpack.c.l.b16 %v976
  %v1067 = vunpack.c.h.b16 %v976
  %v1068 = vunpack.c.l.b16 %v977
  %v1069 = vunpack.c.h.b16 %v977
  %v1070 = vunpack.c.l.b16 %v978
  %v1071 = vunpack.c.h.b16 %v978
  %v1072 = vunpack.c.l.b16 %v979
  %v1073 = vunpack.c.h.b16 %v979
  %v1074 = vunpack.c.l.b16 %v980
  %v1075 = vunpack.c.h.b16 %v980
  %v1076 = vunpack.c.l.b16 %v981
  %v1077 = vunpack.c.h.b16 %v981
  %v1078 = vpack.c.b16 %v1018, %v1014
  %v1079 = vpack.c.b16 %v1019, %v1015
  %v1080 = vpack.c.b16 %v1020, %v1016
  %v1081 = vpack.c.b16 %v1021, %v1017
  %v1082 = vpack.c.b16 %v1026, %v1022
  %v1083 = vpack.c.b16 %v1027, %v1023
  %v1084 = vpack.c.b16 %v1028, %v1024
  %v1085 = vpack.c.b16 %v1029, %v1025
  %v1086 = vpack.c.b16 %v1034, %v1030
  %v1087 = vpack.c.b16 %v1035, %v1031
  %v1088 = vpack.c.b16 %v1036, %v1032
  %v1089 = vpack.c.b16 %v1037, %v1033
  %v1090 = vpack.c.b16 %v1042, %v1038
  %v1091 = vpack.c.b16 %v1043, %v1039
  %v1092 = vpack.c.b16 %v1044, %v1040
  %v1093 = vpack.c.b16 %v1045, %v1041
  %v1094 = vpack.c.b16 %v1050, %v1046
  %v1095 = vpack.c.b16 %v1051, %v1047
  %v1096 = vpack.c.b16 %v1052, %v1048
  %v1097 = vpack.c.b16 %v1053, %v1049
  %v1098 = vpack.c.b16 %v1058, %v1054
  %v1099 = vpack.c.b16 %v1059, %v1055
  %v1100 = vpack.c.b16 %v1060, %v1056
  %v1101 = vpack.c.b16 %v1061, %v1057
  %v1102 = vpack.c.b16 %v1066, %v1062
  %v1103 = vpack.c.b16 %v1067, %v1063
  %v1104 = vpack.c.b16 %v1068, %v1064
  %v1105 = vpack.c.b16 %v1069, %v1065
  %v1106 = vpack.c.b16 %v1074, %v1070
  %v1107 = vpack.c.b16 %v1075, %v1071
  %v1108 = vpack.c.b16 %v1076, %v1072
  %v1109 = vpack.c.b16 %v1077, %v1073
  %1142 = vmatprep.subr.bf16.mxu0 %v1107
  %1143 = vmatpush1.bf16.msra.mxu0 %v1106
  %1144 = vmatprep.subr.bf16.mxu0 %v1103
  %1145 = vmatpush1.bf16.msra.mxu0 %v1102
  %1146 = vmatprep.subr.bf16.mxu0 %v1099
  %1147 = vmatpush1.bf16.msra.mxu0 %v1098
  %1148 = vmatprep.subr.bf16.mxu0 %v1095
  %1149 = vmatpush1.bf16.msra.mxu0 %v1094
  %1150 = vmatprep.subr.bf16.mxu0 %v1091
  %1151 = vmatpush1.bf16.msra.mxu0 %v1090
  %1152 = vmatprep.subr.bf16.mxu0 %v1087
  %1153 = vmatpush1.bf16.msra.mxu0 %v1086
  %1154 = vmatprep.subr.bf16.mxu0 %v1083
  %1155 = vmatpush1.bf16.msra.mxu0 %v1082
  %1156 = vmatprep.subr.bf16.mxu0 %v1079
  %1157 = vmatpush1.bf16.msra.mxu0 %v1078
  %1158 = vmatprep.subr.bf16.mxu0 0
  %1159 = vmatpush2.bf16.msra.mxu0 0
  %1160 = vmatprep.subr.bf16.mxu0 0
  %1161 = vmatpush2.bf16.msra.mxu0 0
  %1162 = vmatprep.subr.bf16.mxu0 0
  %1163 = vmatpush2.bf16.msra.mxu0 0
  %1164 = vmatprep.subr.bf16.mxu0 0
  %1165 = vmatpush2.bf16.msra.mxu0 0
  %1166 = vmatprep.subr.bf16.mxu0 0
  %1167 = vmatpush2.bf16.msra.mxu0 0
  %1168 = vmatprep.subr.bf16.mxu0 0
  %1169 = vmatpush2.bf16.msra.mxu0 0
  %1170 = vmatprep.subr.bf16.mxu0 0
  %1171 = vmatpush2.bf16.msra.mxu0 0
  %1172 = vmatprep.subr.bf16.mxu0 0
  %1173 = vmatpush2.bf16.msra.mxu0 0
  %1174 = vmatprep.mubr.bf16.mxu0 0
  %1175 = vmatmul.mubr.bf16.gmra.mxu0 %v949
  %v1176 = vpop.f32.mrf.mxu0
  %v1177 = vadd.f32 0.0, %v1176
  %v1178 = vpop.f32.mrf.mxu0
  %v1179 = vadd.f32 0.0, %v1178
  %v1180 = vpop.f32.mrf.mxu0
  %v1181 = vpop.f32.mrf.mxu0
  %1182 = vdwg.mxu0
  %1183 = vmatprep.subr.bf16.mxu0 %v1109
  %1184 = vmatpush1.bf16.msra.mxu0 %v1108
  %1185 = vmatprep.subr.bf16.mxu0 %v1105
  %1186 = vmatpush1.bf16.msra.mxu0 %v1104
  %1187 = vmatprep.subr.bf16.mxu0 %v1101
  %1188 = vmatpush1.bf16.msra.mxu0 %v1100
  %1189 = vmatprep.subr.bf16.mxu0 %v1097
  %1190 = vmatpush1.bf16.msra.mxu0 %v1096
  %1191 = vmatprep.subr.bf16.mxu0 %v1093
  %1192 = vmatpush1.bf16.msra.mxu0 %v1092
  %1193 = vmatprep.subr.bf16.mxu0 %v1089
  %1194 = vmatpush1.bf16.msra.mxu0 %v1088
  %1195 = vmatprep.subr.bf16.mxu0 %v1085
  %1196 = vmatpush1.bf16.msra.mxu0 %v1084
  %1197 = vmatprep.subr.bf16.mxu0 %v1081
  %1198 = vmatpush1.bf16.msra.mxu0 %v1080
  %1199 = vmatprep.subr.bf16.mxu0 0
  %1200 = vmatpush2.bf16.msra.mxu0 0
  %1201 = vmatprep.subr.bf16.mxu0 0
  %1202 = vmatpush2.bf16.msra.mxu0 0
  %1203 = vmatprep.subr.bf16.mxu0 0
  %1204 = vmatpush2.bf16.msra.mxu0 0
  %1205 = vmatprep.subr.bf16.mxu0 0
  %1206 = vmatpush2.bf16.msra.mxu0 0
  %1207 = vmatprep.subr.bf16.mxu0 0
  %1208 = vmatpush2.bf16.msra.mxu0 0
  %1209 = vmatprep.subr.bf16.mxu0 0
  %1210 = vmatpush2.bf16.msra.mxu0 0
  %1211 = vmatprep.subr.bf16.mxu0 0
  %1212 = vmatpush2.bf16.msra.mxu0 0
  %1213 = vmatprep.subr.bf16.mxu0 0
  %1214 = vmatpush2.bf16.msra.mxu0 0
  %1215 = vmatprep.mubr.bf16.mxu0 0
  %1216 = vmatmul.mubr.bf16.gmra.mxu0 %v949
  %v1217 = vpop.f32.mrf.mxu0
  %v1218 = vadd.f32 0.0, %v1217
  %v1219 = vpop.f32.mrf.mxu0
  %v1220 = vadd.f32 0.0, %v1219
  %v1221 = vpop.f32.mrf.mxu0
  %v1222 = vpop.f32.mrf.mxu0
  %1223 = vdwg.mxu0
  %v1256 = vunpack.c.l.b16 %v917
  %v1257 = vunpack.c.h.b16 %v917
  %v1258 = vunpack.c.l.b16 %v918
  %v1259 = vunpack.c.h.b16 %v918
  %v1260 = vunpack.c.l.b16 %v919
  %v1261 = vunpack.c.h.b16 %v919
  %v1262 = vunpack.c.l.b16 %v920
  %v1263 = vunpack.c.h.b16 %v920
  %v1264 = vunpack.c.l.b16 %v921
  %v1265 = vunpack.c.h.b16 %v921
  %v1266 = vunpack.c.l.b16 %v922
  %v1267 = vunpack.c.h.b16 %v922
  %v1268 = vunpack.c.l.b16 %v923
  %v1269 = vunpack.c.h.b16 %v923
  %v1270 = vunpack.c.l.b16 %v924
  %v1271 = vunpack.c.h.b16 %v924
  %v1272 = vunpack.c.l.b16 %v925
  %v1273 = vunpack.c.h.b16 %v925
  %v1274 = vunpack.c.l.b16 %v926
  %v1275 = vunpack.c.h.b16 %v926
  %v1276 = vunpack.c.l.b16 %v927
  %v1277 = vunpack.c.h.b16 %v927
  %v1278 = vunpack.c.l.b16 %v928
  %v1279 = vunpack.c.h.b16 %v928
  %v1280 = vunpack.c.l.b16 %v929
  %v1281 = vunpack.c.h.b16 %v929
  %v1282 = vunpack.c.l.b16 %v930
  %v1283 = vunpack.c.h.b16 %v930
  %v1284 = vunpack.c.l.b16 %v931
  %v1285 = vunpack.c.h.b16 %v931
  %v1286 = vunpack.c.l.b16 %v932
  %v1287 = vunpack.c.h.b16 %v932
  %v1288 = vunpack.c.l.b16 %v933
  %v1289 = vunpack.c.h.b16 %v933
  %v1290 = vunpack.c.l.b16 %v934
  %v1291 = vunpack.c.h.b16 %v934
  %v1292 = vunpack.c.l.b16 %v935
  %v1293 = vunpack.c.h.b16 %v935
  %v1294 = vunpack.c.l.b16 %v936
  %v1295 = vunpack.c.h.b16 %v936
  %v1296 = vunpack.c.l.b16 %v937
  %v1297 = vunpack.c.h.b16 %v937
  %v1298 = vunpack.c.l.b16 %v938
  %v1299 = vunpack.c.h.b16 %v938
  %v1300 = vunpack.c.l.b16 %v939
  %v1301 = vunpack.c.h.b16 %v939
  %v1302 = vunpack.c.l.b16 %v940
  %v1303 = vunpack.c.h.b16 %v940
  %v1304 = vunpack.c.l.b16 %v941
  %v1305 = vunpack.c.h.b16 %v941
  %v1306 = vunpack.c.l.b16 %v942
  %v1307 = vunpack.c.h.b16 %v942
  %v1308 = vunpack.c.l.b16 %v943
  %v1309 = vunpack.c.h.b16 %v943
  %v1310 = vunpack.c.l.b16 %v944
  %v1311 = vunpack.c.h.b16 %v944
  %v1312 = vunpack.c.l.b16 %v945
  %v1313 = vunpack.c.h.b16 %v945
  %v1314 = vunpack.c.l.b16 %v946
  %v1315 = vunpack.c.h.b16 %v946
  %v1316 = vunpack.c.l.b16 %v947
  %v1317 = vunpack.c.h.b16 %v947
  %v1318 = vunpack.c.l.b16 %v948
  %v1319 = vunpack.c.h.b16 %v948
  %v1320 = vpack.c.b16 %v1260, %v1256
  %v1321 = vpack.c.b16 %v1261, %v1257
  %v1322 = vpack.c.b16 %v1262, %v1258
  %v1323 = vpack.c.b16 %v1263, %v1259
  %v1324 = vpack.c.b16 %v1268, %v1264
  %v1325 = vpack.c.b16 %v1269, %v1265
  %v1326 = vpack.c.b16 %v1270, %v1266
  %v1327 = vpack.c.b16 %v1271, %v1267
  %v1328 = vpack.c.b16 %v1276, %v1272
  %v1329 = vpack.c.b16 %v1277, %v1273
  %v1330 = vpack.c.b16 %v1278, %v1274
  %v1331 = vpack.c.b16 %v1279, %v1275
  %v1332 = vpack.c.b16 %v1284, %v1280
  %v1333 = vpack.c.b16 %v1285, %v1281
  %v1334 = vpack.c.b16 %v1286, %v1282
  %v1335 = vpack.c.b16 %v1287, %v1283
  %v1336 = vpack.c.b16 %v1292, %v1288
  %v1337 = vpack.c.b16 %v1293, %v1289
  %v1338 = vpack.c.b16 %v1294, %v1290
  %v1339 = vpack.c.b16 %v1295, %v1291
  %v1340 = vpack.c.b16 %v1300, %v1296
  %v1341 = vpack.c.b16 %v1301, %v1297
  %v1342 = vpack.c.b16 %v1302, %v1298
  %v1343 = vpack.c.b16 %v1303, %v1299
  %v1344 = vpack.c.b16 %v1308, %v1304
  %v1345 = vpack.c.b16 %v1309, %v1305
  %v1346 = vpack.c.b16 %v1310, %v1306
  %v1347 = vpack.c.b16 %v1311, %v1307
  %v1348 = vpack.c.b16 %v1316, %v1312
  %v1349 = vpack.c.b16 %v1317, %v1313
  %v1350 = vpack.c.b16 %v1318, %v1314
  %v1351 = vpack.c.b16 %v1319, %v1315
  %1384 = vmatprep.subr.bf16.mxu0 %v1349
  %1385 = vmatpush1.bf16.msra.mxu0 %v1348
  %1386 = vmatprep.subr.bf16.mxu0 %v1345
  %1387 = vmatpush1.bf16.msra.mxu0 %v1344
  %1388 = vmatprep.subr.bf16.mxu0 %v1341
  %1389 = vmatpush1.bf16.msra.mxu0 %v1340
  %1390 = vmatprep.subr.bf16.mxu0 %v1337
  %1391 = vmatpush1.bf16.msra.mxu0 %v1336
  %1392 = vmatprep.subr.bf16.mxu0 %v1333
  %1393 = vmatpush1.bf16.msra.mxu0 %v1332
  %1394 = vmatprep.subr.bf16.mxu0 %v1329
  %1395 = vmatpush1.bf16.msra.mxu0 %v1328
  %1396 = vmatprep.subr.bf16.mxu0 %v1325
  %1397 = vmatpush1.bf16.msra.mxu0 %v1324
  %1398 = vmatprep.subr.bf16.mxu0 %v1321
  %1399 = vmatpush1.bf16.msra.mxu0 %v1320
  %1400 = vmatprep.subr.bf16.mxu0 0
  %1401 = vmatpush2.bf16.msra.mxu0 0
  %1402 = vmatprep.subr.bf16.mxu0 0
  %1403 = vmatpush2.bf16.msra.mxu0 0
  %1404 = vmatprep.subr.bf16.mxu0 0
  %1405 = vmatpush2.bf16.msra.mxu0 0
  %1406 = vmatprep.subr.bf16.mxu0 0
  %1407 = vmatpush2.bf16.msra.mxu0 0
  %1408 = vmatprep.subr.bf16.mxu0 0
  %1409 = vmatpush2.bf16.msra.mxu0 0
  %1410 = vmatprep.subr.bf16.mxu0 0
  %1411 = vmatpush2.bf16.msra.mxu0 0
  %1412 = vmatprep.subr.bf16.mxu0 0
  %1413 = vmatpush2.bf16.msra.mxu0 0
  %1414 = vmatprep.subr.bf16.mxu0 0
  %1415 = vmatpush2.bf16.msra.mxu0 0
  %1416 = vmatprep.mubr.bf16.mxu0 0
  %1417 = vmatmul.mubr.bf16.gmra.mxu0 %v806
  %v1418 = vpop.f32.mrf.mxu0
  %v1419 = vadd.f32 %v1177, %v1418
  %v1420 = vpop.f32.mrf.mxu0
  %v1421 = vadd.f32 %v1179, %v1420
  %v1422 = vpop.f32.mrf.mxu0
  %v1423 = vpop.f32.mrf.mxu0
  %1424 = vdwg.mxu0
  %1425 = vmatprep.subr.bf16.mxu0 %v1351
  %1426 = vmatpush1.bf16.msra.mxu0 %v1350
  %1427 = vmatprep.subr.bf16.mxu0 %v1347
  %1428 = vmatpush1.bf16.msra.mxu0 %v1346
  %1429 = vmatprep.subr.bf16.mxu0 %v1343
  %1430 = vmatpush1.bf16.msra.mxu0 %v1342
  %1431 = vmatprep.subr.bf16.mxu0 %v1339
  %1432 = vmatpush1.bf16.msra.mxu0 %v1338
  %1433 = vmatprep.subr.bf16.mxu0 %v1335
  %1434 = vmatpush1.bf16.msra.mxu0 %v1334
  %1435 = vmatprep.subr.bf16.mxu0 %v1331
  %1436 = vmatpush1.bf16.msra.mxu0 %v1330
  %1437 = vmatprep.subr.bf16.mxu0 %v1327
  %1438 = vmatpush1.bf16.msra.mxu0 %v1326
  %1439 = vmatprep.subr.bf16.mxu0 %v1323
  %1440 = vmatpush1.bf16.msra.mxu0 %v1322
  %1441 = vmatprep.subr.bf16.mxu0 0
  %1442 = vmatpush2.bf16.msra.mxu0 0
  %1443 = vmatprep.subr.bf16.mxu0 0
  %1444 = vmatpush2.bf16.msra.mxu0 0
  %1445 = vmatprep.subr.bf16.mxu0 0
  %1446 = vmatpush2.bf16.msra.mxu0 0
  %1447 = vmatprep.subr.bf16.mxu0 0
  %1448 = vmatpush2.bf16.msra.mxu0 0
  %1449 = vmatprep.subr.bf16.mxu0 0
  %1450 = vmatpush2.bf16.msra.mxu0 0
  %1451 = vmatprep.subr.bf16.mxu0 0
  %1452 = vmatpush2.bf16.msra.mxu0 0
  %1453 = vmatprep.subr.bf16.mxu0 0
  %1454 = vmatpush2.bf16.msra.mxu0 0
  %1455 = vmatprep.subr.bf16.mxu0 0
  %1456 = vmatpush2.bf16.msra.mxu0 0
  %1457 = vmatprep.mubr.bf16.mxu0 0
  %1458 = vmatmul.mubr.bf16.gmra.mxu0 %v806
  %v1459 = vpop.f32.mrf.mxu0
  %v1460 = vadd.f32 %v1218, %v1459
  %v1461 = vpop.f32.mrf.mxu0
  %v1462 = vadd.f32 %v1220, %v1461
  %v1463 = vpop.f32.mrf.mxu0
  %v1464 = vpop.f32.mrf.mxu0
  %1465 = vdwg.mxu0
  %v1466 = vadd.f32 %v1419, %v471
  %v1467 = vadd.f32 %v1421, %v475
  %v1468 = vadd.f32 %v1460, %v479
  %v1469 = vadd.f32 %v1462, %v483
  %v1470 = vxor.u32 %v1466, 2147483648
  %v1471 = vxor.u32 %v1467, 2147483648
  %v1472 = vxor.u32 %v1468, 2147483648
  %v1473 = vmul.f32 %v1470, 1.442695
  %v1474 = vpow.pop %v1473
  %v1475 = vmul.f32 %v1471, 1.442695
  %v1476 = vpow.pop %v1475
  %v1477 = vmul.f32 %v1472, 1.442695
  %v1478 = vpow.pop %v1477
  %v1479 = vadd.f32 %v1474, 1.0
  %v1480 = vadd.f32 %v1476, 1.0
  %v1481 = vadd.f32 %v1478, 1.0
  %v1482 = vrcp.pop %v1479
  %v1483 = vmul.f32 1.0, %v1482
  %v1484 = vrcp.pop %v1480
  %v1485 = vmul.f32 1.0, %v1484
  %v1486 = vrcp.pop %v1481
  %v1487 = vmul.f32 1.0, %v1486
  %v1488 = vtanh.pop %v1469
  %v1489 = vmul.f32 %v1485, %v493
  %v1490 = vmul.f32 %v1483, %v1488
  %v1491 = vadd.f32 %v1489, %v1490
  %v1492 = vtanh.pop %v1491
  %v1493 = vmul.f32 %v1487, %v1492
  %s1494 = scalar_lea.vmem [#allocation2], 64
  %v1495 = vld [vmem:[%s1494] sm:$0xff]
  %v1496 = vld [vmem:[%s1494 + $0x8] sm:$0xff]
  %v1497 = vld [vmem:[%s1494 + $0x10] sm:$0xff]
  %v1498 = vld [vmem:[%s1494 + $0x18] sm:$0xff]
  %v1499 = vpack.c.bf16 %v916, %v916
  %1500 = vmatprep.subr.bf16.mxu0 %v656
  %1501 = vmatpush1.bf16.msra.mxu0 %v655
  %1502 = vmatprep.subr.bf16.mxu0 %v652
  %1503 = vmatpush1.bf16.msra.mxu0 %v651
  %1504 = vmatprep.subr.bf16.mxu0 %v648
  %1505 = vmatpush1.bf16.msra.mxu0 %v647
  %1506 = vmatprep.subr.bf16.mxu0 %v644
  %1507 = vmatpush1.bf16.msra.mxu0 %v643
  %1508 = vmatprep.subr.bf16.mxu0 %v640
  %1509 = vmatpush1.bf16.msra.mxu0 %v639
  %1510 = vmatprep.subr.bf16.mxu0 %v636
  %1511 = vmatpush1.bf16.msra.mxu0 %v635
  %1512 = vmatprep.subr.bf16.mxu0 %v632
  %1513 = vmatpush1.bf16.msra.mxu0 %v631
  %1514 = vmatprep.subr.bf16.mxu0 %v628
  %1515 = vmatpush1.bf16.msra.mxu0 %v627
  %1516 = vmatprep.subr.bf16.mxu0 0
  %1517 = vmatpush2.bf16.msra.mxu0 0
  %1518 = vmatprep.subr.bf16.mxu0 0
  %1519 = vmatpush2.bf16.msra.mxu0 0
  %1520 = vmatprep.subr.bf16.mxu0 0
  %1521 = vmatpush2.bf16.msra.mxu0 0
  %1522 = vmatprep.subr.bf16.mxu0 0
  %1523 = vmatpush2.bf16.msra.mxu0 0
  %1524 = vmatprep.subr.bf16.mxu0 0
  %1525 = vmatpush2.bf16.msra.mxu0 0
  %1526 = vmatprep.subr.bf16.mxu0 0
  %1527 = vmatpush2.bf16.msra.mxu0 0
  %1528 = vmatprep.subr.bf16.mxu0 0
  %1529 = vmatpush2.bf16.msra.mxu0 0
  %1530 = vmatprep.subr.bf16.mxu0 0
  %1531 = vmatpush2.bf16.msra.mxu0 0
  %1532 = vmatprep.mubr.bf16.mxu0 0
  %1533 = vmatmul.mubr.bf16.gmra.mxu0 %v1499
  %v1534 = vpop.f32.mrf.mxu0
  %v1535 = vadd.f32 0.0, %v1534
  %v1536 = vpop.f32.mrf.mxu0
  %v1537 = vadd.f32 0.0, %v1536
  %v1538 = vpop.f32.mrf.mxu0
  %v1539 = vpop.f32.mrf.mxu0
  %1540 = vdwg.mxu0
  %1541 = vmatprep.subr.bf16.mxu0 %v658
  %1542 = vmatpush1.bf16.msra.mxu0 %v657
  %1543 = vmatprep.subr.bf16.mxu0 %v654
  %1544 = vmatpush1.bf16.msra.mxu0 %v653
  %1545 = vmatprep.subr.bf16.mxu0 %v650
  %1546 = vmatpush1.bf16.msra.mxu0 %v649
  %1547 = vmatprep.subr.bf16.mxu0 %v646
  %1548 = vmatpush1.bf16.msra.mxu0 %v645
  %1549 = vmatprep.subr.bf16.mxu0 %v642
  %1550 = vmatpush1.bf16.msra.mxu0 %v641
  %1551 = vmatprep.subr.bf16.mxu0 %v638
  %1552 = vmatpush1.bf16.msra.mxu0 %v637
  %1553 = vmatprep.subr.bf16.mxu0 %v634
  %1554 = vmatpush1.bf16.msra.mxu0 %v633
  %1555 = vmatprep.subr.bf16.mxu0 %v630
  %1556 = vmatpush1.bf16.msra.mxu0 %v629
  %1557 = vmatprep.subr.bf16.mxu0 0
  %1558 = vmatpush2.bf16.msra.mxu0 0
  %1559 = vmatprep.subr.bf16.mxu0 0
  %1560 = vmatpush2.bf16.msra.mxu0 0
  %1561 = vmatprep.subr.bf16.mxu0 0
  %1562 = vmatpush2.bf16.msra.mxu0 0
  %1563 = vmatprep.subr.bf16.mxu0 0
  %1564 = vmatpush2.bf16.msra.mxu0 0
  %1565 = vmatprep.subr.bf16.mxu0 0
  %1566 = vmatpush2.bf16.msra.mxu0 0
  %1567 = vmatprep.subr.bf16.mxu0 0
  %1568 = vmatpush2.bf16.msra.mxu0 0
  %1569 = vmatprep.subr.bf16.mxu0 0
  %1570 = vmatpush2.bf16.msra.mxu0 0
  %1571 = vmatprep.subr.bf16.mxu0 0
  %1572 = vmatpush2.bf16.msra.mxu0 0
  %1573 = vmatprep.mubr.bf16.mxu0 0
  %1574 = vmatmul.mubr.bf16.gmra.mxu0 %v1499
  %v1575 = vpop.f32.mrf.mxu0
  %v1576 = vadd.f32 0.0, %v1575
  %v1577 = vpop.f32.mrf.mxu0
  %v1578 = vadd.f32 0.0, %v1577
  %v1579 = vpop.f32.mrf.mxu0
  %v1580 = vpop.f32.mrf.mxu0
  %1581 = vdwg.mxu0
  %v1582 = vadd.f32 %v1495, %v1535
  %v1583 = vadd.f32 %v1496, %v1537
  %v1584 = vadd.f32 %v1497, %v1576
  %v1585 = vadd.f32 %v1498, %v1578
  %v1586 = vxor.u32 %v1582, 2147483648
  %v1587 = vxor.u32 %v1583, 2147483648
  %v1588 = vxor.u32 %v1584, 2147483648
  %v1589 = vmul.f32 %v1586, 1.442695
  %v1590 = vpow.pop %v1589
  %v1591 = vmul.f32 %v1587, 1.442695
  %v1592 = vpow.pop %v1591
  %v1593 = vmul.f32 %v1588, 1.442695
  %v1594 = vpow.pop %v1593
  %v1595 = vadd.f32 %v1590, 1.0
  %v1596 = vadd.f32 %v1592, 1.0
  %v1597 = vadd.f32 %v1594, 1.0
  %v1598 = vrcp.pop %v1595
  %v1599 = vmul.f32 1.0, %v1598
  %v1600 = vrcp.pop %v1596
  %v1601 = vmul.f32 1.0, %v1600
  %v1602 = vrcp.pop %v1597
  %v1603 = vmul.f32 1.0, %v1602
  %v1604 = vtanh.pop %v1585
  %v1605 = vmul.f32 %v1601, %v914
  %v1606 = vmul.f32 %v1599, %v1604
  %v1607 = vadd.f32 %v1605, %v1606
  %v1608 = vtanh.pop %v1607
  %v1609 = vmul.f32 %v1603, %v1608
  %v1610 = vpack.c.bf16 %v1493, %v1493
  %1611 = vmatprep.subr.bf16.mxu0 %v1107
  %1612 = vmatpush1.bf16.msra.mxu0 %v1106
  %1613 = vmatprep.subr.bf16.mxu0 %v1103
  %1614 = vmatpush1.bf16.msra.mxu0 %v1102
  %1615 = vmatprep.subr.bf16.mxu0 %v1099
  %1616 = vmatpush1.bf16.msra.mxu0 %v1098
  %1617 = vmatprep.subr.bf16.mxu0 %v1095
  %1618 = vmatpush1.bf16.msra.mxu0 %v1094
  %1619 = vmatprep.subr.bf16.mxu0 %v1091
  %1620 = vmatpush1.bf16.msra.mxu0 %v1090
  %1621 = vmatprep.subr.bf16.mxu0 %v1087
  %1622 = vmatpush1.bf16.msra.mxu0 %v1086
  %1623 = vmatprep.subr.bf16.mxu0 %v1083
  %1624 = vmatpush1.bf16.msra.mxu0 %v1082
  %1625 = vmatprep.subr.bf16.mxu0 %v1079
  %1626 = vmatpush1.bf16.msra.mxu0 %v1078
  %1627 = vmatprep.subr.bf16.mxu0 0
  %1628 = vmatpush2.bf16.msra.mxu0 0
  %1629 = vmatprep.subr.bf16.mxu0 0
  %1630 = vmatpush2.bf16.msra.mxu0 0
  %1631 = vmatprep.subr.bf16.mxu0 0
  %1632 = vmatpush2.bf16.msra.mxu0 0
  %1633 = vmatprep.subr.bf16.mxu0 0
  %1634 = vmatpush2.bf16.msra.mxu0 0
  %1635 = vmatprep.subr.bf16.mxu0 0
  %1636 = vmatpush2.bf16.msra.mxu0 0
  %1637 = vmatprep.subr.bf16.mxu0 0
  %1638 = vmatpush2.bf16.msra.mxu0 0
  %1639 = vmatprep.subr.bf16.mxu0 0
  %1640 = vmatpush2.bf16.msra.mxu0 0
  %1641 = vmatprep.subr.bf16.mxu0 0
  %1642 = vmatpush2.bf16.msra.mxu0 0
  %1643 = vmatprep.mubr.bf16.mxu0 0
  %1644 = vmatmul.mubr.bf16.gmra.mxu0 %v1610
  %v1645 = vpop.f32.mrf.mxu0
  %v1646 = vadd.f32 0.0, %v1645
  %v1647 = vpop.f32.mrf.mxu0
  %v1648 = vadd.f32 0.0, %v1647
  %v1649 = vpop.f32.mrf.mxu0
  %v1650 = vpop.f32.mrf.mxu0
  %1651 = vdwg.mxu0
  %1652 = vmatprep.subr.bf16.mxu0 %v1109
  %1653 = vmatpush1.bf16.msra.mxu0 %v1108
  %1654 = vmatprep.subr.bf16.mxu0 %v1105
  %1655 = vmatpush1.bf16.msra.mxu0 %v1104
  %1656 = vmatprep.subr.bf16.mxu0 %v1101
  %1657 = vmatpush1.bf16.msra.mxu0 %v1100
  %1658 = vmatprep.subr.bf16.mxu0 %v1097
  %1659 = vmatpush1.bf16.msra.mxu0 %v1096
  %1660 = vmatprep.subr.bf16.mxu0 %v1093
  %1661 = vmatpush1.bf16.msra.mxu0 %v1092
  %1662 = vmatprep.subr.bf16.mxu0 %v1089
  %1663 = vmatpush1.bf16.msra.mxu0 %v1088
  %1664 = vmatprep.subr.bf16.mxu0 %v1085
  %1665 = vmatpush1.bf16.msra.mxu0 %v1084
  %1666 = vmatprep.subr.bf16.mxu0 %v1081
  %1667 = vmatpush1.bf16.msra.mxu0 %v1080
  %1668 = vmatprep.subr.bf16.mxu0 0
  %1669 = vmatpush2.bf16.msra.mxu0 0
  %1670 = vmatprep.subr.bf16.mxu0 0
  %1671 = vmatpush2.bf16.msra.mxu0 0
  %1672 = vmatprep.subr.bf16.mxu0 0
  %1673 = vmatpush2.bf16.msra.mxu0 0
  %1674 = vmatprep.subr.bf16.mxu0 0
  %1675 = vmatpush2.bf16.msra.mxu0 0
  %1676 = vmatprep.subr.bf16.mxu0 0
  %1677 = vmatpush2.bf16.msra.mxu0 0
  %1678 = vmatprep.subr.bf16.mxu0 0
  %1679 = vmatpush2.bf16.msra.mxu0 0
  %1680 = vmatprep.subr.bf16.mxu0 0
  %1681 = vmatpush2.bf16.msra.mxu0 0
  %1682 = vmatprep.subr.bf16.mxu0 0
  %1683 = vmatpush2.bf16.msra.mxu0 0
  %1684 = vmatprep.mubr.bf16.mxu0 0
  %1685 = vmatmul.mubr.bf16.gmra.mxu0 %v1610
  %v1686 = vpop.f32.mrf.mxu0
  %v1687 = vadd.f32 0.0, %v1686
  %v1688 = vpop.f32.mrf.mxu0
  %v1689 = vadd.f32 0.0, %v1688
  %v1690 = vpop.f32.mrf.mxu0
  %v1691 = vpop.f32.mrf.mxu0
  %1692 = vdwg.mxu0
  %1693 = vmatprep.subr.bf16.mxu0 %v1349
  %1694 = vmatpush1.bf16.msra.mxu0 %v1348
  %1695 = vmatprep.subr.bf16.mxu0 %v1345
  %1696 = vmatpush1.bf16.msra.mxu0 %v1344
  %1697 = vmatprep.subr.bf16.mxu0 %v1341
  %1698 = vmatpush1.bf16.msra.mxu0 %v1340
  %1699 = vmatprep.subr.bf16.mxu0 %v1337
  %1700 = vmatpush1.bf16.msra.mxu0 %v1336
  %1701 = vmatprep.subr.bf16.mxu0 %v1333
  %1702 = vmatpush1.bf16.msra.mxu0 %v1332
  %1703 = vmatprep.subr.bf16.mxu0 %v1329
  %1704 = vmatpush1.bf16.msra.mxu0 %v1328
  %1705 = vmatprep.subr.bf16.mxu0 %v1325
  %1706 = vmatpush1.bf16.msra.mxu0 %v1324
  %1707 = vmatprep.subr.bf16.mxu0 %v1321
  %1708 = vmatpush1.bf16.msra.mxu0 %v1320
  %1709 = vmatprep.subr.bf16.mxu0 0
  %1710 = vmatpush2.bf16.msra.mxu0 0
  %1711 = vmatprep.subr.bf16.mxu0 0
  %1712 = vmatpush2.bf16.msra.mxu0 0
  %1713 = vmatprep.subr.bf16.mxu0 0
  %1714 = vmatpush2.bf16.msra.mxu0 0
  %1715 = vmatprep.subr.bf16.mxu0 0
  %1716 = vmatpush2.bf16.msra.mxu0 0
  %1717 = vmatprep.subr.bf16.mxu0 0
  %1718 = vmatpush2.bf16.msra.mxu0 0
  %1719 = vmatprep.subr.bf16.mxu0 0
  %1720 = vmatpush2.bf16.msra.mxu0 0
  %1721 = vmatprep.subr.bf16.mxu0 0
  %1722 = vmatpush2.bf16.msra.mxu0 0
  %1723 = vmatprep.subr.bf16.mxu0 0
  %1724 = vmatpush2.bf16.msra.mxu0 0
  %1725 = vmatprep.mubr.bf16.mxu0 0
  %1726 = vmatmul.mubr.bf16.gmra.mxu0 %v1499
  %v1727 = vpop.f32.mrf.mxu0
  %v1728 = vadd.f32 %v1646, %v1727
  %v1729 = vpop.f32.mrf.mxu0
  %v1730 = vadd.f32 %v1648, %v1729
  %v1731 = vpop.f32.mrf.mxu0
  %v1732 = vpop.f32.mrf.mxu0
  %1733 = vdwg.mxu0
  %1734 = vmatprep.subr.bf16.mxu0 %v1351
  %1735 = vmatpush1.bf16.msra.mxu0 %v1350
  %1736 = vmatprep.subr.bf16.mxu0 %v1347
  %1737 = vmatpush1.bf16.msra.mxu0 %v1346
  %1738 = vmatprep.subr.bf16.mxu0 %v1343
  %1739 = vmatpush1.bf16.msra.mxu0 %v1342
  %1740 = vmatprep.subr.bf16.mxu0 %v1339
  %1741 = vmatpush1.bf16.msra.mxu0 %v1338
  %1742 = vmatprep.subr.bf16.mxu0 %v1335
  %1743 = vmatpush1.bf16.msra.mxu0 %v1334
  %1744 = vmatprep.subr.bf16.mxu0 %v1331
  %1745 = vmatpush1.bf16.msra.mxu0 %v1330
  %1746 = vmatprep.subr.bf16.mxu0 %v1327
  %1747 = vmatpush1.bf16.msra.mxu0 %v1326
  %1748 = vmatprep.subr.bf16.mxu0 %v1323
  %1749 = vmatpush1.bf16.msra.mxu0 %v1322
  %1750 = vmatprep.subr.bf16.mxu0 0
  %1751 = vmatpush2.bf16.msra.mxu0 0
  %1752 = vmatprep.subr.bf16.mxu0 0
  %1753 = vmatpush2.bf16.msra.mxu0 0
  %1754 = vmatprep.subr.bf16.mxu0 0
  %1755 = vmatpush2.bf16.msra.mxu0 0
  %1756 = vmatprep.subr.bf16.mxu0 0
  %1757 = vmatpush2.bf16.msra.mxu0 0
  %1758 = vmatprep.subr.bf16.mxu0 0
  %1759 = vmatpush2.bf16.msra.mxu0 0
  %1760 = vmatprep.subr.bf16.mxu0 0
  %1761 = vmatpush2.bf16.msra.mxu0 0
  %1762 = vmatprep.subr.bf16.mxu0 0
  %1763 = vmatpush2.bf16.msra.mxu0 0
  %1764 = vmatprep.subr.bf16.mxu0 0
  %1765 = vmatpush2.bf16.msra.mxu0 0
  %1766 = vmatprep.mubr.bf16.mxu0 0
  %1767 = vmatmul.mubr.bf16.gmra.mxu0 %v1499
  %v1768 = vpop.f32.mrf.mxu0
  %v1769 = vadd.f32 %v1687, %v1768
  %v1770 = vpop.f32.mrf.mxu0
  %v1771 = vadd.f32 %v1689, %v1770
  %v1772 = vpop.f32.mrf.mxu0
  %v1773 = vpop.f32.mrf.mxu0
  %1774 = vdwg.mxu0
  %v1775 = vadd.f32 %v1728, %v471
  %v1776 = vadd.f32 %v1730, %v475
  %v1777 = vadd.f32 %v1769, %v479
  %v1778 = vadd.f32 %v1771, %v483
  %v1779 = vxor.u32 %v1775, 2147483648
  %v1780 = vxor.u32 %v1776, 2147483648
  %v1781 = vxor.u32 %v1777, 2147483648
  %v1782 = vmul.f32 %v1779, 1.442695
  %v1783 = vpow.pop %v1782
  %v1784 = vmul.f32 %v1780, 1.442695
  %v1785 = vpow.pop %v1784
  %v1786 = vmul.f32 %v1781, 1.442695
  %v1787 = vpow.pop %v1786
  %v1788 = vadd.f32 %v1783, 1.0
  %v1789 = vadd.f32 %v1785, 1.0
  %v1790 = vadd.f32 %v1787, 1.0
  %v1791 = vrcp.pop %v1788
  %v1792 = vmul.f32 1.0, %v1791
  %v1793 = vrcp.pop %v1789
  %v1794 = vmul.f32 1.0, %v1793
  %v1795 = vrcp.pop %v1790
  %v1796 = vmul.f32 1.0, %v1795
  %v1797 = vtanh.pop %v1778
  %v1798 = vmul.f32 %v1794, %v1491
  %v1799 = vmul.f32 %v1792, %v1797
  %v1800 = vadd.f32 %v1798, %v1799
  %v1801 = vtanh.pop %v1800
  %v1802 = vmul.f32 %v1796, %v1801
  %s1803 = scalar_lea.vmem [#allocation2], 96
  %v1804 = vld [vmem:[%s1803] sm:$0xff]
  %v1805 = vld [vmem:[%s1803 + $0x8] sm:$0xff]
  %v1806 = vld [vmem:[%s1803 + $0x10] sm:$0xff]
  %v1807 = vld [vmem:[%s1803 + $0x18] sm:$0xff]
  %v1808 = vpack.c.bf16 %v1609, %v1609
  %1809 = vmatprep.subr.bf16.mxu0 %v656
  %1810 = vmatpush1.bf16.msra.mxu0 %v655
  %1811 = vmatprep.subr.bf16.mxu0 %v652
  %1812 = vmatpush1.bf16.msra.mxu0 %v651
  %1813 = vmatprep.subr.bf16.mxu0 %v648
  %1814 = vmatpush1.bf16.msra.mxu0 %v647
  %1815 = vmatprep.subr.bf16.mxu0 %v644
  %1816 = vmatpush1.bf16.msra.mxu0 %v643
  %1817 = vmatprep.subr.bf16.mxu0 %v640
  %1818 = vmatpush1.bf16.msra.mxu0 %v639
  %1819 = vmatprep.subr.bf16.mxu0 %v636
  %1820 = vmatpush1.bf16.msra.mxu0 %v635
  %1821 = vmatprep.subr.bf16.mxu0 %v632
  %1822 = vmatpush1.bf16.msra.mxu0 %v631
  %1823 = vmatprep.subr.bf16.mxu0 %v628
  %1824 = vmatpush1.bf16.msra.mxu0 %v627
  %1825 = vmatprep.subr.bf16.mxu0 0
  %1826 = vmatpush2.bf16.msra.mxu0 0
  %1827 = vmatprep.subr.bf16.mxu0 0
  %1828 = vmatpush2.bf16.msra.mxu0 0
  %1829 = vmatprep.subr.bf16.mxu0 0
  %1830 = vmatpush2.bf16.msra.mxu0 0
  %1831 = vmatprep.subr.bf16.mxu0 0
  %1832 = vmatpush2.bf16.msra.mxu0 0
  %1833 = vmatprep.subr.bf16.mxu0 0
  %1834 = vmatpush2.bf16.msra.mxu0 0
  %1835 = vmatprep.subr.bf16.mxu0 0
  %1836 = vmatpush2.bf16.msra.mxu0 0
  %1837 = vmatprep.subr.bf16.mxu0 0
  %1838 = vmatpush2.bf16.msra.mxu0 0
  %1839 = vmatprep.subr.bf16.mxu0 0
  %1840 = vmatpush2.bf16.msra.mxu0 0
  %1841 = vmatprep.mubr.bf16.mxu0 0
  %1842 = vmatmul.mubr.bf16.gmra.mxu0 %v1808
  %v1843 = vpop.f32.mrf.mxu0
  %v1844 = vadd.f32 0.0, %v1843
  %v1845 = vpop.f32.mrf.mxu0
  %v1846 = vadd.f32 0.0, %v1845
  %v1847 = vpop.f32.mrf.mxu0
  %v1848 = vpop.f32.mrf.mxu0
  %1849 = vdwg.mxu0
  %1850 = vmatprep.subr.bf16.mxu0 %v658
  %1851 = vmatpush1.bf16.msra.mxu0 %v657
  %1852 = vmatprep.subr.bf16.mxu0 %v654
  %1853 = vmatpush1.bf16.msra.mxu0 %v653
  %1854 = vmatprep.subr.bf16.mxu0 %v650
  %1855 = vmatpush1.bf16.msra.mxu0 %v649
  %1856 = vmatprep.subr.bf16.mxu0 %v646
  %1857 = vmatpush1.bf16.msra.mxu0 %v645
  %1858 = vmatprep.subr.bf16.mxu0 %v642
  %1859 = vmatpush1.bf16.msra.mxu0 %v641
  %1860 = vmatprep.subr.bf16.mxu0 %v638
  %1861 = vmatpush1.bf16.msra.mxu0 %v637
  %1862 = vmatprep.subr.bf16.mxu0 %v634
  %1863 = vmatpush1.bf16.msra.mxu0 %v633
  %1864 = vmatprep.subr.bf16.mxu0 %v630
  %1865 = vmatpush1.bf16.msra.mxu0 %v629
  %1866 = vmatprep.subr.bf16.mxu0 0
  %1867 = vmatpush2.bf16.msra.mxu0 0
  %1868 = vmatprep.subr.bf16.mxu0 0
  %1869 = vmatpush2.bf16.msra.mxu0 0
  %1870 = vmatprep.subr.bf16.mxu0 0
  %1871 = vmatpush2.bf16.msra.mxu0 0
  %1872 = vmatprep.subr.bf16.mxu0 0
  %1873 = vmatpush2.bf16.msra.mxu0 0
  %1874 = vmatprep.subr.bf16.mxu0 0
  %1875 = vmatpush2.bf16.msra.mxu0 0
  %1876 = vmatprep.subr.bf16.mxu0 0
  %1877 = vmatpush2.bf16.msra.mxu0 0
  %1878 = vmatprep.subr.bf16.mxu0 0
  %1879 = vmatpush2.bf16.msra.mxu0 0
  %1880 = vmatprep.subr.bf16.mxu0 0
  %1881 = vmatpush2.bf16.msra.mxu0 0
  %1882 = vmatprep.mubr.bf16.mxu0 0
  %1883 = vmatmul.mubr.bf16.gmra.mxu0 %v1808
  %v1884 = vpop.f32.mrf.mxu0
  %v1885 = vadd.f32 0.0, %v1884
  %v1886 = vpop.f32.mrf.mxu0
  %v1887 = vadd.f32 0.0, %v1886
  %v1888 = vpop.f32.mrf.mxu0
  %v1889 = vpop.f32.mrf.mxu0
  %1890 = vdwg.mxu0
  %v1891 = vadd.f32 %v1804, %v1844
  %v1892 = vadd.f32 %v1805, %v1846
  %v1893 = vadd.f32 %v1806, %v1885
  %v1894 = vadd.f32 %v1807, %v1887
  %v1895 = vxor.u32 %v1891, 2147483648
  %v1896 = vxor.u32 %v1892, 2147483648
  %v1897 = vxor.u32 %v1893, 2147483648
  %v1898 = vmul.f32 %v1895, 1.442695
  %v1899 = vpow.pop %v1898
  %v1900 = vmul.f32 %v1896, 1.442695
  %v1901 = vpow.pop %v1900
  %v1902 = vmul.f32 %v1897, 1.442695
  %v1903 = vpow.pop %v1902
  %v1904 = vadd.f32 %v1899, 1.0
  %v1905 = vadd.f32 %v1901, 1.0
  %v1906 = vadd.f32 %v1903, 1.0
  %v1907 = vrcp.pop %v1904
  %v1908 = vmul.f32 1.0, %v1907
  %v1909 = vrcp.pop %v1905
  %v1910 = vmul.f32 1.0, %v1909
  %v1911 = vrcp.pop %v1906
  %v1912 = vmul.f32 1.0, %v1911
  %v1913 = vtanh.pop %v1894
  %v1914 = vmul.f32 %v1910, %v1607
  %v1915 = vmul.f32 %v1908, %v1913
  %v1916 = vadd.f32 %v1914, %v1915
  %v1917 = vtanh.pop %v1916
  %v1918 = vmul.f32 %v1912, %v1917
  %v1919 = vpack.c.bf16 %v1802, %v1802
  %1920 = vmatprep.subr.bf16.mxu0 %v1107
  %1921 = vmatpush1.bf16.msra.mxu0 %v1106
  %1922 = vmatprep.subr.bf16.mxu0 %v1103
  %1923 = vmatpush1.bf16.msra.mxu0 %v1102
  %1924 = vmatprep.subr.bf16.mxu0 %v1099
  %1925 = vmatpush1.bf16.msra.mxu0 %v1098
  %1926 = vmatprep.subr.bf16.mxu0 %v1095
  %1927 = vmatpush1.bf16.msra.mxu0 %v1094
  %1928 = vmatprep.subr.bf16.mxu0 %v1091
  %1929 = vmatpush1.bf16.msra.mxu0 %v1090
  %1930 = vmatprep.subr.bf16.mxu0 %v1087
  %1931 = vmatpush1.bf16.msra.mxu0 %v1086
  %1932 = vmatprep.subr.bf16.mxu0 %v1083
  %1933 = vmatpush1.bf16.msra.mxu0 %v1082
  %1934 = vmatprep.subr.bf16.mxu0 %v1079
  %1935 = vmatpush1.bf16.msra.mxu0 %v1078
  %1936 = vmatprep.subr.bf16.mxu0 0
  %1937 = vmatpush2.bf16.msra.mxu0 0
  %1938 = vmatprep.subr.bf16.mxu0 0
  %1939 = vmatpush2.bf16.msra.mxu0 0
  %1940 = vmatprep.subr.bf16.mxu0 0
  %1941 = vmatpush2.bf16.msra.mxu0 0
  %1942 = vmatprep.subr.bf16.mxu0 0
  %1943 = vmatpush2.bf16.msra.mxu0 0
  %1944 = vmatprep.subr.bf16.mxu0 0
  %1945 = vmatpush2.bf16.msra.mxu0 0
  %1946 = vmatprep.subr.bf16.mxu0 0
  %1947 = vmatpush2.bf16.msra.mxu0 0
  %1948 = vmatprep.subr.bf16.mxu0 0
  %1949 = vmatpush2.bf16.msra.mxu0 0
  %1950 = vmatprep.subr.bf16.mxu0 0
  %1951 = vmatpush2.bf16.msra.mxu0 0
  %1952 = vmatprep.mubr.bf16.mxu0 0
  %1953 = vmatmul.mubr.bf16.gmra.mxu0 %v1919
  %v1954 = vpop.f32.mrf.mxu0
  %v1955 = vadd.f32 0.0, %v1954
  %v1956 = vpop.f32.mrf.mxu0
  %v1957 = vadd.f32 0.0, %v1956
  %v1958 = vpop.f32.mrf.mxu0
  %v1959 = vpop.f32.mrf.mxu0
  %1960 = vdwg.mxu0
  %1961 = vmatprep.subr.bf16.mxu0 %v1109
  %1962 = vmatpush1.bf16.msra.mxu0 %v1108
  %1963 = vmatprep.subr.bf16.mxu0 %v1105
  %1964 = vmatpush1.bf16.msra.mxu0 %v1104
  %1965 = vmatprep.subr.bf16.mxu0 %v1101
  %1966 = vmatpush1.bf16.msra.mxu0 %v1100
  %1967 = vmatprep.subr.bf16.mxu0 %v1097
  %1968 = vmatpush1.bf16.msra.mxu0 %v1096
  %1969 = vmatprep.subr.bf16.mxu0 %v1093
  %1970 = vmatpush1.bf16.msra.mxu0 %v1092
  %1971 = vmatprep.subr.bf16.mxu0 %v1089
  %1972 = vmatpush1.bf16.msra.mxu0 %v1088
  %1973 = vmatprep.subr.bf16.mxu0 %v1085
  %1974 = vmatpush1.bf16.msra.mxu0 %v1084
  %1975 = vmatprep.subr.bf16.mxu0 %v1081
  %1976 = vmatpush1.bf16.msra.mxu0 %v1080
  %1977 = vmatprep.subr.bf16.mxu0 0
  %1978 = vmatpush2.bf16.msra.mxu0 0
  %1979 = vmatprep.subr.bf16.mxu0 0
  %1980 = vmatpush2.bf16.msra.mxu0 0
  %1981 = vmatprep.subr.bf16.mxu0 0
  %1982 = vmatpush2.bf16.msra.mxu0 0
  %1983 = vmatprep.subr.bf16.mxu0 0
  %1984 = vmatpush2.bf16.msra.mxu0 0
  %1985 = vmatprep.subr.bf16.mxu0 0
  %1986 = vmatpush2.bf16.msra.mxu0 0
  %1987 = vmatprep.subr.bf16.mxu0 0
  %1988 = vmatpush2.bf16.msra.mxu0 0
  %1989 = vmatprep.subr.bf16.mxu0 0
  %1990 = vmatpush2.bf16.msra.mxu0 0
  %1991 = vmatprep.subr.bf16.mxu0 0
  %1992 = vmatpush2.bf16.msra.mxu0 0
  %1993 = vmatprep.mubr.bf16.mxu0 0
  %1994 = vmatmul.mubr.bf16.gmra.mxu0 %v1919
  %v1995 = vpop.f32.mrf.mxu0
  %v1996 = vadd.f32 0.0, %v1995
  %v1997 = vpop.f32.mrf.mxu0
  %v1998 = vadd.f32 0.0, %v1997
  %v1999 = vpop.f32.mrf.mxu0
  %v2000 = vpop.f32.mrf.mxu0
  %2001 = vdwg.mxu0
  %2002 = vmatprep.subr.bf16.mxu0 %v1349
  %2003 = vmatpush1.bf16.msra.mxu0 %v1348
  %2004 = vmatprep.subr.bf16.mxu0 %v1345
  %2005 = vmatpush1.bf16.msra.mxu0 %v1344
  %2006 = vmatprep.subr.bf16.mxu0 %v1341
  %2007 = vmatpush1.bf16.msra.mxu0 %v1340
  %2008 = vmatprep.subr.bf16.mxu0 %v1337
  %2009 = vmatpush1.bf16.msra.mxu0 %v1336
  %2010 = vmatprep.subr.bf16.mxu0 %v1333
  %2011 = vmatpush1.bf16.msra.mxu0 %v1332
  %2012 = vmatprep.subr.bf16.mxu0 %v1329
  %2013 = vmatpush1.bf16.msra.mxu0 %v1328
  %2014 = vmatprep.subr.bf16.mxu0 %v1325
  %2015 = vmatpush1.bf16.msra.mxu0 %v1324
  %2016 = vmatprep.subr.bf16.mxu0 %v1321
  %2017 = vmatpush1.bf16.msra.mxu0 %v1320
  %2018 = vmatprep.subr.bf16.mxu0 0
  %2019 = vmatpush2.bf16.msra.mxu0 0
  %2020 = vmatprep.subr.bf16.mxu0 0
  %2021 = vmatpush2.bf16.msra.mxu0 0
  %2022 = vmatprep.subr.bf16.mxu0 0
  %2023 = vmatpush2.bf16.msra.mxu0 0
  %2024 = vmatprep.subr.bf16.mxu0 0
  %2025 = vmatpush2.bf16.msra.mxu0 0
  %2026 = vmatprep.subr.bf16.mxu0 0
  %2027 = vmatpush2.bf16.msra.mxu0 0
  %2028 = vmatprep.subr.bf16.mxu0 0
  %2029 = vmatpush2.bf16.msra.mxu0 0
  %2030 = vmatprep.subr.bf16.mxu0 0
  %2031 = vmatpush2.bf16.msra.mxu0 0
  %2032 = vmatprep.subr.bf16.mxu0 0
  %2033 = vmatpush2.bf16.msra.mxu0 0
  %2034 = vmatprep.mubr.bf16.mxu0 0
  %2035 = vmatmul.mubr.bf16.gmra.mxu0 %v1808
  %v2036 = vpop.f32.mrf.mxu0
  %v2037 = vadd.f32 %v1955, %v2036
  %v2038 = vpop.f32.mrf.mxu0
  %v2039 = vadd.f32 %v1957, %v2038
  %v2040 = vpop.f32.mrf.mxu0
  %v2041 = vpop.f32.mrf.mxu0
  %2042 = vdwg.mxu0
  %2043 = vmatprep.subr.bf16.mxu0 %v1351
  %2044 = vmatpush1.bf16.msra.mxu0 %v1350
  %2045 = vmatprep.subr.bf16.mxu0 %v1347
  %2046 = vmatpush1.bf16.msra.mxu0 %v1346
  %2047 = vmatprep.subr.bf16.mxu0 %v1343
  %2048 = vmatpush1.bf16.msra.mxu0 %v1342
  %2049 = vmatprep.subr.bf16.mxu0 %v1339
  %2050 = vmatpush1.bf16.msra.mxu0 %v1338
  %2051 = vmatprep.subr.bf16.mxu0 %v1335
  %2052 = vmatpush1.bf16.msra.mxu0 %v1334
  %2053 = vmatprep.subr.bf16.mxu0 %v1331
  %2054 = vmatpush1.bf16.msra.mxu0 %v1330
  %2055 = vmatprep.subr.bf16.mxu0 %v1327
  %2056 = vmatpush1.bf16.msra.mxu0 %v1326
  %2057 = vmatprep.subr.bf16.mxu0 %v1323
  %2058 = vmatpush1.bf16.msra.mxu0 %v1322
  %2059 = vmatprep.subr.bf16.mxu0 0
  %2060 = vmatpush2.bf16.msra.mxu0 0
  %2061 = vmatprep.subr.bf16.mxu0 0
  %2062 = vmatpush2.bf16.msra.mxu0 0
  %2063 = vmatprep.subr.bf16.mxu0 0
  %2064 = vmatpush2.bf16.msra.mxu0 0
  %2065 = vmatprep.subr.bf16.mxu0 0
  %2066 = vmatpush2.bf16.msra.mxu0 0
  %2067 = vmatprep.subr.bf16.mxu0 0
  %2068 = vmatpush2.bf16.msra.mxu0 0
  %2069 = vmatprep.subr.bf16.mxu0 0
  %2070 = vmatpush2.bf16.msra.mxu0 0
  %2071 = vmatprep.subr.bf16.mxu0 0
  %2072 = vmatpush2.bf16.msra.mxu0 0
  %2073 = vmatprep.subr.bf16.mxu0 0
  %2074 = vmatpush2.bf16.msra.mxu0 0
  %2075 = vmatprep.mubr.bf16.mxu0 0
  %2076 = vmatmul.mubr.bf16.gmra.mxu0 %v1808
  %v2077 = vpop.f32.mrf.mxu0
  %v2078 = vadd.f32 %v1996, %v2077
  %v2079 = vpop.f32.mrf.mxu0
  %v2080 = vadd.f32 %v1998, %v2079
  %v2081 = vpop.f32.mrf.mxu0
  %v2082 = vpop.f32.mrf.mxu0
  %2083 = vdwg.mxu0
  %v2084 = vadd.f32 %v2037, %v471
  %v2085 = vadd.f32 %v2039, %v475
  %v2086 = vadd.f32 %v2078, %v479
  %v2087 = vadd.f32 %v2080, %v483
  %v2088 = vxor.u32 %v2084, 2147483648
  %v2089 = vxor.u32 %v2085, 2147483648
  %v2090 = vxor.u32 %v2086, 2147483648
  %v2091 = vmul.f32 %v2088, 1.442695
  %v2092 = vpow.pop %v2091
  %v2093 = vmul.f32 %v2089, 1.442695
  %v2094 = vpow.pop %v2093
  %v2095 = vmul.f32 %v2090, 1.442695
  %v2096 = vpow.pop %v2095
  %v2097 = vadd.f32 %v2092, 1.0
  %v2098 = vadd.f32 %v2094, 1.0
  %v2099 = vadd.f32 %v2096, 1.0
  %v2100 = vrcp.pop %v2097
  %v2101 = vmul.f32 1.0, %v2100
  %v2102 = vrcp.pop %v2098
  %v2103 = vmul.f32 1.0, %v2102
  %v2104 = vrcp.pop %v2099
  %v2105 = vmul.f32 1.0, %v2104
  %v2106 = vtanh.pop %v2087
  %v2107 = vmul.f32 %v2103, %v1800
  %v2108 = vmul.f32 %v2101, %v2106
  %v2109 = vadd.f32 %v2107, %v2108
  %v2110 = vtanh.pop %v2109
  %v2111 = vmul.f32 %v2105, %v2110
  %s2112 = scalar_lea.vmem [#allocation2], 128
  %v2113 = vld [vmem:[%s2112] sm:$0xff]
  %v2114 = vld [vmem:[%s2112 + $0x8] sm:$0xff]
  %v2115 = vld [vmem:[%s2112 + $0x10] sm:$0xff]
  %v2116 = vld [vmem:[%s2112 + $0x18] sm:$0xff]
  %v2117 = vpack.c.bf16 %v1918, %v1918
  %2118 = vmatprep.subr.bf16.mxu0 %v656
  %2119 = vmatpush1.bf16.msra.mxu0 %v655
  %2120 = vmatprep.subr.bf16.mxu0 %v652
  %2121 = vmatpush1.bf16.msra.mxu0 %v651
  %2122 = vmatprep.subr.bf16.mxu0 %v648
  %2123 = vmatpush1.bf16.msra.mxu0 %v647
  %2124 = vmatprep.subr.bf16.mxu0 %v644
  %2125 = vmatpush1.bf16.msra.mxu0 %v643
  %2126 = vmatprep.subr.bf16.mxu0 %v640
  %2127 = vmatpush1.bf16.msra.mxu0 %v639
  %2128 = vmatprep.subr.bf16.mxu0 %v636
  %2129 = vmatpush1.bf16.msra.mxu0 %v635
  %2130 = vmatprep.subr.bf16.mxu0 %v632
  %2131 = vmatpush1.bf16.msra.mxu0 %v631
  %2132 = vmatprep.subr.bf16.mxu0 %v628
  %2133 = vmatpush1.bf16.msra.mxu0 %v627
  %2134 = vmatprep.subr.bf16.mxu0 0
  %2135 = vmatpush2.bf16.msra.mxu0 0
  %2136 = vmatprep.subr.bf16.mxu0 0
  %2137 = vmatpush2.bf16.msra.mxu0 0
  %2138 = vmatprep.subr.bf16.mxu0 0
  %2139 = vmatpush2.bf16.msra.mxu0 0
  %2140 = vmatprep.subr.bf16.mxu0 0
  %2141 = vmatpush2.bf16.msra.mxu0 0
  %2142 = vmatprep.subr.bf16.mxu0 0
  %2143 = vmatpush2.bf16.msra.mxu0 0
  %2144 = vmatprep.subr.bf16.mxu0 0
  %2145 = vmatpush2.bf16.msra.mxu0 0
  %2146 = vmatprep.subr.bf16.mxu0 0
  %2147 = vmatpush2.bf16.msra.mxu0 0
  %2148 = vmatprep.subr.bf16.mxu0 0
  %2149 = vmatpush2.bf16.msra.mxu0 0
  %2150 = vmatprep.mubr.bf16.mxu0 0
  %2151 = vmatmul.mubr.bf16.gmra.mxu0 %v2117
  %v2152 = vpop.f32.mrf.mxu0
  %v2153 = vadd.f32 0.0, %v2152
  %v2154 = vpop.f32.mrf.mxu0
  %v2155 = vadd.f32 0.0, %v2154
  %v2156 = vpop.f32.mrf.mxu0
  %v2157 = vpop.f32.mrf.mxu0
  %2158 = vdwg.mxu0
  %2159 = vmatprep.subr.bf16.mxu0 %v658
  %2160 = vmatpush1.bf16.msra.mxu0 %v657
  %2161 = vmatprep.subr.bf16.mxu0 %v654
  %2162 = vmatpush1.bf16.msra.mxu0 %v653
  %2163 = vmatprep.subr.bf16.mxu0 %v650
  %2164 = vmatpush1.bf16.msra.mxu0 %v649
  %2165 = vmatprep.subr.bf16.mxu0 %v646
  %2166 = vmatpush1.bf16.msra.mxu0 %v645
  %2167 = vmatprep.subr.bf16.mxu0 %v642
  %2168 = vmatpush1.bf16.msra.mxu0 %v641
  %2169 = vmatprep.subr.bf16.mxu0 %v638
  %2170 = vmatpush1.bf16.msra.mxu0 %v637
  %2171 = vmatprep.subr.bf16.mxu0 %v634
  %2172 = vmatpush1.bf16.msra.mxu0 %v633
  %2173 = vmatprep.subr.bf16.mxu0 %v630
  %2174 = vmatpush1.bf16.msra.mxu0 %v629
  %2175 = vmatprep.subr.bf16.mxu0 0
  %2176 = vmatpush2.bf16.msra.mxu0 0
  %2177 = vmatprep.subr.bf16.mxu0 0
  %2178 = vmatpush2.bf16.msra.mxu0 0
  %2179 = vmatprep.subr.bf16.mxu0 0
  %2180 = vmatpush2.bf16.msra.mxu0 0
  %2181 = vmatprep.subr.bf16.mxu0 0
  %2182 = vmatpush2.bf16.msra.mxu0 0
  %2183 = vmatprep.subr.bf16.mxu0 0
  %2184 = vmatpush2.bf16.msra.mxu0 0
  %2185 = vmatprep.subr.bf16.mxu0 0
  %2186 = vmatpush2.bf16.msra.mxu0 0
  %2187 = vmatprep.subr.bf16.mxu0 0
  %2188 = vmatpush2.bf16.msra.mxu0 0
  %2189 = vmatprep.subr.bf16.mxu0 0
  %2190 = vmatpush2.bf16.msra.mxu0 0
  %2191 = vmatprep.mubr.bf16.mxu0 0
  %2192 = vmatmul.mubr.bf16.gmra.mxu0 %v2117
  %v2193 = vpop.f32.mrf.mxu0
  %v2194 = vadd.f32 0.0, %v2193
  %v2195 = vpop.f32.mrf.mxu0
  %v2196 = vadd.f32 0.0, %v2195
  %v2197 = vpop.f32.mrf.mxu0
  %v2198 = vpop.f32.mrf.mxu0
  %2199 = vdwg.mxu0
  %v2200 = vadd.f32 %v2113, %v2153
  %v2201 = vadd.f32 %v2114, %v2155
  %v2202 = vadd.f32 %v2115, %v2194
  %v2203 = vadd.f32 %v2116, %v2196
  %v2204 = vxor.u32 %v2200, 2147483648
  %v2205 = vxor.u32 %v2201, 2147483648
  %v2206 = vxor.u32 %v2202, 2147483648
  %v2207 = vmul.f32 %v2204, 1.442695
  %v2208 = vpow.pop %v2207
  %v2209 = vmul.f32 %v2205, 1.442695
  %v2210 = vpow.pop %v2209
  %v2211 = vmul.f32 %v2206, 1.442695
  %v2212 = vpow.pop %v2211
  %v2213 = vadd.f32 %v2208, 1.0
  %v2214 = vadd.f32 %v2210, 1.0
  %v2215 = vadd.f32 %v2212, 1.0
  %v2216 = vrcp.pop %v2213
  %v2217 = vmul.f32 1.0, %v2216
  %v2218 = vrcp.pop %v2214
  %v2219 = vmul.f32 1.0, %v2218
  %v2220 = vrcp.pop %v2215
  %v2221 = vmul.f32 1.0, %v2220
  %v2222 = vtanh.pop %v2203
  %v2223 = vmul.f32 %v2219, %v1916
  %v2224 = vmul.f32 %v2217, %v2222
  %v2225 = vadd.f32 %v2223, %v2224
  %v2226 = vtanh.pop %v2225
  %v2227 = vmul.f32 %v2221, %v2226
  %v2228 = vpack.c.bf16 %v2111, %v2111
  %2229 = vmatprep.subr.bf16.mxu0 %v1107
  %2230 = vmatpush1.bf16.msra.mxu0 %v1106
  %2231 = vmatprep.subr.bf16.mxu0 %v1103
  %2232 = vmatpush1.bf16.msra.mxu0 %v1102
  %2233 = vmatprep.subr.bf16.mxu0 %v1099
  %2234 = vmatpush1.bf16.msra.mxu0 %v1098
  %2235 = vmatprep.subr.bf16.mxu0 %v1095
  %2236 = vmatpush1.bf16.msra.mxu0 %v1094
  %2237 = vmatprep.subr.bf16.mxu0 %v1091
  %2238 = vmatpush1.bf16.msra.mxu0 %v1090
  %2239 = vmatprep.subr.bf16.mxu0 %v1087
  %2240 = vmatpush1.bf16.msra.mxu0 %v1086
  %2241 = vmatprep.subr.bf16.mxu0 %v1083
  %2242 = vmatpush1.bf16.msra.mxu0 %v1082
  %2243 = vmatprep.subr.bf16.mxu0 %v1079
  %2244 = vmatpush1.bf16.msra.mxu0 %v1078
  %2245 = vmatprep.subr.bf16.mxu0 0
  %2246 = vmatpush2.bf16.msra.mxu0 0
  %2247 = vmatprep.subr.bf16.mxu0 0
  %2248 = vmatpush2.bf16.msra.mxu0 0
  %2249 = vmatprep.subr.bf16.mxu0 0
  %2250 = vmatpush2.bf16.msra.mxu0 0
  %2251 = vmatprep.subr.bf16.mxu0 0
  %2252 = vmatpush2.bf16.msra.mxu0 0
  %2253 = vmatprep.subr.bf16.mxu0 0
  %2254 = vmatpush2.bf16.msra.mxu0 0
  %2255 = vmatprep.subr.bf16.mxu0 0
  %2256 = vmatpush2.bf16.msra.mxu0 0
  %2257 = vmatprep.subr.bf16.mxu0 0
  %2258 = vmatpush2.bf16.msra.mxu0 0
  %2259 = vmatprep.subr.bf16.mxu0 0
  %2260 = vmatpush2.bf16.msra.mxu0 0
  %2261 = vmatprep.mubr.bf16.mxu0 0
  %2262 = vmatmul.mubr.bf16.gmra.mxu0 %v2228
  %v2263 = vpop.f32.mrf.mxu0
  %v2264 = vadd.f32 0.0, %v2263
  %v2265 = vpop.f32.mrf.mxu0
  %v2266 = vadd.f32 0.0, %v2265
  %v2267 = vpop.f32.mrf.mxu0
  %v2268 = vpop.f32.mrf.mxu0
  %2269 = vdwg.mxu0
  %2270 = vmatprep.subr.bf16.mxu0 %v1109
  %2271 = vmatpush1.bf16.msra.mxu0 %v1108
  %2272 = vmatprep.subr.bf16.mxu0 %v1105
  %2273 = vmatpush1.bf16.msra.mxu0 %v1104
  %2274 = vmatprep.subr.bf16.mxu0 %v1101
  %2275 = vmatpush1.bf16.msra.mxu0 %v1100
  %2276 = vmatprep.subr.bf16.mxu0 %v1097
  %2277 = vmatpush1.bf16.msra.mxu0 %v1096
  %2278 = vmatprep.subr.bf16.mxu0 %v1093
  %2279 = vmatpush1.bf16.msra.mxu0 %v1092
  %2280 = vmatprep.subr.bf16.mxu0 %v1089
  %2281 = vmatpush1.bf16.msra.mxu0 %v1088
  %2282 = vmatprep.subr.bf16.mxu0 %v1085
  %2283 = vmatpush1.bf16.msra.mxu0 %v1084
  %2284 = vmatprep.subr.bf16.mxu0 %v1081
  %2285 = vmatpush1.bf16.msra.mxu0 %v1080
  %2286 = vmatprep.subr.bf16.mxu0 0
  %2287 = vmatpush2.bf16.msra.mxu0 0
  %2288 = vmatprep.subr.bf16.mxu0 0
  %2289 = vmatpush2.bf16.msra.mxu0 0
  %2290 = vmatprep.subr.bf16.mxu0 0
  %2291 = vmatpush2.bf16.msra.mxu0 0
  %2292 = vmatprep.subr.bf16.mxu0 0
  %2293 = vmatpush2.bf16.msra.mxu0 0
  %2294 = vmatprep.subr.bf16.mxu0 0
  %2295 = vmatpush2.bf16.msra.mxu0 0
  %2296 = vmatprep.subr.bf16.mxu0 0
  %2297 = vmatpush2.bf16.msra.mxu0 0
  %2298 = vmatprep.subr.bf16.mxu0 0
  %2299 = vmatpush2.bf16.msra.mxu0 0
  %2300 = vmatprep.subr.bf16.mxu0 0
  %2301 = vmatpush2.bf16.msra.mxu0 0
  %2302 = vmatprep.mubr.bf16.mxu0 0
  %2303 = vmatmul.mubr.bf16.gmra.mxu0 %v2228
  %v2304 = vpop.f32.mrf.mxu0
  %v2305 = vadd.f32 0.0, %v2304
  %v2306 = vpop.f32.mrf.mxu0
  %v2307 = vadd.f32 0.0, %v2306
  %v2308 = vpop.f32.mrf.mxu0
  %v2309 = vpop.f32.mrf.mxu0
  %2310 = vdwg.mxu0
  %2311 = vmatprep.subr.bf16.mxu0 %v1349
  %2312 = vmatpush1.bf16.msra.mxu0 %v1348
  %2313 = vmatprep.subr.bf16.mxu0 %v1345
  %2314 = vmatpush1.bf16.msra.mxu0 %v1344
  %2315 = vmatprep.subr.bf16.mxu0 %v1341
  %2316 = vmatpush1.bf16.msra.mxu0 %v1340
  %2317 = vmatprep.subr.bf16.mxu0 %v1337
  %2318 = vmatpush1.bf16.msra.mxu0 %v1336
  %2319 = vmatprep.subr.bf16.mxu0 %v1333
  %2320 = vmatpush1.bf16.msra.mxu0 %v1332
  %2321 = vmatprep.subr.bf16.mxu0 %v1329
  %2322 = vmatpush1.bf16.msra.mxu0 %v1328
  %2323 = vmatprep.subr.bf16.mxu0 %v1325
  %2324 = vmatpush1.bf16.msra.mxu0 %v1324
  %2325 = vmatprep.subr.bf16.mxu0 %v1321
  %2326 = vmatpush1.bf16.msra.mxu0 %v1320
  %2327 = vmatprep.subr.bf16.mxu0 0
  %2328 = vmatpush2.bf16.msra.mxu0 0
  %2329 = vmatprep.subr.bf16.mxu0 0
  %2330 = vmatpush2.bf16.msra.mxu0 0
  %2331 = vmatprep.subr.bf16.mxu0 0
  %2332 = vmatpush2.bf16.msra.mxu0 0
  %2333 = vmatprep.subr.bf16.mxu0 0
  %2334 = vmatpush2.bf16.msra.mxu0 0
  %2335 = vmatprep.subr.bf16.mxu0 0
  %2336 = vmatpush2.bf16.msra.mxu0 0
  %2337 = vmatprep.subr.bf16.mxu0 0
  %2338 = vmatpush2.bf16.msra.mxu0 0
  %2339 = vmatprep.subr.bf16.mxu0 0
  %2340 = vmatpush2.bf16.msra.mxu0 0
  %2341 = vmatprep.subr.bf16.mxu0 0
  %2342 = vmatpush2.bf16.msra.mxu0 0
  %2343 = vmatprep.mubr.bf16.mxu0 0
  %2344 = vmatmul.mubr.bf16.gmra.mxu0 %v2117
  %v2345 = vpop.f32.mrf.mxu0
  %v2346 = vadd.f32 %v2264, %v2345
  %v2347 = vpop.f32.mrf.mxu0
  %v2348 = vadd.f32 %v2266, %v2347
  %v2349 = vpop.f32.mrf.mxu0
  %v2350 = vpop.f32.mrf.mxu0
  %2351 = vdwg.mxu0
  %2352 = vmatprep.subr.bf16.mxu0 %v1351
  %2353 = vmatpush1.bf16.msra.mxu0 %v1350
  %2354 = vmatprep.subr.bf16.mxu0 %v1347
  %2355 = vmatpush1.bf16.msra.mxu0 %v1346
  %2356 = vmatprep.subr.bf16.mxu0 %v1343
  %2357 = vmatpush1.bf16.msra.mxu0 %v1342
  %2358 = vmatprep.subr.bf16.mxu0 %v1339
  %2359 = vmatpush1.bf16.msra.mxu0 %v1338
  %2360 = vmatprep.subr.bf16.mxu0 %v1335
  %2361 = vmatpush1.bf16.msra.mxu0 %v1334
  %2362 = vmatprep.subr.bf16.mxu0 %v1331
  %2363 = vmatpush1.bf16.msra.mxu0 %v1330
  %2364 = vmatprep.subr.bf16.mxu0 %v1327
  %2365 = vmatpush1.bf16.msra.mxu0 %v1326
  %2366 = vmatprep.subr.bf16.mxu0 %v1323
  %2367 = vmatpush1.bf16.msra.mxu0 %v1322
  %2368 = vmatprep.subr.bf16.mxu0 0
  %2369 = vmatpush2.bf16.msra.mxu0 0
  %2370 = vmatprep.subr.bf16.mxu0 0
  %2371 = vmatpush2.bf16.msra.mxu0 0
  %2372 = vmatprep.subr.bf16.mxu0 0
  %2373 = vmatpush2.bf16.msra.mxu0 0
  %2374 = vmatprep.subr.bf16.mxu0 0
  %2375 = vmatpush2.bf16.msra.mxu0 0
  %2376 = vmatprep.subr.bf16.mxu0 0
  %2377 = vmatpush2.bf16.msra.mxu0 0
  %2378 = vmatprep.subr.bf16.mxu0 0
  %2379 = vmatpush2.bf16.msra.mxu0 0
  %2380 = vmatprep.subr.bf16.mxu0 0
  %2381 = vmatpush2.bf16.msra.mxu0 0
  %2382 = vmatprep.subr.bf16.mxu0 0
  %2383 = vmatpush2.bf16.msra.mxu0 0
  %2384 = vmatprep.mubr.bf16.mxu0 0
  %2385 = vmatmul.mubr.bf16.gmra.mxu0 %v2117
  %v2386 = vpop.f32.mrf.mxu0
  %v2387 = vadd.f32 %v2305, %v2386
  %v2388 = vpop.f32.mrf.mxu0
  %v2389 = vadd.f32 %v2307, %v2388
  %v2390 = vpop.f32.mrf.mxu0
  %v2391 = vpop.f32.mrf.mxu0
  %2392 = vdwg.mxu0
  %v2393 = vadd.f32 %v2346, %v471
  %v2394 = vadd.f32 %v2348, %v475
  %v2395 = vadd.f32 %v2387, %v479
  %v2396 = vadd.f32 %v2389, %v483
  %v2397 = vxor.u32 %v2393, 2147483648
  %v2398 = vxor.u32 %v2394, 2147483648
  %v2399 = vxor.u32 %v2395, 2147483648
  %v2400 = vmul.f32 %v2397, 1.442695
  %v2401 = vpow.pop %v2400
  %v2402 = vmul.f32 %v2398, 1.442695
  %v2403 = vpow.pop %v2402
  %v2404 = vmul.f32 %v2399, 1.442695
  %v2405 = vpow.pop %v2404
  %v2406 = vadd.f32 %v2401, 1.0
  %v2407 = vadd.f32 %v2403, 1.0
  %v2408 = vadd.f32 %v2405, 1.0
  %v2409 = vrcp.pop %v2406
  %v2410 = vmul.f32 1.0, %v2409
  %v2411 = vrcp.pop %v2407
  %v2412 = vmul.f32 1.0, %v2411
  %v2413 = vrcp.pop %v2408
  %v2414 = vmul.f32 1.0, %v2413
  %v2415 = vtanh.pop %v2396
  %v2416 = vmul.f32 %v2412, %v2109
  %v2417 = vmul.f32 %v2410, %v2415
  %v2418 = vadd.f32 %v2416, %v2417
  %v2419 = vtanh.pop %v2418
  %v2420 = vmul.f32 %v2414, %v2419
  %s2421 = scalar_lea.vmem [#allocation2], 160
  %v2422 = vld [vmem:[%s2421] sm:$0xff]
  %v2423 = vld [vmem:[%s2421 + $0x8] sm:$0xff]
  %v2424 = vld [vmem:[%s2421 + $0x10] sm:$0xff]
  %v2425 = vld [vmem:[%s2421 + $0x18] sm:$0xff]
  %v2426 = vpack.c.bf16 %v2227, %v2227
  %2427 = vmatprep.subr.bf16.mxu0 %v656
  %2428 = vmatpush1.bf16.msra.mxu0 %v655
  %2429 = vmatprep.subr.bf16.mxu0 %v652
  %2430 = vmatpush1.bf16.msra.mxu0 %v651
  %2431 = vmatprep.subr.bf16.mxu0 %v648
  %2432 = vmatpush1.bf16.msra.mxu0 %v647
  %2433 = vmatprep.subr.bf16.mxu0 %v644
  %2434 = vmatpush1.bf16.msra.mxu0 %v643
  %2435 = vmatprep.subr.bf16.mxu0 %v640
  %2436 = vmatpush1.bf16.msra.mxu0 %v639
  %2437 = vmatprep.subr.bf16.mxu0 %v636
  %2438 = vmatpush1.bf16.msra.mxu0 %v635
  %2439 = vmatprep.subr.bf16.mxu0 %v632
  %2440 = vmatpush1.bf16.msra.mxu0 %v631
  %2441 = vmatprep.subr.bf16.mxu0 %v628
  %2442 = vmatpush1.bf16.msra.mxu0 %v627
  %2443 = vmatprep.subr.bf16.mxu0 0
  %2444 = vmatpush2.bf16.msra.mxu0 0
  %2445 = vmatprep.subr.bf16.mxu0 0
  %2446 = vmatpush2.bf16.msra.mxu0 0
  %2447 = vmatprep.subr.bf16.mxu0 0
  %2448 = vmatpush2.bf16.msra.mxu0 0
  %2449 = vmatprep.subr.bf16.mxu0 0
  %2450 = vmatpush2.bf16.msra.mxu0 0
  %2451 = vmatprep.subr.bf16.mxu0 0
  %2452 = vmatpush2.bf16.msra.mxu0 0
  %2453 = vmatprep.subr.bf16.mxu0 0
  %2454 = vmatpush2.bf16.msra.mxu0 0
  %2455 = vmatprep.subr.bf16.mxu0 0
  %2456 = vmatpush2.bf16.msra.mxu0 0
  %2457 = vmatprep.subr.bf16.mxu0 0
  %2458 = vmatpush2.bf16.msra.mxu0 0
  %2459 = vmatprep.mubr.bf16.mxu0 0
  %2460 = vmatmul.mubr.bf16.gmra.mxu0 %v2426
  %v2461 = vpop.f32.mrf.mxu0
  %v2462 = vadd.f32 0.0, %v2461
  %v2463 = vpop.f32.mrf.mxu0
  %v2464 = vadd.f32 0.0, %v2463
  %v2465 = vpop.f32.mrf.mxu0
  %v2466 = vpop.f32.mrf.mxu0
  %2467 = vdwg.mxu0
  %2468 = vmatprep.subr.bf16.mxu0 %v658
  %2469 = vmatpush1.bf16.msra.mxu0 %v657
  %2470 = vmatprep.subr.bf16.mxu0 %v654
  %2471 = vmatpush1.bf16.msra.mxu0 %v653
  %2472 = vmatprep.subr.bf16.mxu0 %v650
  %2473 = vmatpush1.bf16.msra.mxu0 %v649
  %2474 = vmatprep.subr.bf16.mxu0 %v646
  %2475 = vmatpush1.bf16.msra.mxu0 %v645
  %2476 = vmatprep.subr.bf16.mxu0 %v642
  %2477 = vmatpush1.bf16.msra.mxu0 %v641
  %2478 = vmatprep.subr.bf16.mxu0 %v638
  %2479 = vmatpush1.bf16.msra.mxu0 %v637
  %2480 = vmatprep.subr.bf16.mxu0 %v634
  %2481 = vmatpush1.bf16.msra.mxu0 %v633
  %2482 = vmatprep.subr.bf16.mxu0 %v630
  %2483 = vmatpush1.bf16.msra.mxu0 %v629
  %2484 = vmatprep.subr.bf16.mxu0 0
  %2485 = vmatpush2.bf16.msra.mxu0 0
  %2486 = vmatprep.subr.bf16.mxu0 0
  %2487 = vmatpush2.bf16.msra.mxu0 0
  %2488 = vmatprep.subr.bf16.mxu0 0
  %2489 = vmatpush2.bf16.msra.mxu0 0
  %2490 = vmatprep.subr.bf16.mxu0 0
  %2491 = vmatpush2.bf16.msra.mxu0 0
  %2492 = vmatprep.subr.bf16.mxu0 0
  %2493 = vmatpush2.bf16.msra.mxu0 0
  %2494 = vmatprep.subr.bf16.mxu0 0
  %2495 = vmatpush2.bf16.msra.mxu0 0
  %2496 = vmatprep.subr.bf16.mxu0 0
  %2497 = vmatpush2.bf16.msra.mxu0 0
  %2498 = vmatprep.subr.bf16.mxu0 0
  %2499 = vmatpush2.bf16.msra.mxu0 0
  %2500 = vmatprep.mubr.bf16.mxu0 0
  %2501 = vmatmul.mubr.bf16.gmra.mxu0 %v2426
  %v2502 = vpop.f32.mrf.mxu0
  %v2503 = vadd.f32 0.0, %v2502
  %v2504 = vpop.f32.mrf.mxu0
  %v2505 = vadd.f32 0.0, %v2504
  %v2506 = vpop.f32.mrf.mxu0
  %v2507 = vpop.f32.mrf.mxu0
  %2508 = vdwg.mxu0
  %v2509 = vadd.f32 %v2422, %v2462
  %v2510 = vadd.f32 %v2423, %v2464
  %v2511 = vadd.f32 %v2424, %v2503
  %v2512 = vadd.f32 %v2425, %v2505
  %v2513 = vxor.u32 %v2509, 2147483648
  %v2514 = vxor.u32 %v2510, 2147483648
  %v2515 = vxor.u32 %v2511, 2147483648
  %v2516 = vmul.f32 %v2513, 1.442695
  %v2517 = vpow.pop %v2516
  %v2518 = vmul.f32 %v2514, 1.442695
  %v2519 = vpow.pop %v2518
  %v2520 = vmul.f32 %v2515, 1.442695
  %v2521 = vpow.pop %v2520
  %v2522 = vadd.f32 %v2517, 1.0
  %v2523 = vadd.f32 %v2519, 1.0
  %v2524 = vadd.f32 %v2521, 1.0
  %v2525 = vrcp.pop %v2522
  %v2526 = vmul.f32 1.0, %v2525
  %v2527 = vrcp.pop %v2523
  %v2528 = vmul.f32 1.0, %v2527
  %v2529 = vrcp.pop %v2524
  %v2530 = vmul.f32 1.0, %v2529
  %v2531 = vtanh.pop %v2512
  %v2532 = vmul.f32 %v2528, %v2225
  %v2533 = vmul.f32 %v2526, %v2531
  %v2534 = vadd.f32 %v2532, %v2533
  %v2535 = vtanh.pop %v2534
  %v2536 = vmul.f32 %v2530, %v2535
  %v2537 = vpack.c.bf16 %v2420, %v2420
  %2538 = vmatprep.subr.bf16.mxu0 %v1107
  %2539 = vmatpush1.bf16.msra.mxu0 %v1106
  %2540 = vmatprep.subr.bf16.mxu0 %v1103
  %2541 = vmatpush1.bf16.msra.mxu0 %v1102
  %2542 = vmatprep.subr.bf16.mxu0 %v1099
  %2543 = vmatpush1.bf16.msra.mxu0 %v1098
  %2544 = vmatprep.subr.bf16.mxu0 %v1095
  %2545 = vmatpush1.bf16.msra.mxu0 %v1094
  %2546 = vmatprep.subr.bf16.mxu0 %v1091
  %2547 = vmatpush1.bf16.msra.mxu0 %v1090
  %2548 = vmatprep.subr.bf16.mxu0 %v1087
  %2549 = vmatpush1.bf16.msra.mxu0 %v1086
  %2550 = vmatprep.subr.bf16.mxu0 %v1083
  %2551 = vmatpush1.bf16.msra.mxu0 %v1082
  %2552 = vmatprep.subr.bf16.mxu0 %v1079
  %2553 = vmatpush1.bf16.msra.mxu0 %v1078
  %2554 = vmatprep.subr.bf16.mxu0 0
  %2555 = vmatpush2.bf16.msra.mxu0 0
  %2556 = vmatprep.subr.bf16.mxu0 0
  %2557 = vmatpush2.bf16.msra.mxu0 0
  %2558 = vmatprep.subr.bf16.mxu0 0
  %2559 = vmatpush2.bf16.msra.mxu0 0
  %2560 = vmatprep.subr.bf16.mxu0 0
  %2561 = vmatpush2.bf16.msra.mxu0 0
  %2562 = vmatprep.subr.bf16.mxu0 0
  %2563 = vmatpush2.bf16.msra.mxu0 0
  %2564 = vmatprep.subr.bf16.mxu0 0
  %2565 = vmatpush2.bf16.msra.mxu0 0
  %2566 = vmatprep.subr.bf16.mxu0 0
  %2567 = vmatpush2.bf16.msra.mxu0 0
  %2568 = vmatprep.subr.bf16.mxu0 0
  %2569 = vmatpush2.bf16.msra.mxu0 0
  %2570 = vmatprep.mubr.bf16.mxu0 0
  %2571 = vmatmul.mubr.bf16.gmra.mxu0 %v2537
  %v2572 = vpop.f32.mrf.mxu0
  %v2573 = vadd.f32 0.0, %v2572
  %v2574 = vpop.f32.mrf.mxu0
  %v2575 = vadd.f32 0.0, %v2574
  %v2576 = vpop.f32.mrf.mxu0
  %v2577 = vpop.f32.mrf.mxu0
  %2578 = vdwg.mxu0
  %2579 = vmatprep.subr.bf16.mxu0 %v1109
  %2580 = vmatpush1.bf16.msra.mxu0 %v1108
  %2581 = vmatprep.subr.bf16.mxu0 %v1105
  %2582 = vmatpush1.bf16.msra.mxu0 %v1104
  %2583 = vmatprep.subr.bf16.mxu0 %v1101
  %2584 = vmatpush1.bf16.msra.mxu0 %v1100
  %2585 = vmatprep.subr.bf16.mxu0 %v1097
  %2586 = vmatpush1.bf16.msra.mxu0 %v1096
  %2587 = vmatprep.subr.bf16.mxu0 %v1093
  %2588 = vmatpush1.bf16.msra.mxu0 %v1092
  %2589 = vmatprep.subr.bf16.mxu0 %v1089
  %2590 = vmatpush1.bf16.msra.mxu0 %v1088
  %2591 = vmatprep.subr.bf16.mxu0 %v1085
  %2592 = vmatpush1.bf16.msra.mxu0 %v1084
  %2593 = vmatprep.subr.bf16.mxu0 %v1081
  %2594 = vmatpush1.bf16.msra.mxu0 %v1080
  %2595 = vmatprep.subr.bf16.mxu0 0
  %2596 = vmatpush2.bf16.msra.mxu0 0
  %2597 = vmatprep.subr.bf16.mxu0 0
  %2598 = vmatpush2.bf16.msra.mxu0 0
  %2599 = vmatprep.subr.bf16.mxu0 0
  %2600 = vmatpush2.bf16.msra.mxu0 0
  %2601 = vmatprep.subr.bf16.mxu0 0
  %2602 = vmatpush2.bf16.msra.mxu0 0
  %2603 = vmatprep.subr.bf16.mxu0 0
  %2604 = vmatpush2.bf16.msra.mxu0 0
  %2605 = vmatprep.subr.bf16.mxu0 0
  %2606 = vmatpush2.bf16.msra.mxu0 0
  %2607 = vmatprep.subr.bf16.mxu0 0
  %2608 = vmatpush2.bf16.msra.mxu0 0
  %2609 = vmatprep.subr.bf16.mxu0 0
  %2610 = vmatpush2.bf16.msra.mxu0 0
  %2611 = vmatprep.mubr.bf16.mxu0 0
  %2612 = vmatmul.mubr.bf16.gmra.mxu0 %v2537
  %v2613 = vpop.f32.mrf.mxu0
  %v2614 = vadd.f32 0.0, %v2613
  %v2615 = vpop.f32.mrf.mxu0
  %v2616 = vadd.f32 0.0, %v2615
  %v2617 = vpop.f32.mrf.mxu0
  %v2618 = vpop.f32.mrf.mxu0
  %2619 = vdwg.mxu0
  %2620 = vmatprep.subr.bf16.mxu0 %v1349
  %2621 = vmatpush1.bf16.msra.mxu0 %v1348
  %2622 = vmatprep.subr.bf16.mxu0 %v1345
  %2623 = vmatpush1.bf16.msra.mxu0 %v1344
  %2624 = vmatprep.subr.bf16.mxu0 %v1341
  %2625 = vmatpush1.bf16.msra.mxu0 %v1340
  %2626 = vmatprep.subr.bf16.mxu0 %v1337
  %2627 = vmatpush1.bf16.msra.mxu0 %v1336
  %2628 = vmatprep.subr.bf16.mxu0 %v1333
  %2629 = vmatpush1.bf16.msra.mxu0 %v1332
  %2630 = vmatprep.subr.bf16.mxu0 %v1329
  %2631 = vmatpush1.bf16.msra.mxu0 %v1328
  %2632 = vmatprep.subr.bf16.mxu0 %v1325
  %2633 = vmatpush1.bf16.msra.mxu0 %v1324
  %2634 = vmatprep.subr.bf16.mxu0 %v1321
  %2635 = vmatpush1.bf16.msra.mxu0 %v1320
  %2636 = vmatprep.subr.bf16.mxu0 0
  %2637 = vmatpush2.bf16.msra.mxu0 0
  %2638 = vmatprep.subr.bf16.mxu0 0
  %2639 = vmatpush2.bf16.msra.mxu0 0
  %2640 = vmatprep.subr.bf16.mxu0 0
  %2641 = vmatpush2.bf16.msra.mxu0 0
  %2642 = vmatprep.subr.bf16.mxu0 0
  %2643 = vmatpush2.bf16.msra.mxu0 0
  %2644 = vmatprep.subr.bf16.mxu0 0
  %2645 = vmatpush2.bf16.msra.mxu0 0
  %2646 = vmatprep.subr.bf16.mxu0 0
  %2647 = vmatpush2.bf16.msra.mxu0 0
  %2648 = vmatprep.subr.bf16.mxu0 0
  %2649 = vmatpush2.bf16.msra.mxu0 0
  %2650 = vmatprep.subr.bf16.mxu0 0
  %2651 = vmatpush2.bf16.msra.mxu0 0
  %2652 = vmatprep.mubr.bf16.mxu0 0
  %2653 = vmatmul.mubr.bf16.gmra.mxu0 %v2426
  %v2654 = vpop.f32.mrf.mxu0
  %v2655 = vadd.f32 %v2573, %v2654
  %v2656 = vpop.f32.mrf.mxu0
  %v2657 = vadd.f32 %v2575, %v2656
  %v2658 = vpop.f32.mrf.mxu0
  %v2659 = vpop.f32.mrf.mxu0
  %2660 = vdwg.mxu0
  %2661 = vmatprep.subr.bf16.mxu0 %v1351
  %2662 = vmatpush1.bf16.msra.mxu0 %v1350
  %2663 = vmatprep.subr.bf16.mxu0 %v1347
  %2664 = vmatpush1.bf16.msra.mxu0 %v1346
  %2665 = vmatprep.subr.bf16.mxu0 %v1343
  %2666 = vmatpush1.bf16.msra.mxu0 %v1342
  %2667 = vmatprep.subr.bf16.mxu0 %v1339
  %2668 = vmatpush1.bf16.msra.mxu0 %v1338
  %2669 = vmatprep.subr.bf16.mxu0 %v1335
  %2670 = vmatpush1.bf16.msra.mxu0 %v1334
  %2671 = vmatprep.subr.bf16.mxu0 %v1331
  %2672 = vmatpush1.bf16.msra.mxu0 %v1330
  %2673 = vmatprep.subr.bf16.mxu0 %v1327
  %2674 = vmatpush1.bf16.msra.mxu0 %v1326
  %2675 = vmatprep.subr.bf16.mxu0 %v1323
  %2676 = vmatpush1.bf16.msra.mxu0 %v1322
  %2677 = vmatprep.subr.bf16.mxu0 0
  %2678 = vmatpush2.bf16.msra.mxu0 0
  %2679 = vmatprep.subr.bf16.mxu0 0
  %2680 = vmatpush2.bf16.msra.mxu0 0
  %2681 = vmatprep.subr.bf16.mxu0 0
  %2682 = vmatpush2.bf16.msra.mxu0 0
  %2683 = vmatprep.subr.bf16.mxu0 0
  %2684 = vmatpush2.bf16.msra.mxu0 0
  %2685 = vmatprep.subr.bf16.mxu0 0
  %2686 = vmatpush2.bf16.msra.mxu0 0
  %2687 = vmatprep.subr.bf16.mxu0 0
  %2688 = vmatpush2.bf16.msra.mxu0 0
  %2689 = vmatprep.subr.bf16.mxu0 0
  %2690 = vmatpush2.bf16.msra.mxu0 0
  %2691 = vmatprep.subr.bf16.mxu0 0
  %2692 = vmatpush2.bf16.msra.mxu0 0
  %2693 = vmatprep.mubr.bf16.mxu0 0
  %2694 = vmatmul.mubr.bf16.gmra.mxu0 %v2426
  %v2695 = vpop.f32.mrf.mxu0
  %v2696 = vadd.f32 %v2614, %v2695
  %v2697 = vpop.f32.mrf.mxu0
  %v2698 = vadd.f32 %v2616, %v2697
  %v2699 = vpop.f32.mrf.mxu0
  %v2700 = vpop.f32.mrf.mxu0
  %2701 = vdwg.mxu0
  %v2702 = vadd.f32 %v2655, %v471
  %v2703 = vadd.f32 %v2657, %v475
  %v2704 = vadd.f32 %v2696, %v479
  %v2705 = vadd.f32 %v2698, %v483
  %v2706 = vxor.u32 %v2702, 2147483648
  %v2707 = vxor.u32 %v2703, 2147483648
  %v2708 = vxor.u32 %v2704, 2147483648
  %v2709 = vmul.f32 %v2706, 1.442695
  %v2710 = vpow.pop %v2709
  %v2711 = vmul.f32 %v2707, 1.442695
  %v2712 = vpow.pop %v2711
  %v2713 = vmul.f32 %v2708, 1.442695
  %v2714 = vpow.pop %v2713
  %v2715 = vadd.f32 %v2710, 1.0
  %v2716 = vadd.f32 %v2712, 1.0
  %v2717 = vadd.f32 %v2714, 1.0
  %v2718 = vrcp.pop %v2715
  %v2719 = vmul.f32 1.0, %v2718
  %v2720 = vrcp.pop %v2716
  %v2721 = vmul.f32 1.0, %v2720
  %v2722 = vrcp.pop %v2717
  %v2723 = vmul.f32 1.0, %v2722
  %v2724 = vtanh.pop %v2705
  %v2725 = vmul.f32 %v2721, %v2418
  %v2726 = vmul.f32 %v2719, %v2724
  %v2727 = vadd.f32 %v2725, %v2726
  %v2728 = vtanh.pop %v2727
  %v2729 = vmul.f32 %v2723, %v2728
  %s2730 = scalar_lea.vmem [#allocation2], 192
  %v2731 = vld [vmem:[%s2730] sm:$0xff]
  %v2732 = vld [vmem:[%s2730 + $0x8] sm:$0xff]
  %v2733 = vld [vmem:[%s2730 + $0x10] sm:$0xff]
  %v2734 = vld [vmem:[%s2730 + $0x18] sm:$0xff]
  %v2735 = vpack.c.bf16 %v2536, %v2536
  %2736 = vmatprep.subr.bf16.mxu0 %v656
  %2737 = vmatpush1.bf16.msra.mxu0 %v655
  %2738 = vmatprep.subr.bf16.mxu0 %v652
  %2739 = vmatpush1.bf16.msra.mxu0 %v651
  %2740 = vmatprep.subr.bf16.mxu0 %v648
  %2741 = vmatpush1.bf16.msra.mxu0 %v647
  %2742 = vmatprep.subr.bf16.mxu0 %v644
  %2743 = vmatpush1.bf16.msra.mxu0 %v643
  %2744 = vmatprep.subr.bf16.mxu0 %v640
  %2745 = vmatpush1.bf16.msra.mxu0 %v639
  %2746 = vmatprep.subr.bf16.mxu0 %v636
  %2747 = vmatpush1.bf16.msra.mxu0 %v635
  %2748 = vmatprep.subr.bf16.mxu0 %v632
  %2749 = vmatpush1.bf16.msra.mxu0 %v631
  %2750 = vmatprep.subr.bf16.mxu0 %v628
  %2751 = vmatpush1.bf16.msra.mxu0 %v627
  %2752 = vmatprep.subr.bf16.mxu0 0
  %2753 = vmatpush2.bf16.msra.mxu0 0
  %2754 = vmatprep.subr.bf16.mxu0 0
  %2755 = vmatpush2.bf16.msra.mxu0 0
  %2756 = vmatprep.subr.bf16.mxu0 0
  %2757 = vmatpush2.bf16.msra.mxu0 0
  %2758 = vmatprep.subr.bf16.mxu0 0
  %2759 = vmatpush2.bf16.msra.mxu0 0
  %2760 = vmatprep.subr.bf16.mxu0 0
  %2761 = vmatpush2.bf16.msra.mxu0 0
  %2762 = vmatprep.subr.bf16.mxu0 0
  %2763 = vmatpush2.bf16.msra.mxu0 0
  %2764 = vmatprep.subr.bf16.mxu0 0
  %2765 = vmatpush2.bf16.msra.mxu0 0
  %2766 = vmatprep.subr.bf16.mxu0 0
  %2767 = vmatpush2.bf16.msra.mxu0 0
  %2768 = vmatprep.mubr.bf16.mxu0 0
  %2769 = vmatmul.mubr.bf16.gmra.mxu0 %v2735
  %v2770 = vpop.f32.mrf.mxu0
  %v2771 = vadd.f32 0.0, %v2770
  %v2772 = vpop.f32.mrf.mxu0
  %v2773 = vadd.f32 0.0, %v2772
  %v2774 = vpop.f32.mrf.mxu0
  %v2775 = vpop.f32.mrf.mxu0
  %2776 = vdwg.mxu0
  %2777 = vmatprep.subr.bf16.mxu0 %v658
  %2778 = vmatpush1.bf16.msra.mxu0 %v657
  %2779 = vmatprep.subr.bf16.mxu0 %v654
  %2780 = vmatpush1.bf16.msra.mxu0 %v653
  %2781 = vmatprep.subr.bf16.mxu0 %v650
  %2782 = vmatpush1.bf16.msra.mxu0 %v649
  %2783 = vmatprep.subr.bf16.mxu0 %v646
  %2784 = vmatpush1.bf16.msra.mxu0 %v645
  %2785 = vmatprep.subr.bf16.mxu0 %v642
  %2786 = vmatpush1.bf16.msra.mxu0 %v641
  %2787 = vmatprep.subr.bf16.mxu0 %v638
  %2788 = vmatpush1.bf16.msra.mxu0 %v637
  %2789 = vmatprep.subr.bf16.mxu0 %v634
  %2790 = vmatpush1.bf16.msra.mxu0 %v633
  %2791 = vmatprep.subr.bf16.mxu0 %v630
  %2792 = vmatpush1.bf16.msra.mxu0 %v629
  %2793 = vmatprep.subr.bf16.mxu0 0
  %2794 = vmatpush2.bf16.msra.mxu0 0
  %2795 = vmatprep.subr.bf16.mxu0 0
  %2796 = vmatpush2.bf16.msra.mxu0 0
  %2797 = vmatprep.subr.bf16.mxu0 0
  %2798 = vmatpush2.bf16.msra.mxu0 0
  %2799 = vmatprep.subr.bf16.mxu0 0
  %2800 = vmatpush2.bf16.msra.mxu0 0
  %2801 = vmatprep.subr.bf16.mxu0 0
  %2802 = vmatpush2.bf16.msra.mxu0 0
  %2803 = vmatprep.subr.bf16.mxu0 0
  %2804 = vmatpush2.bf16.msra.mxu0 0
  %2805 = vmatprep.subr.bf16.mxu0 0
  %2806 = vmatpush2.bf16.msra.mxu0 0
  %2807 = vmatprep.subr.bf16.mxu0 0
  %2808 = vmatpush2.bf16.msra.mxu0 0
  %2809 = vmatprep.mubr.bf16.mxu0 0
  %2810 = vmatmul.mubr.bf16.gmra.mxu0 %v2735
  %v2811 = vpop.f32.mrf.mxu0
  %v2812 = vadd.f32 0.0, %v2811
  %v2813 = vpop.f32.mrf.mxu0
  %v2814 = vadd.f32 0.0, %v2813
  %v2815 = vpop.f32.mrf.mxu0
  %v2816 = vpop.f32.mrf.mxu0
  %2817 = vdwg.mxu0
  %v2818 = vadd.f32 %v2731, %v2771
  %v2819 = vadd.f32 %v2732, %v2773
  %v2820 = vadd.f32 %v2733, %v2812
  %v2821 = vadd.f32 %v2734, %v2814
  %v2822 = vxor.u32 %v2818, 2147483648
  %v2823 = vxor.u32 %v2819, 2147483648
  %v2824 = vxor.u32 %v2820, 2147483648
  %v2825 = vmul.f32 %v2822, 1.442695
  %v2826 = vpow.pop %v2825
  %v2827 = vmul.f32 %v2823, 1.442695
  %v2828 = vpow.pop %v2827
  %v2829 = vmul.f32 %v2824, 1.442695
  %v2830 = vpow.pop %v2829
  %v2831 = vadd.f32 %v2826, 1.0
  %v2832 = vadd.f32 %v2828, 1.0
  %v2833 = vadd.f32 %v2830, 1.0
  %v2834 = vrcp.pop %v2831
  %v2835 = vmul.f32 1.0, %v2834
  %v2836 = vrcp.pop %v2832
  %v2837 = vmul.f32 1.0, %v2836
  %v2838 = vrcp.pop %v2833
  %v2839 = vmul.f32 1.0, %v2838
  %v2840 = vtanh.pop %v2821
  %v2841 = vmul.f32 %v2837, %v2534
  %v2842 = vmul.f32 %v2835, %v2840
  %v2843 = vadd.f32 %v2841, %v2842
  %v2844 = vtanh.pop %v2843
  %v2845 = vmul.f32 %v2839, %v2844
  %v2846 = vpack.c.bf16 %v2729, %v2729
  %2847 = vmatprep.subr.bf16.mxu0 %v1107
  %2848 = vmatpush1.bf16.msra.mxu0 %v1106
  %2849 = vmatprep.subr.bf16.mxu0 %v1103
  %2850 = vmatpush1.bf16.msra.mxu0 %v1102
  %2851 = vmatprep.subr.bf16.mxu0 %v1099
  %2852 = vmatpush1.bf16.msra.mxu0 %v1098
  %2853 = vmatprep.subr.bf16.mxu0 %v1095
  %2854 = vmatpush1.bf16.msra.mxu0 %v1094
  %2855 = vmatprep.subr.bf16.mxu0 %v1091
  %2856 = vmatpush1.bf16.msra.mxu0 %v1090
  %2857 = vmatprep.subr.bf16.mxu0 %v1087
  %2858 = vmatpush1.bf16.msra.mxu0 %v1086
  %2859 = vmatprep.subr.bf16.mxu0 %v1083
  %2860 = vmatpush1.bf16.msra.mxu0 %v1082
  %2861 = vmatprep.subr.bf16.mxu0 %v1079
  %2862 = vmatpush1.bf16.msra.mxu0 %v1078
  %2863 = vmatprep.subr.bf16.mxu0 0
  %2864 = vmatpush2.bf16.msra.mxu0 0
  %2865 = vmatprep.subr.bf16.mxu0 0
  %2866 = vmatpush2.bf16.msra.mxu0 0
  %2867 = vmatprep.subr.bf16.mxu0 0
  %2868 = vmatpush2.bf16.msra.mxu0 0
  %2869 = vmatprep.subr.bf16.mxu0 0
  %2870 = vmatpush2.bf16.msra.mxu0 0
  %2871 = vmatprep.subr.bf16.mxu0 0
  %2872 = vmatpush2.bf16.msra.mxu0 0
  %2873 = vmatprep.subr.bf16.mxu0 0
  %2874 = vmatpush2.bf16.msra.mxu0 0
  %2875 = vmatprep.subr.bf16.mxu0 0
  %2876 = vmatpush2.bf16.msra.mxu0 0
  %2877 = vmatprep.subr.bf16.mxu0 0
  %2878 = vmatpush2.bf16.msra.mxu0 0
  %2879 = vmatprep.mubr.bf16.mxu0 0
  %2880 = vmatmul.mubr.bf16.gmra.mxu0 %v2846
  %v2881 = vpop.f32.mrf.mxu0
  %v2882 = vadd.f32 0.0, %v2881
  %v2883 = vpop.f32.mrf.mxu0
  %v2884 = vadd.f32 0.0, %v2883
  %v2885 = vpop.f32.mrf.mxu0
  %v2886 = vpop.f32.mrf.mxu0
  %2887 = vdwg.mxu0
  %2888 = vmatprep.subr.bf16.mxu0 %v1109
  %2889 = vmatpush1.bf16.msra.mxu0 %v1108
  %2890 = vmatprep.subr.bf16.mxu0 %v1105
  %2891 = vmatpush1.bf16.msra.mxu0 %v1104
  %2892 = vmatprep.subr.bf16.mxu0 %v1101
  %2893 = vmatpush1.bf16.msra.mxu0 %v1100
  %2894 = vmatprep.subr.bf16.mxu0 %v1097
  %2895 = vmatpush1.bf16.msra.mxu0 %v1096
  %2896 = vmatprep.subr.bf16.mxu0 %v1093
  %2897 = vmatpush1.bf16.msra.mxu0 %v1092
  %2898 = vmatprep.subr.bf16.mxu0 %v1089
  %2899 = vmatpush1.bf16.msra.mxu0 %v1088
  %2900 = vmatprep.subr.bf16.mxu0 %v1085
  %2901 = vmatpush1.bf16.msra.mxu0 %v1084
  %2902 = vmatprep.subr.bf16.mxu0 %v1081
  %2903 = vmatpush1.bf16.msra.mxu0 %v1080
  %2904 = vmatprep.subr.bf16.mxu0 0
  %2905 = vmatpush2.bf16.msra.mxu0 0
  %2906 = vmatprep.subr.bf16.mxu0 0
  %2907 = vmatpush2.bf16.msra.mxu0 0
  %2908 = vmatprep.subr.bf16.mxu0 0
  %2909 = vmatpush2.bf16.msra.mxu0 0
  %2910 = vmatprep.subr.bf16.mxu0 0
  %2911 = vmatpush2.bf16.msra.mxu0 0
  %2912 = vmatprep.subr.bf16.mxu0 0
  %2913 = vmatpush2.bf16.msra.mxu0 0
  %2914 = vmatprep.subr.bf16.mxu0 0
  %2915 = vmatpush2.bf16.msra.mxu0 0
  %2916 = vmatprep.subr.bf16.mxu0 0
  %2917 = vmatpush2.bf16.msra.mxu0 0
  %2918 = vmatprep.subr.bf16.mxu0 0
  %2919 = vmatpush2.bf16.msra.mxu0 0
  %2920 = vmatprep.mubr.bf16.mxu0 0
  %2921 = vmatmul.mubr.bf16.gmra.mxu0 %v2846
  %v2922 = vpop.f32.mrf.mxu0
  %v2923 = vadd.f32 0.0, %v2922
  %v2924 = vpop.f32.mrf.mxu0
  %v2925 = vadd.f32 0.0, %v2924
  %v2926 = vpop.f32.mrf.mxu0
  %v2927 = vpop.f32.mrf.mxu0
  %2928 = vdwg.mxu0
  %2929 = vmatprep.subr.bf16.mxu0 %v1349
  %2930 = vmatpush1.bf16.msra.mxu0 %v1348
  %2931 = vmatprep.subr.bf16.mxu0 %v1345
  %2932 = vmatpush1.bf16.msra.mxu0 %v1344
  %2933 = vmatprep.subr.bf16.mxu0 %v1341
  %2934 = vmatpush1.bf16.msra.mxu0 %v1340
  %2935 = vmatprep.subr.bf16.mxu0 %v1337
  %2936 = vmatpush1.bf16.msra.mxu0 %v1336
  %2937 = vmatprep.subr.bf16.mxu0 %v1333
  %2938 = vmatpush1.bf16.msra.mxu0 %v1332
  %2939 = vmatprep.subr.bf16.mxu0 %v1329
  %2940 = vmatpush1.bf16.msra.mxu0 %v1328
  %2941 = vmatprep.subr.bf16.mxu0 %v1325
  %2942 = vmatpush1.bf16.msra.mxu0 %v1324
  %2943 = vmatprep.subr.bf16.mxu0 %v1321
  %2944 = vmatpush1.bf16.msra.mxu0 %v1320
  %2945 = vmatprep.subr.bf16.mxu0 0
  %2946 = vmatpush2.bf16.msra.mxu0 0
  %2947 = vmatprep.subr.bf16.mxu0 0
  %2948 = vmatpush2.bf16.msra.mxu0 0
  %2949 = vmatprep.subr.bf16.mxu0 0
  %2950 = vmatpush2.bf16.msra.mxu0 0
  %2951 = vmatprep.subr.bf16.mxu0 0
  %2952 = vmatpush2.bf16.msra.mxu0 0
  %2953 = vmatprep.subr.bf16.mxu0 0
  %2954 = vmatpush2.bf16.msra.mxu0 0
  %2955 = vmatprep.subr.bf16.mxu0 0
  %2956 = vmatpush2.bf16.msra.mxu0 0
  %2957 = vmatprep.subr.bf16.mxu0 0
  %2958 = vmatpush2.bf16.msra.mxu0 0
  %2959 = vmatprep.subr.bf16.mxu0 0
  %2960 = vmatpush2.bf16.msra.mxu0 0
  %2961 = vmatprep.mubr.bf16.mxu0 0
  %2962 = vmatmul.mubr.bf16.gmra.mxu0 %v2735
  %v2963 = vpop.f32.mrf.mxu0
  %v2964 = vadd.f32 %v2882, %v2963
  %v2965 = vpop.f32.mrf.mxu0
  %v2966 = vadd.f32 %v2884, %v2965
  %v2967 = vpop.f32.mrf.mxu0
  %v2968 = vpop.f32.mrf.mxu0
  %2969 = vdwg.mxu0
  %2970 = vmatprep.subr.bf16.mxu0 %v1351
  %2971 = vmatpush1.bf16.msra.mxu0 %v1350
  %2972 = vmatprep.subr.bf16.mxu0 %v1347
  %2973 = vmatpush1.bf16.msra.mxu0 %v1346
  %2974 = vmatprep.subr.bf16.mxu0 %v1343
  %2975 = vmatpush1.bf16.msra.mxu0 %v1342
  %2976 = vmatprep.subr.bf16.mxu0 %v1339
  %2977 = vmatpush1.bf16.msra.mxu0 %v1338
  %2978 = vmatprep.subr.bf16.mxu0 %v1335
  %2979 = vmatpush1.bf16.msra.mxu0 %v1334
  %2980 = vmatprep.subr.bf16.mxu0 %v1331
  %2981 = vmatpush1.bf16.msra.mxu0 %v1330
  %2982 = vmatprep.subr.bf16.mxu0 %v1327
  %2983 = vmatpush1.bf16.msra.mxu0 %v1326
  %2984 = vmatprep.subr.bf16.mxu0 %v1323
  %2985 = vmatpush1.bf16.msra.mxu0 %v1322
  %2986 = vmatprep.subr.bf16.mxu0 0
  %2987 = vmatpush2.bf16.msra.mxu0 0
  %2988 = vmatprep.subr.bf16.mxu0 0
  %2989 = vmatpush2.bf16.msra.mxu0 0
  %2990 = vmatprep.subr.bf16.mxu0 0
  %2991 = vmatpush2.bf16.msra.mxu0 0
  %2992 = vmatprep.subr.bf16.mxu0 0
  %2993 = vmatpush2.bf16.msra.mxu0 0
  %2994 = vmatprep.subr.bf16.mxu0 0
  %2995 = vmatpush2.bf16.msra.mxu0 0
  %2996 = vmatprep.subr.bf16.mxu0 0
  %2997 = vmatpush2.bf16.msra.mxu0 0
  %2998 = vmatprep.subr.bf16.mxu0 0
  %2999 = vmatpush2.bf16.msra.mxu0 0
  %3000 = vmatprep.subr.bf16.mxu0 0
  %3001 = vmatpush2.bf16.msra.mxu0 0
  %3002 = vmatprep.mubr.bf16.mxu0 0
  %3003 = vmatmul.mubr.bf16.gmra.mxu0 %v2735
  %v3004 = vpop.f32.mrf.mxu0
  %v3005 = vadd.f32 %v2923, %v3004
  %v3006 = vpop.f32.mrf.mxu0
  %v3007 = vadd.f32 %v2925, %v3006
  %v3008 = vpop.f32.mrf.mxu0
  %v3009 = vpop.f32.mrf.mxu0
  %3010 = vdwg.mxu0
  %v3011 = vadd.f32 %v2964, %v471
  %v3012 = vadd.f32 %v2966, %v475
  %v3013 = vadd.f32 %v3005, %v479
  %v3014 = vadd.f32 %v3007, %v483
  %v3015 = vxor.u32 %v3011, 2147483648
  %v3016 = vxor.u32 %v3012, 2147483648
  %v3017 = vxor.u32 %v3013, 2147483648
  %v3018 = vmul.f32 %v3015, 1.442695
  %v3019 = vpow.pop %v3018
  %v3020 = vmul.f32 %v3016, 1.442695
  %v3021 = vpow.pop %v3020
  %v3022 = vmul.f32 %v3017, 1.442695
  %v3023 = vpow.pop %v3022
  %v3024 = vadd.f32 %v3019, 1.0
  %v3025 = vadd.f32 %v3021, 1.0
  %v3026 = vadd.f32 %v3023, 1.0
  %v3027 = vrcp.pop %v3024
  %v3028 = vmul.f32 1.0, %v3027
  %v3029 = vrcp.pop %v3025
  %v3030 = vmul.f32 1.0, %v3029
  %v3031 = vrcp.pop %v3026
  %v3032 = vmul.f32 1.0, %v3031
  %v3033 = vtanh.pop %v3014
  %v3034 = vmul.f32 %v3030, %v2727
  %v3035 = vmul.f32 %v3028, %v3033
  %v3036 = vadd.f32 %v3034, %v3035
  %v3037 = vtanh.pop %v3036
  %v3038 = vmul.f32 %v3032, %v3037
  %s3039 = scalar_lea.vmem [#allocation2], 224
  %v3040 = vld [vmem:[%s3039] sm:$0xff]
  %v3041 = vld [vmem:[%s3039 + $0x8] sm:$0xff]
  %v3042 = vld [vmem:[%s3039 + $0x10] sm:$0xff]
  %v3043 = vld [vmem:[%s3039 + $0x18] sm:$0xff]
  %v3044 = vpack.c.bf16 %v2845, %v2845
  %3045 = vmatprep.subr.bf16.mxu0 %v656
  %3046 = vmatpush1.bf16.msra.mxu0 %v655
  %3047 = vmatprep.subr.bf16.mxu0 %v652
  %3048 = vmatpush1.bf16.msra.mxu0 %v651
  %3049 = vmatprep.subr.bf16.mxu0 %v648
  %3050 = vmatpush1.bf16.msra.mxu0 %v647
  %3051 = vmatprep.subr.bf16.mxu0 %v644
  %3052 = vmatpush1.bf16.msra.mxu0 %v643
  %3053 = vmatprep.subr.bf16.mxu0 %v640
  %3054 = vmatpush1.bf16.msra.mxu0 %v639
  %3055 = vmatprep.subr.bf16.mxu0 %v636
  %3056 = vmatpush1.bf16.msra.mxu0 %v635
  %3057 = vmatprep.subr.bf16.mxu0 %v632
  %3058 = vmatpush1.bf16.msra.mxu0 %v631
  %3059 = vmatprep.subr.bf16.mxu0 %v628
  %3060 = vmatpush1.bf16.msra.mxu0 %v627
  %3061 = vmatprep.subr.bf16.mxu0 0
  %3062 = vmatpush2.bf16.msra.mxu0 0
  %3063 = vmatprep.subr.bf16.mxu0 0
  %3064 = vmatpush2.bf16.msra.mxu0 0
  %3065 = vmatprep.subr.bf16.mxu0 0
  %3066 = vmatpush2.bf16.msra.mxu0 0
  %3067 = vmatprep.subr.bf16.mxu0 0
  %3068 = vmatpush2.bf16.msra.mxu0 0
  %3069 = vmatprep.subr.bf16.mxu0 0
  %3070 = vmatpush2.bf16.msra.mxu0 0
  %3071 = vmatprep.subr.bf16.mxu0 0
  %3072 = vmatpush2.bf16.msra.mxu0 0
  %3073 = vmatprep.subr.bf16.mxu0 0
  %3074 = vmatpush2.bf16.msra.mxu0 0
  %3075 = vmatprep.subr.bf16.mxu0 0
  %3076 = vmatpush2.bf16.msra.mxu0 0
  %3077 = vmatprep.mubr.bf16.mxu0 0
  %3078 = vmatmul.mubr.bf16.gmra.mxu0 %v3044
  %v3079 = vpop.f32.mrf.mxu0
  %v3080 = vadd.f32 0.0, %v3079
  %v3081 = vpop.f32.mrf.mxu0
  %v3082 = vadd.f32 0.0, %v3081
  %v3083 = vpop.f32.mrf.mxu0
  %v3084 = vpop.f32.mrf.mxu0
  %3085 = vdwg.mxu0
  %3086 = vmatprep.subr.bf16.mxu0 %v658
  %3087 = vmatpush1.bf16.msra.mxu0 %v657
  %3088 = vmatprep.subr.bf16.mxu0 %v654
  %3089 = vmatpush1.bf16.msra.mxu0 %v653
  %3090 = vmatprep.subr.bf16.mxu0 %v650
  %3091 = vmatpush1.bf16.msra.mxu0 %v649
  %3092 = vmatprep.subr.bf16.mxu0 %v646
  %3093 = vmatpush1.bf16.msra.mxu0 %v645
  %3094 = vmatprep.subr.bf16.mxu0 %v642
  %3095 = vmatpush1.bf16.msra.mxu0 %v641
  %3096 = vmatprep.subr.bf16.mxu0 %v638
  %3097 = vmatpush1.bf16.msra.mxu0 %v637
  %3098 = vmatprep.subr.bf16.mxu0 %v634
  %3099 = vmatpush1.bf16.msra.mxu0 %v633
  %3100 = vmatprep.subr.bf16.mxu0 %v630
  %3101 = vmatpush1.bf16.msra.mxu0 %v629
  %3102 = vmatprep.subr.bf16.mxu0 0
  %3103 = vmatpush2.bf16.msra.mxu0 0
  %3104 = vmatprep.subr.bf16.mxu0 0
  %3105 = vmatpush2.bf16.msra.mxu0 0
  %3106 = vmatprep.subr.bf16.mxu0 0
  %3107 = vmatpush2.bf16.msra.mxu0 0
  %3108 = vmatprep.subr.bf16.mxu0 0
  %3109 = vmatpush2.bf16.msra.mxu0 0
  %3110 = vmatprep.subr.bf16.mxu0 0
  %3111 = vmatpush2.bf16.msra.mxu0 0
  %3112 = vmatprep.subr.bf16.mxu0 0
  %3113 = vmatpush2.bf16.msra.mxu0 0
  %3114 = vmatprep.subr.bf16.mxu0 0
  %3115 = vmatpush2.bf16.msra.mxu0 0
  %3116 = vmatprep.subr.bf16.mxu0 0
  %3117 = vmatpush2.bf16.msra.mxu0 0
  %3118 = vmatprep.mubr.bf16.mxu0 0
  %3119 = vmatmul.mubr.bf16.gmra.mxu0 %v3044
  %v3120 = vpop.f32.mrf.mxu0
  %v3121 = vadd.f32 0.0, %v3120
  %v3122 = vpop.f32.mrf.mxu0
  %v3123 = vadd.f32 0.0, %v3122
  %v3124 = vpop.f32.mrf.mxu0
  %v3125 = vpop.f32.mrf.mxu0
  %3126 = vdwg.mxu0
  %v3127 = vadd.f32 %v3040, %v3080
  %v3128 = vadd.f32 %v3041, %v3082
  %v3129 = vadd.f32 %v3042, %v3121
  %v3130 = vadd.f32 %v3043, %v3123
  %v3131 = vxor.u32 %v3127, 2147483648
  %v3132 = vxor.u32 %v3128, 2147483648
  %v3133 = vxor.u32 %v3129, 2147483648
  %v3134 = vmul.f32 %v3131, 1.442695
  %v3135 = vpow.pop %v3134
  %v3136 = vmul.f32 %v3132, 1.442695
  %v3137 = vpow.pop %v3136
  %v3138 = vmul.f32 %v3133, 1.442695
  %v3139 = vpow.pop %v3138
  %v3140 = vadd.f32 %v3135, 1.0
  %v3141 = vadd.f32 %v3137, 1.0
  %v3142 = vadd.f32 %v3139, 1.0
  %v3143 = vrcp.pop %v3140
  %v3144 = vmul.f32 1.0, %v3143
  %v3145 = vrcp.pop %v3141
  %v3146 = vmul.f32 1.0, %v3145
  %v3147 = vrcp.pop %v3142
  %v3148 = vmul.f32 1.0, %v3147
  %v3149 = vtanh.pop %v3130
  %v3150 = vmul.f32 %v3146, %v2843
  %v3151 = vmul.f32 %v3144, %v3149
  %v3152 = vadd.f32 %v3150, %v3151
  %v3153 = vtanh.pop %v3152
  %v3154 = vmul.f32 %v3148, %v3153
  %v3155 = vpack.c.bf16 %v3038, %v3038
  %3156 = vmatprep.subr.bf16.mxu0 %v1107
  %3157 = vmatpush1.bf16.msra.mxu0 %v1106
  %3158 = vmatprep.subr.bf16.mxu0 %v1103
  %3159 = vmatpush1.bf16.msra.mxu0 %v1102
  %3160 = vmatprep.subr.bf16.mxu0 %v1099
  %3161 = vmatpush1.bf16.msra.mxu0 %v1098
  %3162 = vmatprep.subr.bf16.mxu0 %v1095
  %3163 = vmatpush1.bf16.msra.mxu0 %v1094
  %3164 = vmatprep.subr.bf16.mxu0 %v1091
  %3165 = vmatpush1.bf16.msra.mxu0 %v1090
  %3166 = vmatprep.subr.bf16.mxu0 %v1087
  %3167 = vmatpush1.bf16.msra.mxu0 %v1086
  %3168 = vmatprep.subr.bf16.mxu0 %v1083
  %3169 = vmatpush1.bf16.msra.mxu0 %v1082
  %3170 = vmatprep.subr.bf16.mxu0 %v1079
  %3171 = vmatpush1.bf16.msra.mxu0 %v1078
  %3172 = vmatprep.subr.bf16.mxu0 0
  %3173 = vmatpush2.bf16.msra.mxu0 0
  %3174 = vmatprep.subr.bf16.mxu0 0
  %3175 = vmatpush2.bf16.msra.mxu0 0
  %3176 = vmatprep.subr.bf16.mxu0 0
  %3177 = vmatpush2.bf16.msra.mxu0 0
  %3178 = vmatprep.subr.bf16.mxu0 0
  %3179 = vmatpush2.bf16.msra.mxu0 0
  %3180 = vmatprep.subr.bf16.mxu0 0
  %3181 = vmatpush2.bf16.msra.mxu0 0
  %3182 = vmatprep.subr.bf16.mxu0 0
  %3183 = vmatpush2.bf16.msra.mxu0 0
  %3184 = vmatprep.subr.bf16.mxu0 0
  %3185 = vmatpush2.bf16.msra.mxu0 0
  %3186 = vmatprep.subr.bf16.mxu0 0
  %3187 = vmatpush2.bf16.msra.mxu0 0
  %3188 = vmatprep.mubr.bf16.mxu0 0
  %3189 = vmatmul.mubr.bf16.gmra.mxu0 %v3155
  %v3190 = vpop.f32.mrf.mxu0
  %v3191 = vadd.f32 0.0, %v3190
  %v3192 = vpop.f32.mrf.mxu0
  %v3193 = vadd.f32 0.0, %v3192
  %v3194 = vpop.f32.mrf.mxu0
  %v3195 = vpop.f32.mrf.mxu0
  %3196 = vdwg.mxu0
  %3197 = vmatprep.subr.bf16.mxu0 %v1109
  %3198 = vmatpush1.bf16.msra.mxu0 %v1108
  %3199 = vmatprep.subr.bf16.mxu0 %v1105
  %3200 = vmatpush1.bf16.msra.mxu0 %v1104
  %3201 = vmatprep.subr.bf16.mxu0 %v1101
  %3202 = vmatpush1.bf16.msra.mxu0 %v1100
  %3203 = vmatprep.subr.bf16.mxu0 %v1097
  %3204 = vmatpush1.bf16.msra.mxu0 %v1096
  %3205 = vmatprep.subr.bf16.mxu0 %v1093
  %3206 = vmatpush1.bf16.msra.mxu0 %v1092
  %3207 = vmatprep.subr.bf16.mxu0 %v1089
  %3208 = vmatpush1.bf16.msra.mxu0 %v1088
  %3209 = vmatprep.subr.bf16.mxu0 %v1085
  %3210 = vmatpush1.bf16.msra.mxu0 %v1084
  %3211 = vmatprep.subr.bf16.mxu0 %v1081
  %3212 = vmatpush1.bf16.msra.mxu0 %v1080
  %3213 = vmatprep.subr.bf16.mxu0 0
  %3214 = vmatpush2.bf16.msra.mxu0 0
  %3215 = vmatprep.subr.bf16.mxu0 0
  %3216 = vmatpush2.bf16.msra.mxu0 0
  %3217 = vmatprep.subr.bf16.mxu0 0
  %3218 = vmatpush2.bf16.msra.mxu0 0
  %3219 = vmatprep.subr.bf16.mxu0 0
  %3220 = vmatpush2.bf16.msra.mxu0 0
  %3221 = vmatprep.subr.bf16.mxu0 0
  %3222 = vmatpush2.bf16.msra.mxu0 0
  %3223 = vmatprep.subr.bf16.mxu0 0
  %3224 = vmatpush2.bf16.msra.mxu0 0
  %3225 = vmatprep.subr.bf16.mxu0 0
  %3226 = vmatpush2.bf16.msra.mxu0 0
  %3227 = vmatprep.subr.bf16.mxu0 0
  %3228 = vmatpush2.bf16.msra.mxu0 0
  %3229 = vmatprep.mubr.bf16.mxu0 0
  %3230 = vmatmul.mubr.bf16.gmra.mxu0 %v3155
  %v3231 = vpop.f32.mrf.mxu0
  %v3232 = vadd.f32 0.0, %v3231
  %v3233 = vpop.f32.mrf.mxu0
  %v3234 = vadd.f32 0.0, %v3233
  %v3235 = vpop.f32.mrf.mxu0
  %v3236 = vpop.f32.mrf.mxu0
  %3237 = vdwg.mxu0
  %3238 = vmatprep.subr.bf16.mxu0 %v1349
  %3239 = vmatpush1.bf16.msra.mxu0 %v1348
  %3240 = vmatprep.subr.bf16.mxu0 %v1345
  %3241 = vmatpush1.bf16.msra.mxu0 %v1344
  %3242 = vmatprep.subr.bf16.mxu0 %v1341
  %3243 = vmatpush1.bf16.msra.mxu0 %v1340
  %3244 = vmatprep.subr.bf16.mxu0 %v1337
  %3245 = vmatpush1.bf16.msra.mxu0 %v1336
  %3246 = vmatprep.subr.bf16.mxu0 %v1333
  %3247 = vmatpush1.bf16.msra.mxu0 %v1332
  %3248 = vmatprep.subr.bf16.mxu0 %v1329
  %3249 = vmatpush1.bf16.msra.mxu0 %v1328
  %3250 = vmatprep.subr.bf16.mxu0 %v1325
  %3251 = vmatpush1.bf16.msra.mxu0 %v1324
  %3252 = vmatprep.subr.bf16.mxu0 %v1321
  %3253 = vmatpush1.bf16.msra.mxu0 %v1320
  %3254 = vmatprep.subr.bf16.mxu0 0
  %3255 = vmatpush2.bf16.msra.mxu0 0
  %3256 = vmatprep.subr.bf16.mxu0 0
  %3257 = vmatpush2.bf16.msra.mxu0 0
  %3258 = vmatprep.subr.bf16.mxu0 0
  %3259 = vmatpush2.bf16.msra.mxu0 0
  %3260 = vmatprep.subr.bf16.mxu0 0
  %3261 = vmatpush2.bf16.msra.mxu0 0
  %3262 = vmatprep.subr.bf16.mxu0 0
  %3263 = vmatpush2.bf16.msra.mxu0 0
  %3264 = vmatprep.subr.bf16.mxu0 0
  %3265 = vmatpush2.bf16.msra.mxu0 0
  %3266 = vmatprep.subr.bf16.mxu0 0
  %3267 = vmatpush2.bf16.msra.mxu0 0
  %3268 = vmatprep.subr.bf16.mxu0 0
  %3269 = vmatpush2.bf16.msra.mxu0 0
  %3270 = vmatprep.mubr.bf16.mxu0 0
  %3271 = vmatmul.mubr.bf16.gmra.mxu0 %v3044
  %v3272 = vpop.f32.mrf.mxu0
  %v3273 = vadd.f32 %v3191, %v3272
  %v3274 = vpop.f32.mrf.mxu0
  %v3275 = vadd.f32 %v3193, %v3274
  %v3276 = vpop.f32.mrf.mxu0
  %v3277 = vpop.f32.mrf.mxu0
  %3278 = vdwg.mxu0
  %3279 = vmatprep.subr.bf16.mxu0 %v1351
  %3280 = vmatpush1.bf16.msra.mxu0 %v1350
  %3281 = vmatprep.subr.bf16.mxu0 %v1347
  %3282 = vmatpush1.bf16.msra.mxu0 %v1346
  %3283 = vmatprep.subr.bf16.mxu0 %v1343
  %3284 = vmatpush1.bf16.msra.mxu0 %v1342
  %3285 = vmatprep.subr.bf16.mxu0 %v1339
  %3286 = vmatpush1.bf16.msra.mxu0 %v1338
  %3287 = vmatprep.subr.bf16.mxu0 %v1335
  %3288 = vmatpush1.bf16.msra.mxu0 %v1334
  %3289 = vmatprep.subr.bf16.mxu0 %v1331
  %3290 = vmatpush1.bf16.msra.mxu0 %v1330
  %3291 = vmatprep.subr.bf16.mxu0 %v1327
  %3292 = vmatpush1.bf16.msra.mxu0 %v1326
  %3293 = vmatprep.subr.bf16.mxu0 %v1323
  %3294 = vmatpush1.bf16.msra.mxu0 %v1322
  %3295 = vmatprep.subr.bf16.mxu0 0
  %3296 = vmatpush2.bf16.msra.mxu0 0
  %3297 = vmatprep.subr.bf16.mxu0 0
  %3298 = vmatpush2.bf16.msra.mxu0 0
  %3299 = vmatprep.subr.bf16.mxu0 0
  %3300 = vmatpush2.bf16.msra.mxu0 0
  %3301 = vmatprep.subr.bf16.mxu0 0
  %3302 = vmatpush2.bf16.msra.mxu0 0
  %3303 = vmatprep.subr.bf16.mxu0 0
  %3304 = vmatpush2.bf16.msra.mxu0 0
  %3305 = vmatprep.subr.bf16.mxu0 0
  %3306 = vmatpush2.bf16.msra.mxu0 0
  %3307 = vmatprep.subr.bf16.mxu0 0
  %3308 = vmatpush2.bf16.msra.mxu0 0
  %3309 = vmatprep.subr.bf16.mxu0 0
  %3310 = vmatpush2.bf16.msra.mxu0 0
  %3311 = vmatprep.mubr.bf16.mxu0 0
  %3312 = vmatmul.mubr.bf16.gmra.mxu0 %v3044
  %v3313 = vpop.f32.mrf.mxu0
  %v3314 = vadd.f32 %v3232, %v3313
  %v3315 = vpop.f32.mrf.mxu0
  %v3316 = vadd.f32 %v3234, %v3315
  %v3317 = vpop.f32.mrf.mxu0
  %v3318 = vpop.f32.mrf.mxu0
  %3319 = vdwg.mxu0
  %v3320 = vadd.f32 %v3273, %v471
  %v3321 = vadd.f32 %v3275, %v475
  %v3322 = vadd.f32 %v3314, %v479
  %v3323 = vadd.f32 %v3316, %v483
  %v3324 = vxor.u32 %v3320, 2147483648
  %v3325 = vxor.u32 %v3321, 2147483648
  %v3326 = vxor.u32 %v3322, 2147483648
  %v3327 = vmul.f32 %v3324, 1.442695
  %v3328 = vpow.pop %v3327
  %v3329 = vmul.f32 %v3325, 1.442695
  %v3330 = vpow.pop %v3329
  %v3331 = vmul.f32 %v3326, 1.442695
  %v3332 = vpow.pop %v3331
  %v3333 = vadd.f32 %v3328, 1.0
  %v3334 = vadd.f32 %v3330, 1.0
  %v3335 = vadd.f32 %v3332, 1.0
  %v3336 = vrcp.pop %v3333
  %v3337 = vmul.f32 1.0, %v3336
  %v3338 = vrcp.pop %v3334
  %v3339 = vmul.f32 1.0, %v3338
  %v3340 = vrcp.pop %v3335
  %v3341 = vmul.f32 1.0, %v3340
  %v3342 = vtanh.pop %v3323
  %v3343 = vmul.f32 %v3339, %v3036
  %v3344 = vmul.f32 %v3337, %v3342
  %v3345 = vadd.f32 %v3343, %v3344
  %v3346 = vtanh.pop %v3345
  %v3347 = vmul.f32 %v3341, %v3346
  %v3348 = vpack.c.bf16 %v3154, %v3154
  %v3349 = vpack.c.bf16 %v3347, %v3347
  %3350 = vmatprep.subr.bf16.mxu0 %v1107
  %3351 = vmatpush1.bf16.msra.mxu0 %v1106
  %3352 = vmatprep.subr.bf16.mxu0 %v1103
  %3353 = vmatpush1.bf16.msra.mxu0 %v1102
  %3354 = vmatprep.subr.bf16.mxu0 %v1099
  %3355 = vmatpush1.bf16.msra.mxu0 %v1098
  %3356 = vmatprep.subr.bf16.mxu0 %v1095
  %3357 = vmatpush1.bf16.msra.mxu0 %v1094
  %3358 = vmatprep.subr.bf16.mxu0 %v1091
  %3359 = vmatpush1.bf16.msra.mxu0 %v1090
  %3360 = vmatprep.subr.bf16.mxu0 %v1087
  %3361 = vmatpush1.bf16.msra.mxu0 %v1086
  %3362 = vmatprep.subr.bf16.mxu0 %v1083
  %3363 = vmatpush1.bf16.msra.mxu0 %v1082
  %3364 = vmatprep.subr.bf16.mxu0 %v1079
  %3365 = vmatpush1.bf16.msra.mxu0 %v1078
  %3366 = vmatprep.subr.bf16.mxu0 0
  %3367 = vmatpush2.bf16.msra.mxu0 0
  %3368 = vmatprep.subr.bf16.mxu0 0
  %3369 = vmatpush2.bf16.msra.mxu0 0
  %3370 = vmatprep.subr.bf16.mxu0 0
  %3371 = vmatpush2.bf16.msra.mxu0 0
  %3372 = vmatprep.subr.bf16.mxu0 0
  %3373 = vmatpush2.bf16.msra.mxu0 0
  %3374 = vmatprep.subr.bf16.mxu0 0
  %3375 = vmatpush2.bf16.msra.mxu0 0
  %3376 = vmatprep.subr.bf16.mxu0 0
  %3377 = vmatpush2.bf16.msra.mxu0 0
  %3378 = vmatprep.subr.bf16.mxu0 0
  %3379 = vmatpush2.bf16.msra.mxu0 0
  %3380 = vmatprep.subr.bf16.mxu0 0
  %3381 = vmatpush2.bf16.msra.mxu0 0
  %3382 = vmatprep.mubr.bf16.mxu0 0
  %3383 = vmatmul.mubr.bf16.gmra.mxu0 %v3349
  %v3384 = vpop.f32.mrf.mxu0
  %v3385 = vadd.f32 0.0, %v3384
  %v3386 = vpop.f32.mrf.mxu0
  %v3387 = vadd.f32 0.0, %v3386
  %v3388 = vpop.f32.mrf.mxu0
  %v3389 = vpop.f32.mrf.mxu0
  %3390 = vdwg.mxu0
  %3391 = vmatprep.subr.bf16.mxu0 %v1109
  %3392 = vmatpush1.bf16.msra.mxu0 %v1108
  %3393 = vmatprep.subr.bf16.mxu0 %v1105
  %3394 = vmatpush1.bf16.msra.mxu0 %v1104
  %3395 = vmatprep.subr.bf16.mxu0 %v1101
  %3396 = vmatpush1.bf16.msra.mxu0 %v1100
  %3397 = vmatprep.subr.bf16.mxu0 %v1097
  %3398 = vmatpush1.bf16.msra.mxu0 %v1096
  %3399 = vmatprep.subr.bf16.mxu0 %v1093
  %3400 = vmatpush1.bf16.msra.mxu0 %v1092
  %3401 = vmatprep.subr.bf16.mxu0 %v1089
  %3402 = vmatpush1.bf16.msra.mxu0 %v1088
  %3403 = vmatprep.subr.bf16.mxu0 %v1085
  %3404 = vmatpush1.bf16.msra.mxu0 %v1084
  %3405 = vmatprep.subr.bf16.mxu0 %v1081
  %3406 = vmatpush1.bf16.msra.mxu0 %v1080
  %3407 = vmatprep.subr.bf16.mxu0 0
  %3408 = vmatpush2.bf16.msra.mxu0 0
  %3409 = vmatprep.subr.bf16.mxu0 0
  %3410 = vmatpush2.bf16.msra.mxu0 0
  %3411 = vmatprep.subr.bf16.mxu0 0
  %3412 = vmatpush2.bf16.msra.mxu0 0
  %3413 = vmatprep.subr.bf16.mxu0 0
  %3414 = vmatpush2.bf16.msra.mxu0 0
  %3415 = vmatprep.subr.bf16.mxu0 0
  %3416 = vmatpush2.bf16.msra.mxu0 0
  %3417 = vmatprep.subr.bf16.mxu0 0
  %3418 = vmatpush2.bf16.msra.mxu0 0
  %3419 = vmatprep.subr.bf16.mxu0 0
  %3420 = vmatpush2.bf16.msra.mxu0 0
  %3421 = vmatprep.subr.bf16.mxu0 0
  %3422 = vmatpush2.bf16.msra.mxu0 0
  %3423 = vmatprep.mubr.bf16.mxu0 0
  %3424 = vmatmul.mubr.bf16.gmra.mxu0 %v3349
  %v3425 = vpop.f32.mrf.mxu0
  %v3426 = vadd.f32 0.0, %v3425
  %v3427 = vpop.f32.mrf.mxu0
  %v3428 = vadd.f32 0.0, %v3427
  %v3429 = vpop.f32.mrf.mxu0
  %v3430 = vpop.f32.mrf.mxu0
  %3431 = vdwg.mxu0
  %3432 = vmatprep.subr.bf16.mxu0 %v1349
  %3433 = vmatpush1.bf16.msra.mxu0 %v1348
  %3434 = vmatprep.subr.bf16.mxu0 %v1345
  %3435 = vmatpush1.bf16.msra.mxu0 %v1344
  %3436 = vmatprep.subr.bf16.mxu0 %v1341
  %3437 = vmatpush1.bf16.msra.mxu0 %v1340
  %3438 = vmatprep.subr.bf16.mxu0 %v1337
  %3439 = vmatpush1.bf16.msra.mxu0 %v1336
  %3440 = vmatprep.subr.bf16.mxu0 %v1333
  %3441 = vmatpush1.bf16.msra.mxu0 %v1332
  %3442 = vmatprep.subr.bf16.mxu0 %v1329
  %3443 = vmatpush1.bf16.msra.mxu0 %v1328
  %3444 = vmatprep.subr.bf16.mxu0 %v1325
  %3445 = vmatpush1.bf16.msra.mxu0 %v1324
  %3446 = vmatprep.subr.bf16.mxu0 %v1321
  %3447 = vmatpush1.bf16.msra.mxu0 %v1320
  %3448 = vmatprep.subr.bf16.mxu0 0
  %3449 = vmatpush2.bf16.msra.mxu0 0
  %3450 = vmatprep.subr.bf16.mxu0 0
  %3451 = vmatpush2.bf16.msra.mxu0 0
  %3452 = vmatprep.subr.bf16.mxu0 0
  %3453 = vmatpush2.bf16.msra.mxu0 0
  %3454 = vmatprep.subr.bf16.mxu0 0
  %3455 = vmatpush2.bf16.msra.mxu0 0
  %3456 = vmatprep.subr.bf16.mxu0 0
  %3457 = vmatpush2.bf16.msra.mxu0 0
  %3458 = vmatprep.subr.bf16.mxu0 0
  %3459 = vmatpush2.bf16.msra.mxu0 0
  %3460 = vmatprep.subr.bf16.mxu0 0
  %3461 = vmatpush2.bf16.msra.mxu0 0
  %3462 = vmatprep.subr.bf16.mxu0 0
  %3463 = vmatpush2.bf16.msra.mxu0 0
  %3464 = vmatprep.mubr.bf16.mxu0 0
  %3465 = vmatmul.mubr.bf16.gmra.mxu0 %v3348
  %v3466 = vpop.f32.mrf.mxu0
  %v3467 = vadd.f32 %v3385, %v3466
  %v3468 = vpop.f32.mrf.mxu0
  %v3469 = vadd.f32 %v3387, %v3468
  %v3470 = vpop.f32.mrf.mxu0
  %v3471 = vpop.f32.mrf.mxu0
  %3472 = vdwg.mxu0
  %3473 = vmatprep.subr.bf16.mxu0 %v1351
  %3474 = vmatpush1.bf16.msra.mxu0 %v1350
  %3475 = vmatprep.subr.bf16.mxu0 %v1347
  %3476 = vmatpush1.bf16.msra.mxu0 %v1346
  %3477 = vmatprep.subr.bf16.mxu0 %v1343
  %3478 = vmatpush1.bf16.msra.mxu0 %v1342
  %3479 = vmatprep.subr.bf16.mxu0 %v1339
  %3480 = vmatpush1.bf16.msra.mxu0 %v1338
  %3481 = vmatprep.subr.bf16.mxu0 %v1335
  %3482 = vmatpush1.bf16.msra.mxu0 %v1334
  %3483 = vmatprep.subr.bf16.mxu0 %v1331
  %3484 = vmatpush1.bf16.msra.mxu0 %v1330
  %3485 = vmatprep.subr.bf16.mxu0 %v1327
  %3486 = vmatpush1.bf16.msra.mxu0 %v1326
  %3487 = vmatprep.subr.bf16.mxu0 %v1323
  %3488 = vmatpush1.bf16.msra.mxu0 %v1322
  %3489 = vmatprep.subr.bf16.mxu0 0
  %3490 = vmatpush2.bf16.msra.mxu0 0
  %3491 = vmatprep.subr.bf16.mxu0 0
  %3492 = vmatpush2.bf16.msra.mxu0 0
  %3493 = vmatprep.subr.bf16.mxu0 0
  %3494 = vmatpush2.bf16.msra.mxu0 0
  %3495 = vmatprep.subr.bf16.mxu0 0
  %3496 = vmatpush2.bf16.msra.mxu0 0
  %3497 = vmatprep.subr.bf16.mxu0 0
  %3498 = vmatpush2.bf16.msra.mxu0 0
  %3499 = vmatprep.subr.bf16.mxu0 0
  %3500 = vmatpush2.bf16.msra.mxu0 0
  %3501 = vmatprep.subr.bf16.mxu0 0
  %3502 = vmatpush2.bf16.msra.mxu0 0
  %3503 = vmatprep.subr.bf16.mxu0 0
  %3504 = vmatpush2.bf16.msra.mxu0 0
  %3505 = vmatprep.mubr.bf16.mxu0 0
  %3506 = vmatmul.mubr.bf16.gmra.mxu0 %v3348
  %v3507 = vpop.f32.mrf.mxu0
  %v3508 = vadd.f32 %v3426, %v3507
  %v3509 = vpop.f32.mrf.mxu0
  %v3510 = vadd.f32 %v3428, %v3509
  %v3511 = vpop.f32.mrf.mxu0
  %v3512 = vpop.f32.mrf.mxu0
  %3513 = vdwg.mxu0
  %v3514 = vadd.f32 %v3467, %v471
  %v3515 = vadd.f32 %v3469, %v475
  %v3516 = vadd.f32 %v3508, %v479
  %v3517 = vadd.f32 %v3510, %v483
  %v3518 = vxor.u32 %v3514, 2147483648
  %v3519 = vxor.u32 %v3515, 2147483648
  %v3520 = vxor.u32 %v3516, 2147483648
  %v3521 = vmul.f32 %v3518, 1.442695
  %v3522 = vpow.pop %v3521
  %v3523 = vmul.f32 %v3519, 1.442695
  %v3524 = vpow.pop %v3523
  %v3525 = vmul.f32 %v3520, 1.442695
  %v3526 = vpow.pop %v3525
  %v3527 = vadd.f32 %v3522, 1.0
  %v3528 = vadd.f32 %v3524, 1.0
  %v3529 = vadd.f32 %v3526, 1.0
  %v3530 = vrcp.pop %v3527
  %v3531 = vmul.f32 1.0, %v3530
  %v3532 = vrcp.pop %v3528
  %v3533 = vmul.f32 1.0, %v3532
  %v3534 = vrcp.pop %v3529
  %v3535 = vmul.f32 1.0, %v3534
  %v3536 = vtanh.pop %v3517
  %v3537 = vmul.f32 %v3533, %v3345
  %v3538 = vmul.f32 %v3531, %v3536
  %v3539 = vadd.f32 %v3537, %v3538
  %v3540 = vtanh.pop %v3539
  %v3541 = vmul.f32 %v3535, %v3540
  %3542 = vst [vmem:[%s12] sm:$0xff] %v3154
  %s3543 = scalar_lea.vmem %s12, 8
  %3544 = vst [vmem:[%s3543] sm:$0xff] %v3541
  %3545 = vst [vmem:[%s13] sm:$0xff] %v3152
  %s3546 = scalar_lea.vmem %s13, 8
  %3547 = vst [vmem:[%s3546] sm:$0xff] %v3539
  %v3548 = vpack.c.bf16 %v3541, %v3541
  %v3549 = vld [vmem:[%s7] sm:$0xff]
  %v3550 = vld [vmem:[%s7 + $0x8] sm:$0xff]
  %v3551 = vld [vmem:[%s7 + $0x10] sm:$0xff]
  %v3552 = vld [vmem:[%s7 + $0x18] sm:$0xff]
  %v3553 = vld [vmem:[%s7 + $0x20] sm:$0xff]
  %v3554 = vld [vmem:[%s7 + $0x28] sm:$0xff]
  %v3555 = vld [vmem:[%s7 + $0x30] sm:$0xff]
  %v3556 = vld [vmem:[%s7 + $0x38] sm:$0xff]
  %v3557 = vld [vmem:[%s7 + $0x40] sm:$0xff]
  %v3558 = vld [vmem:[%s7 + $0x48] sm:$0xff]
  %v3559 = vld [vmem:[%s7 + $0x50] sm:$0xff]
  %v3560 = vld [vmem:[%s7 + $0x58] sm:$0xff]
  %v3561 = vld [vmem:[%s7 + $0x60] sm:$0xff]
  %v3562 = vld [vmem:[%s7 + $0x68] sm:$0xff]
  %v3563 = vld [vmem:[%s7 + $0x70] sm:$0xff]
  %v3564 = vld [vmem:[%s7 + $0x78] sm:$0xff]
  %v3565 = vld [vmem:[%s8] sm:$0x3]
  %v3567 = vlaneseq
  %v3568 = vshrl.u32 %v3567, 7
  %v3569 = vsub.s32 0, %v3568
  %v3570 = vrot.slane %v3565, %v3569
  %v3571 = vlaneseq
  %v3572 = vshrl.u32 %v3571, 7
  %v3573 = vsub.s32 1, %v3572
  %v3574 = vrot.slane %v3565, %v3573
  %v3593 = vunpack.c.l.b16 %v3549
  %v3594 = vunpack.c.h.b16 %v3549
  %v3595 = vunpack.c.l.b16 %v3550
  %v3596 = vunpack.c.h.b16 %v3550
  %v3597 = vunpack.c.l.b16 %v3551
  %v3598 = vunpack.c.h.b16 %v3551
  %v3599 = vunpack.c.l.b16 %v3552
  %v3600 = vunpack.c.h.b16 %v3552
  %v3601 = vunpack.c.l.b16 %v3553
  %v3602 = vunpack.c.h.b16 %v3553
  %v3603 = vunpack.c.l.b16 %v3554
  %v3604 = vunpack.c.h.b16 %v3554
  %v3605 = vunpack.c.l.b16 %v3555
  %v3606 = vunpack.c.h.b16 %v3555
  %v3607 = vunpack.c.l.b16 %v3556
  %v3608 = vunpack.c.h.b16 %v3556
  %v3609 = vunpack.c.l.b16 %v3557
  %v3610 = vunpack.c.h.b16 %v3557
  %v3611 = vunpack.c.l.b16 %v3558
  %v3612 = vunpack.c.h.b16 %v3558
  %v3613 = vunpack.c.l.b16 %v3559
  %v3614 = vunpack.c.h.b16 %v3559
  %v3615 = vunpack.c.l.b16 %v3560
  %v3616 = vunpack.c.h.b16 %v3560
  %v3617 = vunpack.c.l.b16 %v3561
  %v3618 = vunpack.c.h.b16 %v3561
  %v3619 = vunpack.c.l.b16 %v3562
  %v3620 = vunpack.c.h.b16 %v3562
  %v3621 = vunpack.c.l.b16 %v3563
  %v3622 = vunpack.c.h.b16 %v3563
  %v3623 = vunpack.c.l.b16 %v3564
  %v3624 = vunpack.c.h.b16 %v3564
  %v3625 = vpack.c.b16 %v3595, %v3593
  %v3626 = vpack.c.b16 %v3596, %v3594
  %v3627 = vpack.c.b16 %v3599, %v3597
  %v3628 = vpack.c.b16 %v3600, %v3598
  %v3629 = vpack.c.b16 %v3603, %v3601
  %v3630 = vpack.c.b16 %v3604, %v3602
  %v3631 = vpack.c.b16 %v3607, %v3605
  %v3632 = vpack.c.b16 %v3608, %v3606
  %v3633 = vpack.c.b16 %v3611, %v3609
  %v3634 = vpack.c.b16 %v3612, %v3610
  %v3635 = vpack.c.b16 %v3615, %v3613
  %v3636 = vpack.c.b16 %v3616, %v3614
  %v3637 = vpack.c.b16 %v3619, %v3617
  %v3638 = vpack.c.b16 %v3620, %v3618
  %v3639 = vpack.c.b16 %v3623, %v3621
  %v3640 = vpack.c.b16 %v3624, %v3622
  %3657 = vmatprep.subr.bf16.mxu0 %v3640
  %3658 = vmatpush1.bf16.msra.mxu0 %v3639
  %3659 = vmatprep.subr.bf16.mxu0 %v3638
  %3660 = vmatpush1.bf16.msra.mxu0 %v3637
  %3661 = vmatprep.subr.bf16.mxu0 %v3636
  %3662 = vmatpush1.bf16.msra.mxu0 %v3635
  %3663 = vmatprep.subr.bf16.mxu0 %v3634
  %3664 = vmatpush1.bf16.msra.mxu0 %v3633
  %3665 = vmatprep.subr.bf16.mxu0 %v3632
  %3666 = vmatpush1.bf16.msra.mxu0 %v3631
  %3667 = vmatprep.subr.bf16.mxu0 %v3630
  %3668 = vmatpush1.bf16.msra.mxu0 %v3629
  %3669 = vmatprep.subr.bf16.mxu0 %v3628
  %3670 = vmatpush1.bf16.msra.mxu0 %v3627
  %3671 = vmatprep.subr.bf16.mxu0 %v3626
  %3672 = vmatpush1.bf16.msra.mxu0 %v3625
  %3673 = vmatprep.subr.bf16.mxu0 0
  %3674 = vmatpush2.bf16.msra.mxu0 0
  %3675 = vmatprep.subr.bf16.mxu0 0
  %3676 = vmatpush2.bf16.msra.mxu0 0
  %3677 = vmatprep.subr.bf16.mxu0 0
  %3678 = vmatpush2.bf16.msra.mxu0 0
  %3679 = vmatprep.subr.bf16.mxu0 0
  %3680 = vmatpush2.bf16.msra.mxu0 0
  %3681 = vmatprep.subr.bf16.mxu0 0
  %3682 = vmatpush2.bf16.msra.mxu0 0
  %3683 = vmatprep.subr.bf16.mxu0 0
  %3684 = vmatpush2.bf16.msra.mxu0 0
  %3685 = vmatprep.subr.bf16.mxu0 0
  %3686 = vmatpush2.bf16.msra.mxu0 0
  %3687 = vmatprep.subr.bf16.mxu0 0
  %3688 = vmatpush2.bf16.msra.mxu0 0
  %3689 = vmatprep.mubr.bf16.mxu0 0
  %3690 = vmatmul.mubr.bf16.gmra.mxu0 %v3548
  %v3691 = vpop.f32.mrf.mxu0
  %v3692 = vadd.f32 %v3570, %v3691
  %v3693 = vpop.f32.mrf.mxu0
  %v3694 = vadd.f32 %v3574, %v3693
  %v3695 = vpop.f32.mrf.mxu0
  %v3696 = vpop.f32.mrf.mxu0
  %3697 = vdwg.mxu0
  %v3698 = vmax.f32 %v3692, %v3694
  %3699 = vmax.xlane.f32.xlu0 %v3698
  %v3700 = vpop.xlane.xlu0 %3699
  %v3701 = vsub.f32 %v3692, %v3700
  %v3702 = vsub.f32 %v3694, %v3700
  %v3703 = vmul.f32 %v3701, 1.442695
  %v3704 = vpow.pop %v3703
  %v3705 = vmul.f32 %v3702, 1.442695
  %v3706 = vpow.pop %v3705
  %v3707 = vadd.f32 %v3704, %v3706
  %3708 = vadd.xlane.f32.xlu0 %v3707
  %v3709 = vpop.xlane.xlu0 %3708
  %v3710 = vlog2.pop %v3709
  %v3711 = vmul.f32 %v3710, 0.6931472
  %v3712 = vsub.f32 %v3701, %v3711
  %v3713 = vsub.f32 %v3702, %v3711
  %3714 = vst [vmem:[%s11] sm:$0xff] %v3712
  %3715 = vst [vmem:[%s11 + $0x8] sm:$0xff] %v3713
  // Predicated region
  $region46: #{inference_model_forward.1} parent=0 // pred_check
    _
  $region47: #{inference_model_forward.1} parent=0 // pred_check_branch
    %3717 = sbr.rel (0) target = $region49
  $region48: #{inference_model_forward.1} parent=0 // pred_region
    _
  $region49: #{inference_model_forward.1} parent=0 // pred_fallthru
    _
  // Predicated region
  $region50: #{inference_model_forward.1} parent=0 // pred_check
    _
  $region51: #{inference_model_forward.1} parent=0 // pred_check_branch
    %3719 = sbr.rel (0) target = $region53
  $region52: #{inference_model_forward.1} parent=0 // pred_region
    _
  $region53: #{inference_model_forward.1} parent=0 // pred_fallthru
    _
  // Predicated region
  $region54: #{inference_model_forward.1} parent=0 // pred_check
    _
  $region55: #{inference_model_forward.1} parent=0 // pred_check_branch
    %3721 = sbr.rel (0) target = $region57
  $region56: #{inference_model_forward.1} parent=0 // pred_region
    _
  $region57: #{inference_model_forward.1} parent=0 // pred_fallthru
    _
  // Predicated region
  $region58: #{inference_model_forward.1} parent=0 // pred_check
    _
  $region59: #{inference_model_forward.1} parent=0 // pred_check_branch
    %3723 = sbr.rel (0) target = $region61
  $region60: #{inference_model_forward.1} parent=0 // pred_region
    _
  $region61: #{inference_model_forward.1} parent=0 // pred_fallthru
    _
  // Predicated region
  $region62: #{inference_model_forward.1} parent=0 // pred_check
    _
  $region63: #{inference_model_forward.1} parent=0 // pred_check_branch
    %3725 = sbr.rel (0) target = $region65
  $region64: #{inference_model_forward.1} parent=0 // pred_region
    _
  $region65: #{inference_model_forward.1} parent=0 // pred_fallthru
    _
  // Predicated region
  $region66: #{inference_model_forward.1} parent=0 // pred_check
    _
  $region67: #{inference_model_forward.1} parent=0 // pred_check_branch
    %3727 = sbr.rel (0) target = $region69
  $region68: #{inference_model_forward.1} parent=0 // pred_region
    _
  $region69: #{inference_model_forward.1} parent=0 // pred_fallthru
    _

</llo_original>
